<compile_context>
chip_gen: v5e
topology: v5e:2x2
jax: 0.10.0
libtpu: 0.0.40
codegen_flags: <defaults>
</compile_context>

<pallas_src>
from functools import partial

import jax
import jax.numpy as jnp
from jax.experimental import pallas as pl
from jax.experimental.pallas import tpu as pltpu

EPS = 1e-5       # torch.nn.GroupNorm default eps
GROUPS = 32
LANE = 128


def _round_up(x, m):
    return (x + m - 1) // m * m


def _vmem_capacity_bytes():
    try:
        cap = getattr(pltpu.get_tpu_info(), "vmem_capacity_bytes", None)
        if cap:
            return int(cap)
    except Exception:
        pass
    return 64 << 20          # conservative fallback (v7x per-TC)


def _pick_hw_tile(HW, T, Cp, B, vmem_limit_bytes, w_itemsize):
    """HW tile (multiple of 8) sized from the double-buffered per-step VMEM footprint."""
    # Worst-case per HW row per step: 2x(h in <=4B) + 2x(x in 4B, last layer) + 2x(out 4B)
    # double-buffered streams, plus ~3 f32 slabs of in-kernel temporaries.
    per_row = T * Cp * (2 * (4 + 4 + 4) + 3 * 4)
    weight_bytes = 2 * 3 * Cp * Cp * w_itemsize        # (3, Cp, Cp) weights, double-buffered
    margin = 4 << 20
    budget = max(vmem_limit_bytes - weight_bytes - margin, per_row * 8)
    cand = min(budget // per_row, _round_up(HW, 8))
    hwt = max(8, (cand // 8) * 8)
    # Keep >= 2 grid steps so both v7x TensorCores get work (no-op when B >= 2).
    nsteps = -(-HW // hwt)
    if B * nsteps < 2 and HW > 8:
        hwt = max(8, _round_up(-(-HW // 2), 8))
    hwp = -(-HW // hwt) * hwt
    return hwt, hwp


# ---------------------------------------------------------------------------
# Layer kernel: GN affine (precomputed scale/shift) -> SiLU -> temporal conv(3,1,1)
# [+ residual on the last layer], with fused next-layer GN stats otherwise.
# ---------------------------------------------------------------------------
def _make_layer_kernel(T, HWt, Cp, HW, HWp, last):
    needs_mask = HWp > HW

    def kernel(*refs):
        if last:
            h_ref, x_ref, ss_ref, w_ref, b_ref, out_ref = refs
            stats_ref = None
        else:
            h_ref, ss_ref, w_ref, b_ref, out_ref, stats_ref = refs
            x_ref = None

        # GroupNorm via precomputed per-(batch, channel) scale/shift -> one FMA; SiLU. f32.
        scale = ss_ref[0:1, :][None]                         # (1, 1, Cp)
        shift = ss_ref[1:2, :][None]
        y = h_ref[...].astype(jnp.float32) * scale + shift
        y = y * jax.nn.sigmoid(y)                            # SiLU

        # MXU operands in the matmul dtype; accumulate in f32.
        ym = y.reshape(T * HWt, Cp).astype(w_ref.dtype)
        w0, w1, w2 = w_ref[0], w_ref[1], w_ref[2]            # (Cp, Cp) each
        bias = b_ref[...][None]                              # (1, 1, Cp) f32

        # Temporal conv, kernel=3, pad=1: center tap + two shifted taps, all accumulated
        # into one local f32 value (single store, no out_ref RMW).
        acc = jnp.dot(ym, w1, preferred_element_type=jnp.float32).reshape(T, HWt, Cp) + bias
        if T > 1:
            up = jnp.dot(ym[: (T - 1) * HWt], w0,
                         preferred_element_type=jnp.float32).reshape(T - 1, HWt, Cp)
            dn = jnp.dot(ym[HWt:], w2,
                         preferred_element_type=jnp.float32).reshape(T - 1, HWt, Cp)
            zrow = jnp.zeros((1, HWt, Cp), jnp.float32)
            acc = acc + jnp.concatenate([zrow, up], axis=0)   # tap k=0 feeds out[1:]
            acc = acc + jnp.concatenate([dn, zrow], axis=0)   # tap k=2 feeds out[:-1]

        if needs_mask:
            # zero out HW-padding rows so fused stats / stored activations stay clean
            row = (jax.lax.broadcasted_iota(jnp.int32, (1, HWt, Cp), 1)
                   + pl.program_id(1) * HWt)
            acc = jnp.where(row < HW, acc, 0.0)

        if last:
            out_ref[...] = x_ref[...] + acc                   # residual add, f32
        else:
            hq = acc.astype(out_ref.dtype)                    # bf16 storage
            out_ref[...] = hq
            # Fused GN stats for the next layer, on the bf16-rounded values (f32 accum),
            # written with a single store.
            hf = hq.astype(jnp.float32).reshape(T * HWt, Cp)
            s0 = jnp.sum(hf, axis=0, keepdims=True)           # (1, Cp)
            s1 = jnp.sum(hf * hf, axis=0, keepdims=True)      # (1, Cp)
            sel = jax.lax.broadcasted_iota(jnp.int32, (2, Cp), 0)
            stats_ref[...] = jnp.where(sel == 0, s0, s1)      # (2, Cp)

    return kernel


# ---------------------------------------------------------------------------
# Wrapper
# ---------------------------------------------------------------------------
def _scale_shift(sums, gamma, beta, C, Cp, count):
    """sums (B, 2, >=C) per-channel [sum; sumsq] -> (B, 2, Cp) [scale; shift] for GN affine."""
    B = sums.shape[0]
    gs = C // GROUPS
    g = jnp.sum(sums[:, :, :C].reshape(B, 2, GROUPS, gs), axis=-1) / count   # (B, 2, G)
    mean_g = g[:, 0]
    var_g = jnp.maximum(g[:, 1] - mean_g * mean_g, 0.0)   # clamp: single-pass var can dip < 0
    inv_g = jax.lax.rsqrt(var_g + EPS)
    mean = jnp.repeat(mean_g, gs, axis=-1)                # (B, C)
    inv = jnp.repeat(inv_g, gs, axis=-1)
    scale = gamma[None, :] * inv
    shift = beta[None, :] - mean * scale
    ss = jnp.stack([scale, shift], axis=1)                # (B, 2, C)
    return jnp.pad(ss, ((0, 0), (0, 0), (0, Cp - C)))     # padded channels -> y = 0


@partial(jax.jit, static_argnames=("matmul_dtype", "act_dtype"))
def temporal_conv_block(x_ncdhw, params, *, matmul_dtype=jnp.bfloat16,
                        act_dtype=jnp.bfloat16):
    B, C, T, H, W = x_ncdhw.shape
    assert C % GROUPS == 0, "GroupNorm(32, C) requires C % 32 == 0"
    HW = H * W
    Cp = _round_up(C, LANE)                                # lane-dense channel axis

    vmem_cap = _vmem_capacity_bytes()
    vmem_limit = int(min(vmem_cap * 3 // 4, 96 << 20))     # ~48 MiB on v7x, ~96 MiB on v5e/v6e
    w_itemsize = jnp.dtype(matmul_dtype).itemsize
    HWt, HWp = _pick_hw_tile(HW, T, Cp, B, vmem_limit, w_itemsize)
    nHW = HWp // HWt
    count = (C // GROUPS) * T * HW                         # real elements per (batch, group)

    xf = x_ncdhw.astype(jnp.float32)

    # Layer-1 GN stats: one fused XLA reduction over the ORIGINAL layout (no extra read
    # of the relaid-out/padded copy).
    sums = jnp.stack([jnp.sum(xf, axis=(2, 3, 4)),
                      jnp.sum(xf * xf, axis=(2, 3, 4))], axis=1)   # (B, 2, C)

    # NCDHW -> (B, T, HWp, Cp) channel-last f32, zero padded (lane-dense stores).
    x = jnp.transpose(xf, (0, 2, 3, 4, 1)).reshape(B, T, HW, C)
    x = jnp.pad(x, ((0, 0), (0, 0), (0, HWp - HW), (0, Cp - C)))

    # Padded per-layer parameters.
    gammas, betas, ws, bs = [], [], [], []
    for p in params:
        gammas.append(p['gamma'].astype(jnp.float32))
        betas.append(p['beta'].astype(jnp.float32))
        w = jnp.transpose(p['w'][:, :, :, 0, 0], (2, 1, 0)).astype(jnp.float32)   # (3, Ci, Co)
        ws.append(jnp.pad(w, ((0, 0), (0, Cp - C), (0, Cp - C))).astype(matmul_dtype))
        bs.append(jnp.pad(p['b'].astype(jnp.float32), (0, Cp - C)).reshape(1, Cp))

    grid = (B, nHW)
    act_spec = pl.BlockSpec((None, T, HWt, Cp), lambda b, j: (b, 0, j, 0))
    ss_spec = pl.BlockSpec((None, 2, Cp), lambda b, j: (b, 0, 0))
    w_spec = pl.BlockSpec((3, Cp, Cp), lambda b, j: (0, 0, 0))
    b_spec = pl.BlockSpec((1, Cp), lambda b, j: (0, 0))
    stats_spec = pl.BlockSpec((None, None, 2, Cp), lambda b, j: (b, j, 0, 0))
    cparams = pltpu.CompilerParams(
        dimension_semantics=("parallel", "parallel"),
        vmem_limit_bytes=vmem_limit)

    stats_shape = jax.ShapeDtypeStruct((B, nHW, 2, Cp), jnp.float32)
    mid_kernel = _make_layer_kernel(T, HWt, Cp, HW, HWp, last=False)
    last_kernel = _make_layer_kernel(T, HWt, Cp, HW, HWp, last=True)

    h = x
    for i in range(4):
        ss = _scale_shift(sums, gammas[i], betas[i], C, Cp, count)
        if i == 3:
            h = pl.pallas_call(
                last_kernel,
                out_shape=jax.ShapeDtypeStruct((B, T, HWp, Cp), jnp.float32),
                grid_spec=pltpu.PrefetchScalarGridSpec(
                    num_scalar_prefetch=0, grid=grid,
                    in_specs=[act_spec, act_spec, ss_spec, w_spec, b_spec],
                    out_specs=act_spec),
                compiler_params=cparams,
            )(h, x, ss, ws[i], bs[i])
        else:
            h, partial_stats = pl.pallas_call(
                mid_kernel,
                out_shape=(jax.ShapeDtypeStruct((B, T, HWp, Cp), act_dtype), stats_shape),
                grid_spec=pltpu.PrefetchScalarGridSpec(
                    num_scalar_prefetch=0, grid=grid,
                    in_specs=[act_spec, ss_spec, w_spec, b_spec],
                    out_specs=(act_spec, stats_spec)),
                compiler_params=cparams,
            )(h, ss, ws[i], bs[i])
            sums = jnp.sum(partial_stats, axis=1)            # (B, 2, Cp)

    # (B, T, HWp, Cp) -> NCDHW, drop spatial/channel padding.
    out = h[:, :, :HW, :C].reshape(B, T, H, W, C)
    return jnp.transpose(out, (0, 4, 1, 2, 3))


# ---------------------------------------------------------------------------
# Deterministic parameter init (mirrors module __init__ shapes)
# ---------------------------------------------------------------------------
def make_params(key, C, zero_last=True, randomize_norm=False):
    params = []
    for i in range(4):
        key, k1, k2, k3, k4 = jax.random.split(key, 5)
        if randomize_norm:
            gamma = 1.0 + 0.1 * jax.random.normal(k3, (C,), jnp.float32)
            beta = 0.1 * jax.random.normal(k4, (C,), jnp.float32)
        else:
            gamma = jnp.ones((C,), jnp.float32)
            beta = jnp.zeros((C,), jnp.float32)
        if i == 3 and zero_last:
            w = jnp.zeros((C, C, 3, 1, 1), jnp.float32)     # nn.init.zeros_ on conv4
            b = jnp.zeros((C,), jnp.float32)
        else:
            w = 0.05 * jax.random.normal(k1, (C, C, 3, 1, 1), jnp.float32)
            b = 0.05 * jax.random.normal(k2, (C,), jnp.float32)
        params.append(dict(gamma=gamma, beta=beta, w=w, b=b))
    return params


# ---------------------------------------------------------------------------
# Pure-JAX reference (NCDHW, matches PyTorch semantics)
# ---------------------------------------------------------------------------
def ref_forward(x, params):
    def gn(h, gamma, beta):
        B, C, T, H, W = h.shape
        gs = C // GROUPS
        hg = h.reshape(B, GROUPS, gs, T, H, W)
        mean = jnp.mean(hg, axis=(2, 3, 4, 5), keepdims=True)
        var = jnp.mean((hg - mean) ** 2, axis=(2, 3, 4, 5), keepdims=True)
        hn = ((hg - mean) / jnp.sqrt(var + EPS)).reshape(B, C, T, H, W)
        return hn * gamma.reshape(1, C, 1, 1, 1) + beta.reshape(1, C, 1, 1, 1)

    def tconv(h, w, b):
        B, C, T, H, W = h.shape
        Co = w.shape[0]
        hp = jnp.pad(h, ((0, 0), (0, 0), (1, 1), (0, 0), (0, 0)))
        out = jnp.zeros((B, Co, T, H, W), jnp.float32)
        for k in range(3):
            out = out + jnp.einsum('bcthw,oc->bothw', hp[:, :, k:k + T], w[:, :, k, 0, 0])
        return out + b.reshape(1, Co, 1, 1, 1)

    h = x
    for p in params:
        y = gn(h, p['gamma'], p['beta'])
        y = y * jax.nn.sigmoid(y)        # SiLU (Dropout p=0.0 is identity)
        h = tconv(y, p['w'], p['b'])
    return x + h


if __name__ == "__main__":
    B, C, T, H, W = 2, 32, 4, 8, 8
    key = jax.random.PRNGKey(0)
    kx, kp = jax.random.split(key)
    x = jax.random.normal(kx, (B, C, T, H, W), jnp.float32)

    # 1) Faithful module init: conv4 zero-initialized -> output == identity (exact,
    #    independent of matmul / activation-storage precision).
    params = make_params(kp, C, zero_last=True)
    out = jax.block_until_ready(temporal_conv_block(x, params))       # bf16 default path
    ref = ref_forward(x, params)
    assert out.shape == x.shape and out.dtype == jnp.float32
    assert jnp.max(jnp.abs(out - x)) < 1e-5
    assert jnp.max(jnp.abs(out - ref)) < 1e-5

    # 2) Validation-only: non-zero conv4 + random affine, full f32 path (tight tolerance).
    params_nz = make_params(jax.random.PRNGKey(1), C, zero_last=False, randomize_norm=True)
    ref_nz = ref_forward(x, params_nz)
    out_f32 = jax.block_until_ready(
        temporal_conv_block(x, params_nz, matmul_dtype=jnp.float32, act_dtype=jnp.float32))
    assert jnp.max(jnp.abs(out_f32 - ref_nz)) < 1e-3

    # 3) Same parameters, default bf16 MXU operands + bf16 inter-layer activations
    #    (f32 stats / accumulation / residual); loose tolerance for bf16 rounding over
    #    4 stacked layers.
    out_bf16 = jax.block_until_ready(temporal_conv_block(x, params_nz))
    assert jnp.max(jnp.abs(out_bf16 - ref_nz)) < 1e-1

    print("KERNEL_OK")
</pallas_src>

<mosaic_0001>
module attributes {stable_mosaic.version = 11 : i64} {
  func.func @kernel(%arg0: i32, %arg1: i32, %arg2: memref<1x4x64x128xbf16, #tpu.memory_space<vmem>>, %arg3: memref<1x2x128xf32, #tpu.memory_space<vmem>>, %arg4: memref<3x128x128xbf16, #tpu.memory_space<vmem>>, %arg5: memref<1x128xf32, #tpu.memory_space<vmem>>, %arg6: memref<1x4x64x128xbf16, #tpu.memory_space<vmem>>, %arg7: memref<1x1x2x128xf32, #tpu.memory_space<vmem>>) attributes {dimension_semantics = [#tpu.dimension_semantics<parallel>, #tpu.dimension_semantics<parallel>], iteration_bounds = array<i64: 2, 1>, scalar_prefetch = 0 : i64, scratch_operands = 0 : i64, tpu.core_type = #tpu.core_type<tc>, window_params = [{transform_indices = @transform_0, window_bounds = array<i64: 1, 4, 64, 128>}, {transform_indices = @transform_1, window_bounds = array<i64: 1, 2, 128>}, {pipeline_mode = #tpu.pipeline_mode<synchronous>, transform_indices = @transform_2, window_bounds = array<i64: 3, 128, 128>}, {pipeline_mode = #tpu.pipeline_mode<synchronous>, transform_indices = @transform_3, window_bounds = array<i64: 1, 128>}, {transform_indices = @transform_4, window_bounds = array<i64: 1, 4, 64, 128>}, {transform_indices = @transform_5, window_bounds = array<i64: 1, 1, 2, 128>}]} {
    %c0 = arith.constant 0 : index
    %c0_0 = arith.constant 0 : index
    %c0_1 = arith.constant 0 : index
    %0 = vector.load %arg3[%c0, %c0_0, %c0_1] : memref<1x2x128xf32, #tpu.memory_space<vmem>>, vector<1x1x128xf32>
    %1 = vector.shape_cast %0 : vector<1x1x128xf32> to vector<1x128xf32>
    %2 = vector.shape_cast %1 : vector<1x128xf32> to vector<1x1x128xf32>
    %c0_2 = arith.constant 0 : index
    %c1 = arith.constant 1 : index
    %c0_3 = arith.constant 0 : index
    %3 = vector.load %arg3[%c0_2, %c1, %c0_3] : memref<1x2x128xf32, #tpu.memory_space<vmem>>, vector<1x1x128xf32>
    %4 = vector.shape_cast %3 : vector<1x1x128xf32> to vector<1x128xf32>
    %5 = vector.shape_cast %4 : vector<1x128xf32> to vector<1x1x128xf32>
    %c0_4 = arith.constant 0 : index
    %c0_5 = arith.constant 0 : index
    %c0_6 = arith.constant 0 : index
    %c0_7 = arith.constant 0 : index
    %6 = vector.load %arg2[%c0_4, %c0_5, %c0_6, %c0_7] : memref<1x4x64x128xbf16, #tpu.memory_space<vmem>>, vector<1x4x64x128xbf16>
    %7 = vector.shape_cast %6 : vector<1x4x64x128xbf16> to vector<4x64x128xbf16>
    %8 = arith.extf %7 : vector<4x64x128xbf16> to vector<4x64x128xf32>
    %9 = vector.broadcast %2 : vector<1x1x128xf32> to vector<4x64x128xf32>
    %10 = arith.mulf %8, %9 : vector<4x64x128xf32>
    %11 = vector.broadcast %5 : vector<1x1x128xf32> to vector<4x64x128xf32>
    %12 = arith.addf %10, %11 : vector<4x64x128xf32>
    %13 = arith.negf %12 : vector<4x64x128xf32>
    %14 = math.exp %13 : vector<4x64x128xf32>
    %cst = arith.constant 1.000000e+00 : f32
    %15 = vector.broadcast %cst : f32 to vector<4x64x128xf32>
    %16 = arith.addf %15, %14 : vector<4x64x128xf32>
    %17 = arith.divf %15, %16 : vector<4x64x128xf32>
    %18 = arith.mulf %12, %17 : vector<4x64x128xf32>
    %19 = vector.shape_cast %18 : vector<4x64x128xf32> to vector<256x128xf32>
    %20 = arith.truncf %19 : vector<256x128xf32> to vector<256x128xbf16>
    %c0_8 = arith.constant 0 : index
    %c0_9 = arith.constant 0 : index
    %c0_10 = arith.constant 0 : index
    %21 = vector.load %arg4[%c0_8, %c0_9, %c0_10] : memref<3x128x128xbf16, #tpu.memory_space<vmem>>, vector<1x128x128xbf16>
    %22 = vector.shape_cast %21 : vector<1x128x128xbf16> to vector<128x128xbf16>
    %c1_11 = arith.constant 1 : index
    %c0_12 = arith.constant 0 : index
    %c0_13 = arith.constant 0 : index
    %23 = vector.load %arg4[%c1_11, %c0_12, %c0_13] : memref<3x128x128xbf16, #tpu.memory_space<vmem>>, vector<1x128x128xbf16>
    %24 = vector.shape_cast %23 : vector<1x128x128xbf16> to vector<128x128xbf16>
    %c2 = arith.constant 2 : index
    %c0_14 = arith.constant 0 : index
    %c0_15 = arith.constant 0 : index
    %25 = vector.load %arg4[%c2, %c0_14, %c0_15] : memref<3x128x128xbf16, #tpu.memory_space<vmem>>, vector<1x128x128xbf16>
    %26 = vector.shape_cast %25 : vector<1x128x128xbf16> to vector<128x128xbf16>
    %c0_16 = arith.constant 0 : index
    %c0_17 = arith.constant 0 : index
    %27 = vector.load %arg5[%c0_16, %c0_17] : memref<1x128xf32, #tpu.memory_space<vmem>>, vector<1x128xf32>
    %28 = vector.shape_cast %27 : vector<1x128xf32> to vector<1x1x128xf32>
    %cst_18 = arith.constant dense<0.000000e+00> : vector<256x128xf32>
    %29 = tpu.matmul %20, %24, %cst_18 {dimension_numbers = #tpu.dot_dimension_numbers<[1], [0], [0], [1], [0, 0, 1, 1], [], []>} : vector<256x128xbf16>, vector<128x128xbf16>, vector<256x128xf32> -> vector<256x128xf32>
    %30 = vector.shape_cast %29 : vector<256x128xf32> to vector<4x64x128xf32>
    %31 = vector.broadcast %28 : vector<1x1x128xf32> to vector<4x64x128xf32>
    %32 = arith.addf %30, %31 : vector<4x64x128xf32>
    %33 = vector.extract_strided_slice %20 {offsets = [0, 0], sizes = [192, 128], strides = [1, 1]} : vector<256x128xbf16> to vector<192x128xbf16>
    %cst_19 = arith.constant dense<0.000000e+00> : vector<192x128xf32>
    %34 = tpu.matmul %33, %22, %cst_19 {dimension_numbers = #tpu.dot_dimension_numbers<[1], [0], [0], [1], [0, 0, 1, 1], [], []>} : vector<192x128xbf16>, vector<128x128xbf16>, vector<192x128xf32> -> vector<192x128xf32>
    %35 = vector.shape_cast %34 : vector<192x128xf32> to vector<3x64x128xf32>
    %36 = vector.extract_strided_slice %20 {offsets = [64, 0], sizes = [192, 128], strides = [1, 1]} : vector<256x128xbf16> to vector<192x128xbf16>
    %cst_20 = arith.constant dense<0.000000e+00> : vector<192x128xf32>
    %37 = tpu.matmul %36, %26, %cst_20 {dimension_numbers = #tpu.dot_dimension_numbers<[1], [0], [0], [1], [0, 0, 1, 1], [], []>} : vector<192x128xbf16>, vector<128x128xbf16>, vector<192x128xf32> -> vector<192x128xf32>
    %38 = vector.shape_cast %37 : vector<192x128xf32> to vector<3x64x128xf32>
    %cst_21 = arith.constant 0.000000e+00 : f32
    %39 = vector.broadcast %cst_21 : f32 to vector<1x64x128xf32>
    %40 = tpu.concatenate %39, %35 in 0 : vector<1x64x128xf32>, vector<3x64x128xf32> -> vector<4x64x128xf32>
    %41 = arith.addf %32, %40 : vector<4x64x128xf32>
    %42 = tpu.concatenate %38, %39 in 0 : vector<3x64x128xf32>, vector<1x64x128xf32> -> vector<4x64x128xf32>
    %43 = arith.addf %41, %42 : vector<4x64x128xf32>
    %44 = arith.truncf %43 : vector<4x64x128xf32> to vector<4x64x128xbf16>
    %c0_22 = arith.constant 0 : index
    %c0_23 = arith.constant 0 : index
    %c0_24 = arith.constant 0 : index
    %c0_25 = arith.constant 0 : index
    %45 = vector.load %arg6[%c0_22, %c0_23, %c0_24, %c0_25] : memref<1x4x64x128xbf16, #tpu.memory_space<vmem>>, vector<1x4x64x128xbf16>
    %46 = vector.shape_cast %45 : vector<1x4x64x128xbf16> to vector<4x64x128xbf16>
    %47 = vector.shape_cast %44 : vector<4x64x128xbf16> to vector<1x4x64x128xbf16>
    tpu.vector_store %arg6[%c0_22, %c0_23, %c0_24, %c0_25], %47 {strides = array<i32>} : memref<1x4x64x128xbf16, #tpu.memory_space<vmem>>, vector<1x4x64x128xbf16>,
    %48 = arith.extf %44 : vector<4x64x128xbf16> to vector<4x64x128xf32>
    %49 = vector.shape_cast %48 : vector<4x64x128xf32> to vector<256x128xf32>
    %cst_26 = arith.constant dense<0.000000e+00> : vector<128xf32>
    %50 = vector.multi_reduction <add>, %49, %cst_26 [0] : vector<256x128xf32> to vector<128xf32>
    %51 = vector.shape_cast %50 : vector<128xf32> to vector<1x128xf32>
    %52 = arith.mulf %49, %49 : vector<256x128xf32>
    %cst_27 = arith.constant dense<0.000000e+00> : vector<128xf32>
    %53 = vector.multi_reduction <add>, %52, %cst_27 [0] : vector<256x128xf32> to vector<128xf32>
    %54 = vector.shape_cast %53 : vector<128xf32> to vector<1x128xf32>
    %55 = tpu.iota {dimensions = array<i32: 0>} : vector<2x128xi32>
    %c0_i32 = arith.constant 0 : i32
    %56 = vector.broadcast %c0_i32 : i32 to vector<2x128xi32>
    %57 = arith.cmpi eq, %55, %56 : vector<2x128xi32>
    %58 = vector.shape_cast %51 : vector<1x128xf32> to vector<1x128xf32>
    %59 = vector.broadcast %58 : vector<1x128xf32> to vector<2x128xf32>
    %60 = vector.shape_cast %54 : vector<1x128xf32> to vector<1x128xf32>
    %61 = vector.broadcast %60 : vector<1x128xf32> to vector<2x128xf32>
    %62 = arith.select %57, %59, %61 : vector<2x128xi1>, vector<2x128xf32>
    %c0_28 = arith.constant 0 : index
    %c0_29 = arith.constant 0 : index
    %c0_30 = arith.constant 0 : index
    %c0_31 = arith.constant 0 : index
    %63 = vector.load %arg7[%c0_28, %c0_29, %c0_30, %c0_31] : memref<1x1x2x128xf32, #tpu.memory_space<vmem>>, vector<1x1x2x128xf32>
    %64 = vector.shape_cast %63 : vector<1x1x2x128xf32> to vector<2x128xf32>
    %65 = vector.shape_cast %62 : vector<2x128xf32> to vector<1x1x2x128xf32>
    tpu.vector_store %arg7[%c0_28, %c0_29, %c0_30, %c0_31], %65 {strides = array<i32>} : memref<1x1x2x128xf32, #tpu.memory_space<vmem>>, vector<1x1x2x128xf32>,
    return
  }
  func.func @transform_0(%arg0: i32, %arg1: i32) -> (i32, i32, i32, i32) {
    %c0_i32 = arith.constant 0 : i32
    %c0_i32_0 = arith.constant 0 : i32
    %c0_i32_1 = arith.constant 0 : i32
    return %arg0, %c0_i32, %arg1, %c0_i32_0 : i32, i32, i32, i32
  }
  func.func @transform_1(%arg0: i32, %arg1: i32) -> (i32, i32, i32) {
    %c0_i32 = arith.constant 0 : i32
    %c0_i32_0 = arith.constant 0 : i32
    %c0_i32_1 = arith.constant 0 : i32
    return %arg0, %c0_i32, %c0_i32_0 : i32, i32, i32
  }
  func.func @transform_2(%arg0: i32, %arg1: i32) -> (i32, i32, i32) {
    %c0_i32 = arith.constant 0 : i32
    %c0_i32_0 = arith.constant 0 : i32
    %c0_i32_1 = arith.constant 0 : i32
    %c0_i32_2 = arith.constant 0 : i32
    return %c0_i32, %c0_i32_0, %c0_i32_1 : i32, i32, i32
  }
  func.func @transform_3(%arg0: i32, %arg1: i32) -> (i32, i32) {
    %c0_i32 = arith.constant 0 : i32
    %c0_i32_0 = arith.constant 0 : i32
    %c0_i32_1 = arith.constant 0 : i32
    return %c0_i32, %c0_i32_0 : i32, i32
  }
  func.func @transform_4(%arg0: i32, %arg1: i32) -> (i32, i32, i32, i32) {
    %c0_i32 = arith.constant 0 : i32
    %c0_i32_0 = arith.constant 0 : i32
    %c0_i32_1 = arith.constant 0 : i32
    return %arg0, %c0_i32, %arg1, %c0_i32_0 : i32, i32, i32, i32
  }
  func.func @transform_5(%arg0: i32, %arg1: i32) -> (i32, i32, i32, i32) {
    %c0_i32 = arith.constant 0 : i32
    %c0_i32_0 = arith.constant 0 : i32
    %c0_i32_1 = arith.constant 0 : i32
    return %arg0, %arg1, %c0_i32, %c0_i32_0 : i32, i32, i32, i32
  }
}

module attributes {stable_mosaic.version = 11 : i64} {
  func.func @kernel(%arg0: i32, %arg1: i32, %arg2: memref<1x4x64x128xf32, #tpu.memory_space<vmem>>, %arg3: memref<1x2x128xf32, #tpu.memory_space<vmem>>, %arg4: memref<3x128x128xbf16, #tpu.memory_space<vmem>>, %arg5: memref<1x128xf32, #tpu.memory_space<vmem>>, %arg6: memref<1x4x64x128xbf16, #tpu.memory_space<vmem>>, %arg7: memref<1x1x2x128xf32, #tpu.memory_space<vmem>>) attributes {dimension_semantics = [#tpu.dimension_semantics<parallel>, #tpu.dimension_semantics<parallel>], iteration_bounds = array<i64: 2, 1>, scalar_prefetch = 0 : i64, scratch_operands = 0 : i64, tpu.core_type = #tpu.core_type<tc>, window_params = [{transform_indices = @transform_0, window_bounds = array<i64: 1, 4, 64, 128>}, {transform_indices = @transform_1, window_bounds = array<i64: 1, 2, 128>}, {pipeline_mode = #tpu.pipeline_mode<synchronous>, transform_indices = @transform_2, window_bounds = array<i64: 3, 128, 128>}, {pipeline_mode = #tpu.pipeline_mode<synchronous>, transform_indices = @transform_3, window_bounds = array<i64: 1, 128>}, {transform_indices = @transform_4, window_bounds = array<i64: 1, 4, 64, 128>}, {transform_indices = @transform_5, window_bounds = array<i64: 1, 1, 2, 128>}]} {
    %c0 = arith.constant 0 : index
    %c0_0 = arith.constant 0 : index
    %c0_1 = arith.constant 0 : index
    %0 = vector.load %arg3[%c0, %c0_0, %c0_1] : memref<1x2x128xf32, #tpu.memory_space<vmem>>, vector<1x1x128xf32>
    %1 = vector.shape_cast %0 : vector<1x1x128xf32> to vector<1x128xf32>
    %2 = vector.shape_cast %1 : vector<1x128xf32> to vector<1x1x128xf32>
    %c0_2 = arith.constant 0 : index
    %c1 = arith.constant 1 : index
    %c0_3 = arith.constant 0 : index
    %3 = vector.load %arg3[%c0_2, %c1, %c0_3] : memref<1x2x128xf32, #tpu.memory_space<vmem>>, vector<1x1x128xf32>
    %4 = vector.shape_cast %3 : vector<1x1x128xf32> to vector<1x128xf32>
    %5 = vector.shape_cast %4 : vector<1x128xf32> to vector<1x1x128xf32>
    %c0_4 = arith.constant 0 : index
    %c0_5 = arith.constant 0 : index
    %c0_6 = arith.constant 0 : index
    %c0_7 = arith.constant 0 : index
    %6 = vector.load %arg2[%c0_4, %c0_5, %c0_6, %c0_7] : memref<1x4x64x128xf32, #tpu.memory_space<vmem>>, vector<1x4x64x128xf32>
    %7 = vector.shape_cast %6 : vector<1x4x64x128xf32> to vector<4x64x128xf32>
    %8 = vector.broadcast %2 : vector<1x1x128xf32> to vector<4x64x128xf32>
    %9 = arith.mulf %7, %8 : vector<4x64x128xf32>
    %10 = vector.broadcast %5 : vector<1x1x128xf32> to vector<4x64x128xf32>
    %11 = arith.addf %9, %10 : vector<4x64x128xf32>
    %12 = arith.negf %11 : vector<4x64x128xf32>
    %13 = math.exp %12 : vector<4x64x128xf32>
    %cst = arith.constant 1.000000e+00 : f32
    %14 = vector.broadcast %cst : f32 to vector<4x64x128xf32>
    %15 = arith.addf %14, %13 : vector<4x64x128xf32>
    %16 = arith.divf %14, %15 : vector<4x64x128xf32>
    %17 = arith.mulf %11, %16 : vector<4x64x128xf32>
    %18 = vector.shape_cast %17 : vector<4x64x128xf32> to vector<256x128xf32>
    %19 = arith.truncf %18 : vector<256x128xf32> to vector<256x128xbf16>
    %c0_8 = arith.constant 0 : index
    %c0_9 = arith.constant 0 : index
    %c0_10 = arith.constant 0 : index
    %20 = vector.load %arg4[%c0_8, %c0_9, %c0_10] : memref<3x128x128xbf16, #tpu.memory_space<vmem>>, vector<1x128x128xbf16>
    %21 = vector.shape_cast %20 : vector<1x128x128xbf16> to vector<128x128xbf16>
    %c1_11 = arith.constant 1 : index
    %c0_12 = arith.constant 0 : index
    %c0_13 = arith.constant 0 : index
    %22 = vector.load %arg4[%c1_11, %c0_12, %c0_13] : memref<3x128x128xbf16, #tpu.memory_space<vmem>>, vector<1x128x128xbf16>
    %23 = vector.shape_cast %22 : vector<1x128x128xbf16> to vector<128x128xbf16>
    %c2 = arith.constant 2 : index
    %c0_14 = arith.constant 0 : index
    %c0_15 = arith.constant 0 : index
    %24 = vector.load %arg4[%c2, %c0_14, %c0_15] : memref<3x128x128xbf16, #tpu.memory_space<vmem>>, vector<1x128x128xbf16>
    %25 = vector.shape_cast %24 : vector<1x128x128xbf16> to vector<128x128xbf16>
    %c0_16 = arith.constant 0 : index
    %c0_17 = arith.constant 0 : index
    %26 = vector.load %arg5[%c0_16, %c0_17] : memref<1x128xf32, #tpu.memory_space<vmem>>, vector<1x128xf32>
    %27 = vector.shape_cast %26 : vector<1x128xf32> to vector<1x1x128xf32>
    %cst_18 = arith.constant dense<0.000000e+00> : vector<256x128xf32>
    %28 = tpu.matmul %19, %23, %cst_18 {dimension_numbers = #tpu.dot_dimension_numbers<[1], [0], [0], [1], [0, 0, 1, 1], [], []>} : vector<256x128xbf16>, vector<128x128xbf16>, vector<256x128xf32> -> vector<256x128xf32>
    %29 = vector.shape_cast %28 : vector<256x128xf32> to vector<4x64x128xf32>
    %30 = vector.broadcast %27 : vector<1x1x128xf32> to vector<4x64x128xf32>
    %31 = arith.addf %29, %30 : vector<4x64x128xf32>
    %32 = vector.extract_strided_slice %19 {offsets = [0, 0], sizes = [192, 128], strides = [1, 1]} : vector<256x128xbf16> to vector<192x128xbf16>
    %cst_19 = arith.constant dense<0.000000e+00> : vector<192x128xf32>
    %33 = tpu.matmul %32, %21, %cst_19 {dimension_numbers = #tpu.dot_dimension_numbers<[1], [0], [0], [1], [0, 0, 1, 1], [], []>} : vector<192x128xbf16>, vector<128x128xbf16>, vector<192x128xf32> -> vector<192x128xf32>
    %34 = vector.shape_cast %33 : vector<192x128xf32> to vector<3x64x128xf32>
    %35 = vector.extract_strided_slice %19 {offsets = [64, 0], sizes = [192, 128], strides = [1, 1]} : vector<256x128xbf16> to vector<192x128xbf16>
    %cst_20 = arith.constant dense<0.000000e+00> : vector<192x128xf32>
    %36 = tpu.matmul %35, %25, %cst_20 {dimension_numbers = #tpu.dot_dimension_numbers<[1], [0], [0], [1], [0, 0, 1, 1], [], []>} : vector<192x128xbf16>, vector<128x128xbf16>, vector<192x128xf32> -> vector<192x128xf32>
    %37 = vector.shape_cast %36 : vector<192x128xf32> to vector<3x64x128xf32>
    %cst_21 = arith.constant 0.000000e+00 : f32
    %38 = vector.broadcast %cst_21 : f32 to vector<1x64x128xf32>
    %39 = tpu.concatenate %38, %34 in 0 : vector<1x64x128xf32>, vector<3x64x128xf32> -> vector<4x64x128xf32>
    %40 = arith.addf %31, %39 : vector<4x64x128xf32>
    %41 = tpu.concatenate %37, %38 in 0 : vector<3x64x128xf32>, vector<1x64x128xf32> -> vector<4x64x128xf32>
    %42 = arith.addf %40, %41 : vector<4x64x128xf32>
    %43 = arith.truncf %42 : vector<4x64x128xf32> to vector<4x64x128xbf16>
    %c0_22 = arith.constant 0 : index
    %c0_23 = arith.constant 0 : index
    %c0_24 = arith.constant 0 : index
    %c0_25 = arith.constant 0 : index
    %44 = vector.load %arg6[%c0_22, %c0_23, %c0_24, %c0_25] : memref<1x4x64x128xbf16, #tpu.memory_space<vmem>>, vector<1x4x64x128xbf16>
    %45 = vector.shape_cast %44 : vector<1x4x64x128xbf16> to vector<4x64x128xbf16>
    %46 = vector.shape_cast %43 : vector<4x64x128xbf16> to vector<1x4x64x128xbf16>
    tpu.vector_store %arg6[%c0_22, %c0_23, %c0_24, %c0_25], %46 {strides = array<i32>} : memref<1x4x64x128xbf16, #tpu.memory_space<vmem>>, vector<1x4x64x128xbf16>,
    %47 = arith.extf %43 : vector<4x64x128xbf16> to vector<4x64x128xf32>
    %48 = vector.shape_cast %47 : vector<4x64x128xf32> to vector<256x128xf32>
    %cst_26 = arith.constant dense<0.000000e+00> : vector<128xf32>
    %49 = vector.multi_reduction <add>, %48, %cst_26 [0] : vector<256x128xf32> to vector<128xf32>
    %50 = vector.shape_cast %49 : vector<128xf32> to vector<1x128xf32>
    %51 = arith.mulf %48, %48 : vector<256x128xf32>
    %cst_27 = arith.constant dense<0.000000e+00> : vector<128xf32>
    %52 = vector.multi_reduction <add>, %51, %cst_27 [0] : vector<256x128xf32> to vector<128xf32>
    %53 = vector.shape_cast %52 : vector<128xf32> to vector<1x128xf32>
    %54 = tpu.iota {dimensions = array<i32: 0>} : vector<2x128xi32>
    %c0_i32 = arith.constant 0 : i32
    %55 = vector.broadcast %c0_i32 : i32 to vector<2x128xi32>
    %56 = arith.cmpi eq, %54, %55 : vector<2x128xi32>
    %57 = vector.shape_cast %50 : vector<1x128xf32> to vector<1x128xf32>
    %58 = vector.broadcast %57 : vector<1x128xf32> to vector<2x128xf32>
    %59 = vector.shape_cast %53 : vector<1x128xf32> to vector<1x128xf32>
    %60 = vector.broadcast %59 : vector<1x128xf32> to vector<2x128xf32>
    %61 = arith.select %56, %58, %60 : vector<2x128xi1>, vector<2x128xf32>
    %c0_28 = arith.constant 0 : index
    %c0_29 = arith.constant 0 : index
    %c0_30 = arith.constant 0 : index
    %c0_31 = arith.constant 0 : index
    %62 = vector.load %arg7[%c0_28, %c0_29, %c0_30, %c0_31] : memref<1x1x2x128xf32, #tpu.memory_space<vmem>>, vector<1x1x2x128xf32>
    %63 = vector.shape_cast %62 : vector<1x1x2x128xf32> to vector<2x128xf32>
    %64 = vector.shape_cast %61 : vector<2x128xf32> to vector<1x1x2x128xf32>
    tpu.vector_store %arg7[%c0_28, %c0_29, %c0_30, %c0_31], %64 {strides = array<i32>} : memref<1x1x2x128xf32, #tpu.memory_space<vmem>>, vector<1x1x2x128xf32>,
    return
  }
  func.func @transform_0(%arg0: i32, %arg1: i32) -> (i32, i32, i32, i32) {
    %c0_i32 = arith.constant 0 : i32
    %c0_i32_0 = arith.constant 0 : i32
    %c0_i32_1 = arith.constant 0 : i32
    return %arg0, %c0_i32, %arg1, %c0_i32_0 : i32, i32, i32, i32
  }
  func.func @transform_1(%arg0: i32, %arg1: i32) -> (i32, i32, i32) {
    %c0_i32 = arith.constant 0 : i32
    %c0_i32_0 = arith.constant 0 : i32
    %c0_i32_1 = arith.constant 0 : i32
    return %arg0, %c0_i32, %c0_i32_0 : i32, i32, i32
  }
  func.func @transform_2(%arg0: i32, %arg1: i32) -> (i32, i32, i32) {
    %c0_i32 = arith.constant 0 : i32
    %c0_i32_0 = arith.constant 0 : i32
    %c0_i32_1 = arith.constant 0 : i32
    %c0_i32_2 = arith.constant 0 : i32
    return %c0_i32, %c0_i32_0, %c0_i32_1 : i32, i32, i32
  }
  func.func @transform_3(%arg0: i32, %arg1: i32) -> (i32, i32) {
    %c0_i32 = arith.constant 0 : i32
    %c0_i32_0 = arith.constant 0 : i32
    %c0_i32_1 = arith.constant 0 : i32
    return %c0_i32, %c0_i32_0 : i32, i32
  }
  func.func @transform_4(%arg0: i32, %arg1: i32) -> (i32, i32, i32, i32) {
    %c0_i32 = arith.constant 0 : i32
    %c0_i32_0 = arith.constant 0 : i32
    %c0_i32_1 = arith.constant 0 : i32
    return %arg0, %c0_i32, %arg1, %c0_i32_0 : i32, i32, i32, i32
  }
  func.func @transform_5(%arg0: i32, %arg1: i32) -> (i32, i32, i32, i32) {
    %c0_i32 = arith.constant 0 : i32
    %c0_i32_0 = arith.constant 0 : i32
    %c0_i32_1 = arith.constant 0 : i32
    return %arg0, %arg1, %c0_i32, %c0_i32_0 : i32, i32, i32, i32
  }
}

module attributes {stable_mosaic.version = 11 : i64} {
  func.func @kernel(%arg0: i32, %arg1: i32, %arg2: memref<1x4x64x128xbf16, #tpu.memory_space<vmem>>, %arg3: memref<1x4x64x128xf32, #tpu.memory_space<vmem>>, %arg4: memref<1x2x128xf32, #tpu.memory_space<vmem>>, %arg5: memref<3x128x128xbf16, #tpu.memory_space<vmem>>, %arg6: memref<1x128xf32, #tpu.memory_space<vmem>>, %arg7: memref<1x4x64x128xf32, #tpu.memory_space<vmem>>) attributes {dimension_semantics = [#tpu.dimension_semantics<parallel>, #tpu.dimension_semantics<parallel>], iteration_bounds = array<i64: 2, 1>, scalar_prefetch = 0 : i64, scratch_operands = 0 : i64, tpu.core_type = #tpu.core_type<tc>, window_params = [{transform_indices = @transform_0, window_bounds = array<i64: 1, 4, 64, 128>}, {transform_indices = @transform_1, window_bounds = array<i64: 1, 4, 64, 128>}, {transform_indices = @transform_2, window_bounds = array<i64: 1, 2, 128>}, {pipeline_mode = #tpu.pipeline_mode<synchronous>, transform_indices = @transform_3, window_bounds = array<i64: 3, 128, 128>}, {pipeline_mode = #tpu.pipeline_mode<synchronous>, transform_indices = @transform_4, window_bounds = array<i64: 1, 128>}, {transform_indices = @transform_5, window_bounds = array<i64: 1, 4, 64, 128>}]} {
    %c0 = arith.constant 0 : index
    %c0_0 = arith.constant 0 : index
    %c0_1 = arith.constant 0 : index
    %0 = vector.load %arg4[%c0, %c0_0, %c0_1] : memref<1x2x128xf32, #tpu.memory_space<vmem>>, vector<1x1x128xf32>
    %1 = vector.shape_cast %0 : vector<1x1x128xf32> to vector<1x128xf32>
    %2 = vector.shape_cast %1 : vector<1x128xf32> to vector<1x1x128xf32>
    %c0_2 = arith.constant 0 : index
    %c1 = arith.constant 1 : index
    %c0_3 = arith.constant 0 : index
    %3 = vector.load %arg4[%c0_2, %c1, %c0_3] : memref<1x2x128xf32, #tpu.memory_space<vmem>>, vector<1x1x128xf32>
    %4 = vector.shape_cast %3 : vector<1x1x128xf32> to vector<1x128xf32>
    %5 = vector.shape_cast %4 : vector<1x128xf32> to vector<1x1x128xf32>
    %c0_4 = arith.constant 0 : index
    %c0_5 = arith.constant 0 : index
    %c0_6 = arith.constant 0 : index
    %c0_7 = arith.constant 0 : index
    %6 = vector.load %arg2[%c0_4, %c0_5, %c0_6, %c0_7] : memref<1x4x64x128xbf16, #tpu.memory_space<vmem>>, vector<1x4x64x128xbf16>
    %7 = vector.shape_cast %6 : vector<1x4x64x128xbf16> to vector<4x64x128xbf16>
    %8 = arith.extf %7 : vector<4x64x128xbf16> to vector<4x64x128xf32>
    %9 = vector.broadcast %2 : vector<1x1x128xf32> to vector<4x64x128xf32>
    %10 = arith.mulf %8, %9 : vector<4x64x128xf32>
    %11 = vector.broadcast %5 : vector<1x1x128xf32> to vector<4x64x128xf32>
    %12 = arith.addf %10, %11 : vector<4x64x128xf32>
    %13 = arith.negf %12 : vector<4x64x128xf32>
    %14 = math.exp %13 : vector<4x64x128xf32>
    %cst = arith.constant 1.000000e+00 : f32
    %15 = vector.broadcast %cst : f32 to vector<4x64x128xf32>
    %16 = arith.addf %15, %14 : vector<4x64x128xf32>
    %17 = arith.divf %15, %16 : vector<4x64x128xf32>
    %18 = arith.mulf %12, %17 : vector<4x64x128xf32>
    %19 = vector.shape_cast %18 : vector<4x64x128xf32> to vector<256x128xf32>
    %20 = arith.truncf %19 : vector<256x128xf32> to vector<256x128xbf16>
    %c0_8 = arith.constant 0 : index
    %c0_9 = arith.constant 0 : index
    %c0_10 = arith.constant 0 : index
    %21 = vector.load %arg5[%c0_8, %c0_9, %c0_10] : memref<3x128x128xbf16, #tpu.memory_space<vmem>>, vector<1x128x128xbf16>
    %22 = vector.shape_cast %21 : vector<1x128x128xbf16> to vector<128x128xbf16>
    %c1_11 = arith.constant 1 : index
    %c0_12 = arith.constant 0 : index
    %c0_13 = arith.constant 0 : index
    %23 = vector.load %arg5[%c1_11, %c0_12, %c0_13] : memref<3x128x128xbf16, #tpu.memory_space<vmem>>, vector<1x128x128xbf16>
    %24 = vector.shape_cast %23 : vector<1x128x128xbf16> to vector<128x128xbf16>
    %c2 = arith.constant 2 : index
    %c0_14 = arith.constant 0 : index
    %c0_15 = arith.constant 0 : index
    %25 = vector.load %arg5[%c2, %c0_14, %c0_15] : memref<3x128x128xbf16, #tpu.memory_space<vmem>>, vector<1x128x128xbf16>
    %26 = vector.shape_cast %25 : vector<1x128x128xbf16> to vector<128x128xbf16>
    %c0_16 = arith.constant 0 : index
    %c0_17 = arith.constant 0 : index
    %27 = vector.load %arg6[%c0_16, %c0_17] : memref<1x128xf32, #tpu.memory_space<vmem>>, vector<1x128xf32>
    %28 = vector.shape_cast %27 : vector<1x128xf32> to vector<1x1x128xf32>
    %cst_18 = arith.constant dense<0.000000e+00> : vector<256x128xf32>
    %29 = tpu.matmul %20, %24, %cst_18 {dimension_numbers = #tpu.dot_dimension_numbers<[1], [0], [0], [1], [0, 0, 1, 1], [], []>} : vector<256x128xbf16>, vector<128x128xbf16>, vector<256x128xf32> -> vector<256x128xf32>
    %30 = vector.shape_cast %29 : vector<256x128xf32> to vector<4x64x128xf32>
    %31 = vector.broadcast %28 : vector<1x1x128xf32> to vector<4x64x128xf32>
    %32 = arith.addf %30, %31 : vector<4x64x128xf32>
    %33 = vector.extract_strided_slice %20 {offsets = [0, 0], sizes = [192, 128], strides = [1, 1]} : vector<256x128xbf16> to vector<192x128xbf16>
    %cst_19 = arith.constant dense<0.000000e+00> : vector<192x128xf32>
    %34 = tpu.matmul %33, %22, %cst_19 {dimension_numbers = #tpu.dot_dimension_numbers<[1], [0], [0], [1], [0, 0, 1, 1], [], []>} : vector<192x128xbf16>, vector<128x128xbf16>, vector<192x128xf32> -> vector<192x128xf32>
    %35 = vector.shape_cast %34 : vector<192x128xf32> to vector<3x64x128xf32>
    %36 = vector.extract_strided_slice %20 {offsets = [64, 0], sizes = [192, 128], strides = [1, 1]} : vector<256x128xbf16> to vector<192x128xbf16>
    %cst_20 = arith.constant dense<0.000000e+00> : vector<192x128xf32>
    %37 = tpu.matmul %36, %26, %cst_20 {dimension_numbers = #tpu.dot_dimension_numbers<[1], [0], [0], [1], [0, 0, 1, 1], [], []>} : vector<192x128xbf16>, vector<128x128xbf16>, vector<192x128xf32> -> vector<192x128xf32>
    %38 = vector.shape_cast %37 : vector<192x128xf32> to vector<3x64x128xf32>
    %cst_21 = arith.constant 0.000000e+00 : f32
    %39 = vector.broadcast %cst_21 : f32 to vector<1x64x128xf32>
    %40 = tpu.concatenate %39, %35 in 0 : vector<1x64x128xf32>, vector<3x64x128xf32> -> vector<4x64x128xf32>
    %41 = arith.addf %32, %40 : vector<4x64x128xf32>
    %42 = tpu.concatenate %38, %39 in 0 : vector<3x64x128xf32>, vector<1x64x128xf32> -> vector<4x64x128xf32>
    %43 = arith.addf %41, %42 : vector<4x64x128xf32>
    %c0_22 = arith.constant 0 : index
    %c0_23 = arith.constant 0 : index
    %c0_24 = arith.constant 0 : index
    %c0_25 = arith.constant 0 : index
    %44 = vector.load %arg3[%c0_22, %c0_23, %c0_24, %c0_25] : memref<1x4x64x128xf32, #tpu.memory_space<vmem>>, vector<1x4x64x128xf32>
    %45 = vector.shape_cast %44 : vector<1x4x64x128xf32> to vector<4x64x128xf32>
    %46 = arith.addf %45, %43 : vector<4x64x128xf32>
    %c0_26 = arith.constant 0 : index
    %c0_27 = arith.constant 0 : index
    %c0_28 = arith.constant 0 : index
    %c0_29 = arith.constant 0 : index
    %47 = vector.load %arg7[%c0_26, %c0_27, %c0_28, %c0_29] : memref<1x4x64x128xf32, #tpu.memory_space<vmem>>, vector<1x4x64x128xf32>
    %48 = vector.shape_cast %47 : vector<1x4x64x128xf32> to vector<4x64x128xf32>
    %49 = vector.shape_cast %46 : vector<4x64x128xf32> to vector<1x4x64x128xf32>
    tpu.vector_store %arg7[%c0_26, %c0_27, %c0_28, %c0_29], %49 {strides = array<i32>} : memref<1x4x64x128xf32, #tpu.memory_space<vmem>>, vector<1x4x64x128xf32>,
    return
  }
  func.func @transform_0(%arg0: i32, %arg1: i32) -> (i32, i32, i32, i32) {
    %c0_i32 = arith.constant 0 : i32
    %c0_i32_0 = arith.constant 0 : i32
    %c0_i32_1 = arith.constant 0 : i32
    return %arg0, %c0_i32, %arg1, %c0_i32_0 : i32, i32, i32, i32
  }
  func.func @transform_1(%arg0: i32, %arg1: i32) -> (i32, i32, i32, i32) {
    %c0_i32 = arith.constant 0 : i32
    %c0_i32_0 = arith.constant 0 : i32
    %c0_i32_1 = arith.constant 0 : i32
    return %arg0, %c0_i32, %arg1, %c0_i32_0 : i32, i32, i32, i32
  }
  func.func @transform_2(%arg0: i32, %arg1: i32) -> (i32, i32, i32) {
    %c0_i32 = arith.constant 0 : i32
    %c0_i32_0 = arith.constant 0 : i32
    %c0_i32_1 = arith.constant 0 : i32
    return %arg0, %c0_i32, %c0_i32_0 : i32, i32, i32
  }
  func.func @transform_3(%arg0: i32, %arg1: i32) -> (i32, i32, i32) {
    %c0_i32 = arith.constant 0 : i32
    %c0_i32_0 = arith.constant 0 : i32
    %c0_i32_1 = arith.constant 0 : i32
    %c0_i32_2 = arith.constant 0 : i32
    return %c0_i32, %c0_i32_0, %c0_i32_1 : i32, i32, i32
  }
  func.func @transform_4(%arg0: i32, %arg1: i32) -> (i32, i32) {
    %c0_i32 = arith.constant 0 : i32
    %c0_i32_0 = arith.constant 0 : i32
    %c0_i32_1 = arith.constant 0 : i32
    return %c0_i32, %c0_i32_0 : i32, i32
  }
  func.func @transform_5(%arg0: i32, %arg1: i32) -> (i32, i32, i32, i32) {
    %c0_i32 = arith.constant 0 : i32
    %c0_i32_0 = arith.constant 0 : i32
    %c0_i32_1 = arith.constant 0 : i32
    return %arg0, %c0_i32, %arg1, %c0_i32_0 : i32, i32, i32, i32
  }
}

</mosaic_0001>

<llo_original>
// kernel: temporal_conv_block.7
$region0: #{temporal_conv_block.7}
  #allocation0 [shape = 'u32[]', space=smem, size = 0x4, offset = 0x4, fixed_abs, tag = 'smem constant byte address 0x4 - core index']
  #allocation1 [shape = 'u32[72,128]{1,0:T(1,128)}', space=vmem, size = 0x9000, scoped, tag = 'internal scratch']
  %s0 = inlined_call_operand.vmem [shape: bf16[2,4,64,128], index: 0, kind: input, shape index: {}]
  %s1 = inlined_call_operand.vmem [shape: f32[2,4,64,128], index: 1, kind: input, shape index: {}]
  %s2 = inlined_call_operand.vmem [shape: f32[2,2,128], index: 2, kind: input, shape index: {}]
  %s3 = inlined_call_operand.vmem [shape: bf16[3,128,128], index: 3, kind: input, shape index: {}]
  %s4 = inlined_call_operand.vmem [shape: f32[1,128], index: 4, kind: input, shape index: {}]
  %s5 = inlined_call_operand.vmem [shape: f32[2,4,64,128], index: 5, kind: output, shape index: {}]
  %s6 = sld [smem:[#allocation0]]
  $region53: #{temporal_conv_block.7} parent=0
    _
  %s8 = ssub.s32 1, %s6
  %s9 = scalar_select 0, %s8, %s6
  loop: start=0, step=1, limit=4
  $region2: #{temporal_conv_block.7} parent=0 // loop_pre_header
    _
  $region3: #{temporal_conv_block.7} parent=0 // loop_header
    %s11 = sphi 0, %s15
    %p12 = scmp.ge.s32.totalorder %s11, 4
    %s18 = sphi 0, %s30
    %s19 = sphi 0, %s26
    %s20 = sphi 0, %s18
    %s21 = sphi 0, %s19
    %s22 = sphi 0, %s20
    %s23 = sphi 0, %s21
    %s35 = sphi 0, %s37
    %s38 = sphi 0, %s35
    %s39 = sphi 0, %s38
    %s55 = sphi 0, %s39
    %s63 = sphi 0, %s65
    %s66 = sphi 0, %s63
    %s67 = sphi 0, %s66
    %s83 = sphi 0, %s67
    %s89 = sphi 0, %s91
    %s92 = sphi 0, %s89
    %s93 = sphi 0, %s92
    %s109 = sphi 0, %s93
    %s113 = sphi 0, %s113
    %s115 = sphi 0, %s113
    %s116 = sphi 0, %s115
    %s130 = sphi 0, %s116
    %s134 = sphi 0, %s134
    %s136 = sphi 0, %s134
    %s137 = sphi 0, %s136
    %s151 = sphi 0, %s137
    %s159 = sphi 0, %s161
    %s162 = sphi 0, %s159
    %s163 = sphi 0, %s162
    %s179 = sphi 0, %s163
  $region4: #{temporal_conv_block.7} parent=0 // loop_header_branch
    %14 = sbr.rel (%p12) target = $region8
  $region5: #{temporal_conv_block.7} parent=0 // loop_body
    %s16 = ssub.s32 %s11, 1
    %s17 = ssub.s32 %s11, 2
    %s24 = sadd.s32 1, %s19
    %p25 = scmp.ge.s32.totalorder %s24, 1
    %s26 = scalar_select %p25, 0, %s24
    %s27 = sadd.s32 1, %s18
    %s28 = scalar_select %p25, %s27, %s18
    %p29 = scmp.ge.s32.totalorder %s28, 2
    %s30 = scalar_select %p29, 0, %s28
    %s31 = ssub.s32 %s18, %s30
    %s32 = ssub.s32 %s19, %s26
    %s33 = sor.u32 %s31, %s32
    %p34 = scmp.eq.s32.totalorder %s33, 0
    %s36 = sadd.s32 %s35, 1
    %s37 = scalar_select %p34, %s35, %s36
    %p40 = pneg %p34
    %p41 = scmp.eq.s32.totalorder %s11, 1
    %p42 = por %p40, %p41
    %p43 = scmp.ne.s32.totalorder %s35, %s38
    %p44 = scmp.eq.s32.totalorder %s11, 0
    %p45 = por %p43, %p44
    %p46 = scmp.ne.s32.totalorder %s35, %s38
    %p47 = scmp.eq.s32.totalorder %s16, 1
    %p48 = por %p46, %p47
    %p49 = scmp.ne.s32.totalorder %s38, %s39
    %p50 = scmp.eq.s32.totalorder %s16, 0
    %p51 = por %p49, %p50
    %p52 = scmp.ne.s32.totalorder %s38, %s39
    %p53 = scmp.eq.s32.totalorder %s17, 1
    %p54 = por %p52, %p53
    %p56 = scmp.ne.s32.totalorder %s39, %s55
    %p57 = scmp.eq.s32.totalorder %s17, 0
    %p58 = por %p56, %p57
    %s59 = ssub.s32 %s18, %s30
    %s60 = ssub.s32 %s19, %s26
    %s61 = sor.u32 %s59, %s60
    %p62 = scmp.eq.s32.totalorder %s61, 0
    %s64 = sadd.s32 %s63, 1
    %s65 = scalar_select %p62, %s63, %s64
    %p68 = pneg %p62
    %p69 = scmp.eq.s32.totalorder %s11, 1
    %p70 = por %p68, %p69
    %p71 = scmp.ne.s32.totalorder %s63, %s66
    %p72 = scmp.eq.s32.totalorder %s11, 0
    %p73 = por %p71, %p72
    %p74 = scmp.ne.s32.totalorder %s63, %s66
    %p75 = scmp.eq.s32.totalorder %s16, 1
    %p76 = por %p74, %p75
    %p77 = scmp.ne.s32.totalorder %s66, %s67
    %p78 = scmp.eq.s32.totalorder %s16, 0
    %p79 = por %p77, %p78
    %p80 = scmp.ne.s32.totalorder %s66, %s67
    %p81 = scmp.eq.s32.totalorder %s17, 1
    %p82 = por %p80, %p81
    %p84 = scmp.ne.s32.totalorder %s67, %s83
    %p85 = scmp.eq.s32.totalorder %s17, 0
    %p86 = por %p84, %p85
    %s87 = ssub.s32 %s18, %s30
    %p88 = scmp.eq.s32.totalorder %s87, 0
    %s90 = sadd.s32 %s89, 1
    %s91 = scalar_select %p88, %s89, %s90
    %p94 = pneg %p88
    %p95 = scmp.eq.s32.totalorder %s11, 1
    %p96 = por %p94, %p95
    %p97 = scmp.ne.s32.totalorder %s89, %s92
    %p98 = scmp.eq.s32.totalorder %s11, 0
    %p99 = por %p97, %p98
    %p100 = scmp.ne.s32.totalorder %s89, %s92
    %p101 = scmp.eq.s32.totalorder %s16, 1
    %p102 = por %p100, %p101
    %p103 = scmp.ne.s32.totalorder %s92, %s93
    %p104 = scmp.eq.s32.totalorder %s16, 0
    %p105 = por %p103, %p104
    %p106 = scmp.ne.s32.totalorder %s92, %s93
    %p107 = scmp.eq.s32.totalorder %s17, 1
    %p108 = por %p106, %p107
    %p110 = scmp.ne.s32.totalorder %s93, %s109
    %p111 = scmp.eq.s32.totalorder %s17, 0
    %p112 = por %p110, %p111
    %s114 = sadd.s32 %s113, 1
    %p117 = scmp.eq.s32.totalorder %s11, 1
    %p118 = scmp.ne.s32.totalorder %s113, %s115
    %p119 = scmp.eq.s32.totalorder %s11, 0
    %p120 = por %p118, %p119
    %p121 = scmp.ne.s32.totalorder %s113, %s115
    %p122 = scmp.eq.s32.totalorder %s16, 1
    %p123 = por %p121, %p122
    %p124 = scmp.ne.s32.totalorder %s115, %s116
    %p125 = scmp.eq.s32.totalorder %s16, 0
    %p126 = por %p124, %p125
    %p127 = scmp.ne.s32.totalorder %s115, %s116
    %p128 = scmp.eq.s32.totalorder %s17, 1
    %p129 = por %p127, %p128
    %p131 = scmp.ne.s32.totalorder %s116, %s130
    %p132 = scmp.eq.s32.totalorder %s17, 0
    %p133 = por %p131, %p132
    %s135 = sadd.s32 %s134, 1
    %p138 = scmp.eq.s32.totalorder %s11, 1
    %p139 = scmp.ne.s32.totalorder %s134, %s136
    %p140 = scmp.eq.s32.totalorder %s11, 0
    %p141 = por %p139, %p140
    %p142 = scmp.ne.s32.totalorder %s134, %s136
    %p143 = scmp.eq.s32.totalorder %s16, 1
    %p144 = por %p142, %p143
    %p145 = scmp.ne.s32.totalorder %s136, %s137
    %p146 = scmp.eq.s32.totalorder %s16, 0
    %p147 = por %p145, %p146
    %p148 = scmp.ne.s32.totalorder %s136, %s137
    %p149 = scmp.eq.s32.totalorder %s17, 1
    %p150 = por %p148, %p149
    %p152 = scmp.ne.s32.totalorder %s137, %s151
    %p153 = scmp.eq.s32.totalorder %s17, 0
    %p154 = por %p152, %p153
    %s155 = ssub.s32 %s18, %s30
    %s156 = ssub.s32 %s19, %s26
    %s157 = sor.u32 %s155, %s156
    %p158 = scmp.eq.s32.totalorder %s157, 0
    %s160 = sadd.s32 %s159, 1
    %s161 = scalar_select %p158, %s159, %s160
    %p164 = pneg %p158
    %p165 = scmp.eq.s32.totalorder %s11, 1
    %p166 = por %p164, %p165
    %p167 = scmp.ne.s32.totalorder %s159, %s162
    %p168 = scmp.eq.s32.totalorder %s11, 0
    %p169 = por %p167, %p168
    %p170 = scmp.ne.s32.totalorder %s159, %s162
    %p171 = scmp.eq.s32.totalorder %s16, 1
    %p172 = por %p170, %p171
    %p173 = scmp.ne.s32.totalorder %s162, %s163
    %p174 = scmp.eq.s32.totalorder %s16, 0
    %p175 = por %p173, %p174
    %p176 = scmp.ne.s32.totalorder %s162, %s163
    %p177 = scmp.eq.s32.totalorder %s17, 1
    %p178 = por %p176, %p177
    %p180 = scmp.ne.s32.totalorder %s163, %s179
    %p181 = scmp.eq.s32.totalorder %s17, 0
    %p182 = por %p180, %p181
    %p183 = scmp.le.s32.totalorder 1, %s11
    %p184 = scmp.lt.s32.totalorder %s11, 3
    %p185 = pnand %p183, %p184
    %p186 = pneg %p185
    // Predicated region
    $region9: #{temporal_conv_block.7} parent=5 // pred_check
      _
    $region10: #{temporal_conv_block.7} parent=5 // pred_check_branch
      %188 = sbr.rel (%p185) target = $region12
    $region11: #{temporal_conv_block.7} parent=5 // pred_region
      %s189 = ssub.s32 %s11, 1
      // Predicated region
      $region13: #{temporal_conv_block.7} parent=11 // pred_check
        %p190 = pneg %p126
      $region14: #{temporal_conv_block.7} parent=11 // pred_check_branch
        %192 = sbr.rel (%p190) target = $region16
      $region15: #{temporal_conv_block.7} parent=11 // pred_region
        _
      $region16: #{temporal_conv_block.7} parent=11 // pred_fallthru
        _
      // Predicated region
      $region17: #{temporal_conv_block.7} parent=11 // pred_check
        %p193 = pneg %p147
      $region18: #{temporal_conv_block.7} parent=11 // pred_check_branch
        %195 = sbr.rel (%p193) target = $region20
      $region19: #{temporal_conv_block.7} parent=11 // pred_region
        _
      $region20: #{temporal_conv_block.7} parent=11 // pred_fallthru
        _
    $region12: #{temporal_conv_block.7} parent=5 // pred_fallthru
      _
    %p196 = scmp.lt.s32.totalorder %s11, 2
    // Predicated region
    $region21: #{temporal_conv_block.7} parent=5 // pred_check
      %p197 = pneg %p196
    $region22: #{temporal_conv_block.7} parent=5 // pred_check_branch
      %199 = sbr.rel (%p197) target = $region24
    $region23: #{temporal_conv_block.7} parent=5 // pred_region
      // Predicated region
      $region25: #{temporal_conv_block.7} parent=23 // pred_check
        %p200 = pneg %p45
      $region26: #{temporal_conv_block.7} parent=23 // pred_check_branch
        %202 = sbr.rel (%p200) target = $region28
      $region27: #{temporal_conv_block.7} parent=23 // pred_region
        %s203 = smul.u32 8, %s19
        %p204 = scmp.lt.s32.totalorder %s18, 1
        %s205 = scalar_select %p204, %s18, 1
        %p206 = scmp.lt.s32.totalorder %s203, 7
        %s207 = scalar_select %p206, %s203, 7
        %s208 = smul.addr %s205, 32
        %s209 = sadd.s32 %s207, %s208
        %s210 = smul.addr %s209, 4
        %s211 = scalar_lea.vmem %s0, %s210
        %s212 = smul.u32 8, %s19
      $region28: #{temporal_conv_block.7} parent=23 // pred_fallthru
        _
      // Predicated region
      $region29: #{temporal_conv_block.7} parent=23 // pred_check
        %p213 = pneg %p73
      $region30: #{temporal_conv_block.7} parent=23 // pred_check_branch
        %215 = sbr.rel (%p213) target = $region32
      $region31: #{temporal_conv_block.7} parent=23 // pred_region
        %s216 = smul.u32 8, %s19
        %p217 = scmp.lt.s32.totalorder %s18, 1
        %s218 = scalar_select %p217, %s18, 1
        %p219 = scmp.lt.s32.totalorder %s216, 7
        %s220 = scalar_select %p219, %s216, 7
        %s221 = smul.addr %s218, 32
        %s222 = sadd.s32 %s220, %s221
        %s223 = smul.addr %s222, 8
        %s224 = scalar_lea.vmem %s1, %s223
        %s225 = smul.u32 8, %s19
      $region32: #{temporal_conv_block.7} parent=23 // pred_fallthru
        _
      // Predicated region
      $region33: #{temporal_conv_block.7} parent=23 // pred_check
        %p226 = pneg %p99
      $region34: #{temporal_conv_block.7} parent=23 // pred_check_branch
        %228 = sbr.rel (%p226) target = $region36
      $region35: #{temporal_conv_block.7} parent=23 // pred_region
        %p229 = scmp.lt.s32.totalorder %s18, 1
        %s230 = scalar_select %p229, %s18, 1
        %s231 = smul.addr %s230, 2
        %s232 = scalar_lea.vmem %s2, %s231
      $region36: #{temporal_conv_block.7} parent=23 // pred_fallthru
        _
    $region24: #{temporal_conv_block.7} parent=5 // pred_fallthru
      _
    %p233 = scmp.le.s32.totalorder 1, %s11
    %p234 = scmp.lt.s32.totalorder %s11, 3
    %p235 = pnand %p233, %p234
    %p236 = pneg %p235
    // Predicated region
    $region37: #{temporal_conv_block.7} parent=5 // pred_check
      _
    $region38: #{temporal_conv_block.7} parent=5 // pred_check_branch
      %238 = sbr.rel (%p235) target = $region40
    $region39: #{temporal_conv_block.7} parent=5 // pred_region
      %s239 = ssub.s32 %s11, 1
      %s240 = smul.u32 8, %s21
      %p241 = scmp.lt.s32.totalorder %s20, 1
      %s242 = scalar_select %p241, %s20, 1
      %p243 = scmp.lt.s32.totalorder %s240, 7
      %s244 = scalar_select %p243, %s240, 7
      %s245 = smul.addr %s242, 32
      %s246 = sadd.s32 %s244, %s245
      %s247 = smul.addr %s246, 4
      %s248 = scalar_lea.vmem %s0, %s247
      %p249 = pneg %p51
      %p250 = pneg %p48
      %s251 = smul.u32 8, %s21
      %p252 = scmp.lt.s32.totalorder %s20, 1
      %s253 = scalar_select %p252, %s20, 1
      %p254 = scmp.lt.s32.totalorder %s251, 7
      %s255 = scalar_select %p254, %s251, 7
      %s256 = smul.addr %s253, 32
      %s257 = sadd.s32 %s255, %s256
      %s258 = smul.addr %s257, 8
      %s259 = scalar_lea.vmem %s1, %s258
      %p260 = pneg %p79
      %p261 = pneg %p76
      %p262 = scmp.lt.s32.totalorder %s20, 1
      %s263 = scalar_select %p262, %s20, 1
      %s264 = smul.addr %s263, 2
      %s265 = scalar_lea.vmem %s2, %s264
      %p266 = pneg %p105
      %p267 = pneg %p102
      %p268 = pneg %p126
      %p269 = pneg %p123
      %p270 = pneg %p147
      %p271 = pneg %p144
      %p272 = pneg %p175
      %p273 = pneg %p172
      %s274 = smul.u32 8, %s21
      %p275 = scmp.lt.s32.totalorder %s20, 1
      %s276 = scalar_select %p275, %s20, 1
      %p277 = scmp.lt.s32.totalorder %s274, 7
      %s278 = scalar_select %p277, %s274, 7
      %s279 = smul.addr %s276, 32
      %s280 = sadd.s32 %s278, %s279
      %s281 = smul.addr %s280, 8
      %s282 = scalar_lea.vmem %s5, %s281
      %s283 = smul.u32 8, %s21
      %p284 = scmp.lt.s32.totalorder %s20, 1
      %s285 = scalar_select %p284, %s20, 1
      %p286 = scmp.lt.s32.totalorder %s283, 7
      %s287 = scalar_select %p286, %s283, 7
      %s288 = smul.addr %s285, 32
      %s289 = sadd.s32 %s287, %s288
      %s290 = smul.addr %s289, 4
      %s291 = scalar_lea.vmem %s0, %s290
      %s292 = smul.u32 8, %s21
      %s293 = smul.u32 8, %s21
      %p294 = scmp.lt.s32.totalorder %s20, 1
      %s295 = scalar_select %p294, %s20, 1
      %p296 = scmp.lt.s32.totalorder %s293, 7
      %s297 = scalar_select %p296, %s293, 7
      %s298 = smul.addr %s295, 32
      %s299 = sadd.s32 %s297, %s298
      %s300 = smul.addr %s299, 8
      %s301 = scalar_lea.vmem %s1, %s300
      %s302 = smul.u32 8, %s21
      %p303 = scmp.lt.s32.totalorder %s20, 1
      %s304 = scalar_select %p303, %s20, 1
      %s305 = smul.addr %s304, 2
      %s306 = scalar_lea.vmem %s2, %s305
      %s307 = smul.u32 8, %s21
      %p308 = scmp.lt.s32.totalorder %s20, 1
      %s309 = scalar_select %p308, %s20, 1
      %p310 = scmp.lt.s32.totalorder %s307, 7
      %s311 = scalar_select %p310, %s307, 7
      %s312 = smul.addr %s309, 32
      %s313 = sadd.s32 %s311, %s312
      %s314 = smul.addr %s313, 8
      %s315 = scalar_lea.vmem %s5, %s314
      %s316 = smul.u32 8, %s21
      %v317 = vld [vmem:[%s306] sm:$0x1]
      %v318 = vld [vmem:[%s306 + $0x1] sm:$0x1]
      %v319 = vld [vmem:[%s291] sm:$0xf]
      %v320 = vld [vmem:[%s291 + $0x4] sm:$0xf]
      %v321 = vld [vmem:[%s291 + $0x8] sm:$0xf]
      %v322 = vld [vmem:[%s291 + $0xc] sm:$0xf]
      %v323 = vld [vmem:[%s291 + $0x10] sm:$0xf]
      %v324 = vld [vmem:[%s291 + $0x14] sm:$0xf]
      %v325 = vld [vmem:[%s291 + $0x18] sm:$0xf]
      %v326 = vld [vmem:[%s291 + $0x1c] sm:$0xf]
      %v327 = vld [vmem:[%s291 + $0x20] sm:$0xf]
      %v328 = vld [vmem:[%s291 + $0x24] sm:$0xf]
      %v329 = vld [vmem:[%s291 + $0x28] sm:$0xf]
      %v330 = vld [vmem:[%s291 + $0x2c] sm:$0xf]
      %v331 = vld [vmem:[%s291 + $0x30] sm:$0xf]
      %v332 = vld [vmem:[%s291 + $0x34] sm:$0xf]
      %v333 = vld [vmem:[%s291 + $0x38] sm:$0xf]
      %v334 = vld [vmem:[%s291 + $0x3c] sm:$0xf]
      %v335 = vld [vmem:[%s291 + $0x40] sm:$0xf]
      %v336 = vld [vmem:[%s291 + $0x44] sm:$0xf]
      %v337 = vld [vmem:[%s291 + $0x48] sm:$0xf]
      %v338 = vld [vmem:[%s291 + $0x4c] sm:$0xf]
      %v339 = vld [vmem:[%s291 + $0x50] sm:$0xf]
      %v340 = vld [vmem:[%s291 + $0x54] sm:$0xf]
      %v341 = vld [vmem:[%s291 + $0x58] sm:$0xf]
      %v342 = vld [vmem:[%s291 + $0x5c] sm:$0xf]
      %v343 = vld [vmem:[%s291 + $0x60] sm:$0xf]
      %v344 = vld [vmem:[%s291 + $0x64] sm:$0xf]
      %v345 = vld [vmem:[%s291 + $0x68] sm:$0xf]
      %v346 = vld [vmem:[%s291 + $0x6c] sm:$0xf]
      %v347 = vld [vmem:[%s291 + $0x70] sm:$0xf]
      %v348 = vld [vmem:[%s291 + $0x74] sm:$0xf]
      %v349 = vld [vmem:[%s291 + $0x78] sm:$0xf]
      %v350 = vld [vmem:[%s291 + $0x7c] sm:$0xf]
      %v351 = vunpack.c.l.bf16 %v319
      %v352 = vunpack.c.l.bf16 %v320
      %v353 = vunpack.c.l.bf16 %v321
      %v354 = vunpack.c.l.bf16 %v322
      %v355 = vunpack.c.l.bf16 %v323
      %v356 = vunpack.c.l.bf16 %v324
      %v357 = vunpack.c.l.bf16 %v325
      %v358 = vunpack.c.l.bf16 %v326
      %v359 = vunpack.c.l.bf16 %v327
      %v360 = vunpack.c.l.bf16 %v328
      %v361 = vunpack.c.l.bf16 %v329
      %v362 = vunpack.c.l.bf16 %v330
      %v363 = vunpack.c.l.bf16 %v331
      %v364 = vunpack.c.l.bf16 %v332
      %v365 = vunpack.c.l.bf16 %v333
      %v366 = vunpack.c.l.bf16 %v334
      %v367 = vunpack.c.l.bf16 %v335
      %v368 = vunpack.c.l.bf16 %v336
      %v369 = vunpack.c.l.bf16 %v337
      %v370 = vunpack.c.l.bf16 %v338
      %v371 = vunpack.c.l.bf16 %v339
      %v372 = vunpack.c.l.bf16 %v340
      %v373 = vunpack.c.l.bf16 %v341
      %v374 = vunpack.c.l.bf16 %v342
      %v375 = vunpack.c.l.bf16 %v343
      %v376 = vunpack.c.l.bf16 %v344
      %v377 = vunpack.c.l.bf16 %v345
      %v378 = vunpack.c.l.bf16 %v346
      %v379 = vunpack.c.l.bf16 %v347
      %v380 = vunpack.c.l.bf16 %v348
      %v381 = vunpack.c.l.bf16 %v349
      %v382 = vunpack.c.l.bf16 %v350
      %v383 = vperm.slane %v317, 0
      %v384 = vmul.f32 %v351, %v383
      %v385 = vmul.f32 %v352, %v383
      %v386 = vmul.f32 %v353, %v383
      %v387 = vmul.f32 %v354, %v383
      %v388 = vmul.f32 %v355, %v383
      %v389 = vmul.f32 %v356, %v383
      %v390 = vmul.f32 %v357, %v383
      %v391 = vmul.f32 %v358, %v383
      %v392 = vmul.f32 %v359, %v383
      %v393 = vmul.f32 %v360, %v383
      %v394 = vmul.f32 %v361, %v383
      %v395 = vmul.f32 %v362, %v383
      %v396 = vmul.f32 %v363, %v383
      %v397 = vmul.f32 %v364, %v383
      %v398 = vmul.f32 %v365, %v383
      %v399 = vmul.f32 %v366, %v383
      %v400 = vmul.f32 %v367, %v383
      %v401 = vmul.f32 %v368, %v383
      %v402 = vmul.f32 %v369, %v383
      %v403 = vmul.f32 %v370, %v383
      %v404 = vmul.f32 %v371, %v383
      %v405 = vmul.f32 %v372, %v383
      %v406 = vmul.f32 %v373, %v383
      %v407 = vmul.f32 %v374, %v383
      %v408 = vmul.f32 %v375, %v383
      %v409 = vmul.f32 %v376, %v383
      %v410 = vmul.f32 %v377, %v383
      %v411 = vmul.f32 %v378, %v383
      %v412 = vmul.f32 %v379, %v383
      %v413 = vmul.f32 %v380, %v383
      %v414 = vmul.f32 %v381, %v383
      %v415 = vmul.f32 %v382, %v383
      %v416 = vperm.slane %v318, 0
      %v417 = vadd.f32 %v384, %v416
      %v418 = vadd.f32 %v385, %v416
      %v419 = vadd.f32 %v386, %v416
      %v420 = vadd.f32 %v387, %v416
      %v421 = vadd.f32 %v388, %v416
      %v422 = vadd.f32 %v389, %v416
      %v423 = vadd.f32 %v390, %v416
      %v424 = vadd.f32 %v391, %v416
      %v425 = vadd.f32 %v392, %v416
      %v426 = vadd.f32 %v393, %v416
      %v427 = vadd.f32 %v394, %v416
      %v428 = vadd.f32 %v395, %v416
      %v429 = vadd.f32 %v396, %v416
      %v430 = vadd.f32 %v397, %v416
      %v431 = vadd.f32 %v398, %v416
      %v432 = vadd.f32 %v399, %v416
      %v433 = vadd.f32 %v400, %v416
      %v434 = vadd.f32 %v401, %v416
      %v435 = vadd.f32 %v402, %v416
      %v436 = vadd.f32 %v403, %v416
      %v437 = vadd.f32 %v404, %v416
      %v438 = vadd.f32 %v405, %v416
      %v439 = vadd.f32 %v406, %v416
      %v440 = vadd.f32 %v407, %v416
      %v441 = vadd.f32 %v408, %v416
      %v442 = vadd.f32 %v409, %v416
      %v443 = vadd.f32 %v410, %v416
      %v444 = vadd.f32 %v411, %v416
      %v445 = vadd.f32 %v412, %v416
      %v446 = vadd.f32 %v413, %v416
      %v447 = vadd.f32 %v414, %v416
      %v448 = vadd.f32 %v415, %v416
      %v449 = vxor.u32 %v417, 2147483648
      %v450 = vxor.u32 %v418, 2147483648
      %v451 = vxor.u32 %v419, 2147483648
      %v452 = vxor.u32 %v420, 2147483648
      %v453 = vxor.u32 %v421, 2147483648
      %v454 = vxor.u32 %v422, 2147483648
      %v455 = vxor.u32 %v423, 2147483648
      %v456 = vxor.u32 %v424, 2147483648
      %v457 = vxor.u32 %v425, 2147483648
      %v458 = vxor.u32 %v426, 2147483648
      %v459 = vxor.u32 %v427, 2147483648
      %v460 = vxor.u32 %v428, 2147483648
      %v461 = vxor.u32 %v429, 2147483648
      %v462 = vxor.u32 %v430, 2147483648
      %v463 = vxor.u32 %v431, 2147483648
      %v464 = vxor.u32 %v432, 2147483648
      %v465 = vxor.u32 %v433, 2147483648
      %v466 = vxor.u32 %v434, 2147483648
      %v467 = vxor.u32 %v435, 2147483648
      %v468 = vxor.u32 %v436, 2147483648
      %v469 = vxor.u32 %v437, 2147483648
      %v470 = vxor.u32 %v438, 2147483648
      %v471 = vxor.u32 %v439, 2147483648
      %v472 = vxor.u32 %v440, 2147483648
      %v473 = vxor.u32 %v441, 2147483648
      %v474 = vxor.u32 %v442, 2147483648
      %v475 = vxor.u32 %v443, 2147483648
      %v476 = vxor.u32 %v444, 2147483648
      %v477 = vxor.u32 %v445, 2147483648
      %v478 = vxor.u32 %v446, 2147483648
      %v479 = vxor.u32 %v447, 2147483648
      %v480 = vxor.u32 %v448, 2147483648
      %v481 = vmul.f32 %v449, 1.442695
      %v482 = vpow.pop %v481
      %v483 = vmul.f32 %v450, 1.442695
      %v484 = vpow.pop %v483
      %v485 = vmul.f32 %v451, 1.442695
      %v486 = vpow.pop %v485
      %v487 = vmul.f32 %v452, 1.442695
      %v488 = vpow.pop %v487
      %v489 = vmul.f32 %v453, 1.442695
      %v490 = vpow.pop %v489
      %v491 = vmul.f32 %v454, 1.442695
      %v492 = vpow.pop %v491
      %v493 = vmul.f32 %v455, 1.442695
      %v494 = vpow.pop %v493
      %v495 = vmul.f32 %v456, 1.442695
      %v496 = vpow.pop %v495
      %v497 = vmul.f32 %v457, 1.442695
      %v498 = vpow.pop %v497
      %v499 = vmul.f32 %v458, 1.442695
      %v500 = vpow.pop %v499
      %v501 = vmul.f32 %v459, 1.442695
      %v502 = vpow.pop %v501
      %v503 = vmul.f32 %v460, 1.442695
      %v504 = vpow.pop %v503
      %v505 = vmul.f32 %v461, 1.442695
      %v506 = vpow.pop %v505
      %v507 = vmul.f32 %v462, 1.442695
      %v508 = vpow.pop %v507
      %v509 = vmul.f32 %v463, 1.442695
      %v510 = vpow.pop %v509
      %v511 = vmul.f32 %v464, 1.442695
      %v512 = vpow.pop %v511
      %v513 = vmul.f32 %v465, 1.442695
      %v514 = vpow.pop %v513
      %v515 = vmul.f32 %v466, 1.442695
      %v516 = vpow.pop %v515
      %v517 = vmul.f32 %v467, 1.442695
      %v518 = vpow.pop %v517
      %v519 = vmul.f32 %v468, 1.442695
      %v520 = vpow.pop %v519
      %v521 = vmul.f32 %v469, 1.442695
      %v522 = vpow.pop %v521
      %v523 = vmul.f32 %v470, 1.442695
      %v524 = vpow.pop %v523
      %v525 = vmul.f32 %v471, 1.442695
      %v526 = vpow.pop %v525
      %v527 = vmul.f32 %v472, 1.442695
      %v528 = vpow.pop %v527
      %v529 = vmul.f32 %v473, 1.442695
      %v530 = vpow.pop %v529
      %v531 = vmul.f32 %v474, 1.442695
      %v532 = vpow.pop %v531
      %v533 = vmul.f32 %v475, 1.442695
      %v534 = vpow.pop %v533
      %v535 = vmul.f32 %v476, 1.442695
      %v536 = vpow.pop %v535
      %v537 = vmul.f32 %v477, 1.442695
      %v538 = vpow.pop %v537
      %v539 = vmul.f32 %v478, 1.442695
      %v540 = vpow.pop %v539
      %v541 = vmul.f32 %v479, 1.442695
      %v542 = vpow.pop %v541
      %v543 = vmul.f32 %v480, 1.442695
      %v544 = vpow.pop %v543
      %v545 = vadd.f32 %v482, 1.0
      %v546 = vadd.f32 %v484, 1.0
      %v547 = vadd.f32 %v486, 1.0
      %v548 = vadd.f32 %v488, 1.0
      %v549 = vadd.f32 %v490, 1.0
      %v550 = vadd.f32 %v492, 1.0
      %v551 = vadd.f32 %v494, 1.0
      %v552 = vadd.f32 %v496, 1.0
      %v553 = vadd.f32 %v498, 1.0
      %v554 = vadd.f32 %v500, 1.0
      %v555 = vadd.f32 %v502, 1.0
      %v556 = vadd.f32 %v504, 1.0
      %v557 = vadd.f32 %v506, 1.0
      %v558 = vadd.f32 %v508, 1.0
      %v559 = vadd.f32 %v510, 1.0
      %v560 = vadd.f32 %v512, 1.0
      %v561 = vadd.f32 %v514, 1.0
      %v562 = vadd.f32 %v516, 1.0
      %v563 = vadd.f32 %v518, 1.0
      %v564 = vadd.f32 %v520, 1.0
      %v565 = vadd.f32 %v522, 1.0
      %v566 = vadd.f32 %v524, 1.0
      %v567 = vadd.f32 %v526, 1.0
      %v568 = vadd.f32 %v528, 1.0
      %v569 = vadd.f32 %v530, 1.0
      %v570 = vadd.f32 %v532, 1.0
      %v571 = vadd.f32 %v534, 1.0
      %v572 = vadd.f32 %v536, 1.0
      %v573 = vadd.f32 %v538, 1.0
      %v574 = vadd.f32 %v540, 1.0
      %v575 = vadd.f32 %v542, 1.0
      %v576 = vadd.f32 %v544, 1.0
      %v577 = vrcp.pop %v545
      %v578 = vmul.f32 %v545, %v577
      %v579 = vsub.f32 1.0, %v578
      %v580 = vmul.f32 %v577, %v579
      %v581 = vadd.f32 %v577, %v580
      %vm582 = vweird.f32 %v545
      %vm583 = vweird.f32 %v577
      %vm584 = vmor %vm582, %vm583
      %v585 = vsel %vm584, %v577, %v581
      %v586 = vand.u32 2147483647, %v545
      %vm587 = vcmp.eq.f32.partialorder %v586, 8.507059e+37
      %v588 = vand.u32 %v545, 2147483648
      %v589 = vor.u32 1.1754944e-38, %v588
      %v590 = vsel %vm587, %v589, %v585
      %v591 = vmul.f32 1.0, %v590
      %v592 = vrcp.pop %v546
      %v593 = vmul.f32 %v546, %v592
      %v594 = vsub.f32 1.0, %v593
      %v595 = vmul.f32 %v592, %v594
      %v596 = vadd.f32 %v592, %v595
      %vm597 = vweird.f32 %v546
      %vm598 = vweird.f32 %v592
      %vm599 = vmor %vm597, %vm598
      %v600 = vsel %vm599, %v592, %v596
      %v601 = vand.u32 2147483647, %v546
      %vm602 = vcmp.eq.f32.partialorder %v601, 8.507059e+37
      %v603 = vand.u32 %v546, 2147483648
      %v604 = vor.u32 1.1754944e-38, %v603
      %v605 = vsel %vm602, %v604, %v600
      %v606 = vmul.f32 1.0, %v605
      %v607 = vrcp.pop %v547
      %v608 = vmul.f32 %v547, %v607
      %v609 = vsub.f32 1.0, %v608
      %v610 = vmul.f32 %v607, %v609
      %v611 = vadd.f32 %v607, %v610
      %vm612 = vweird.f32 %v547
      %vm613 = vweird.f32 %v607
      %vm614 = vmor %vm612, %vm613
      %v615 = vsel %vm614, %v607, %v611
      %v616 = vand.u32 2147483647, %v547
      %vm617 = vcmp.eq.f32.partialorder %v616, 8.507059e+37
      %v618 = vand.u32 %v547, 2147483648
      %v619 = vor.u32 1.1754944e-38, %v618
      %v620 = vsel %vm617, %v619, %v615
      %v621 = vmul.f32 1.0, %v620
      %v622 = vrcp.pop %v548
      %v623 = vmul.f32 %v548, %v622
      %v624 = vsub.f32 1.0, %v623
      %v625 = vmul.f32 %v622, %v624
      %v626 = vadd.f32 %v622, %v625
      %vm627 = vweird.f32 %v548
      %vm628 = vweird.f32 %v622
      %vm629 = vmor %vm627, %vm628
      %v630 = vsel %vm629, %v622, %v626
      %v631 = vand.u32 2147483647, %v548
      %vm632 = vcmp.eq.f32.partialorder %v631, 8.507059e+37
      %v633 = vand.u32 %v548, 2147483648
      %v634 = vor.u32 1.1754944e-38, %v633
      %v635 = vsel %vm632, %v634, %v630
      %v636 = vmul.f32 1.0, %v635
      %v637 = vrcp.pop %v549
      %v638 = vmul.f32 %v549, %v637
      %v639 = vsub.f32 1.0, %v638
      %v640 = vmul.f32 %v637, %v639
      %v641 = vadd.f32 %v637, %v640
      %vm642 = vweird.f32 %v549
      %vm643 = vweird.f32 %v637
      %vm644 = vmor %vm642, %vm643
      %v645 = vsel %vm644, %v637, %v641
      %v646 = vand.u32 2147483647, %v549
      %vm647 = vcmp.eq.f32.partialorder %v646, 8.507059e+37
      %v648 = vand.u32 %v549, 2147483648
      %v649 = vor.u32 1.1754944e-38, %v648
      %v650 = vsel %vm647, %v649, %v645
      %v651 = vmul.f32 1.0, %v650
      %v652 = vrcp.pop %v550
      %v653 = vmul.f32 %v550, %v652
      %v654 = vsub.f32 1.0, %v653
      %v655 = vmul.f32 %v652, %v654
      %v656 = vadd.f32 %v652, %v655
      %vm657 = vweird.f32 %v550
      %vm658 = vweird.f32 %v652
      %vm659 = vmor %vm657, %vm658
      %v660 = vsel %vm659, %v652, %v656
      %v661 = vand.u32 2147483647, %v550
      %vm662 = vcmp.eq.f32.partialorder %v661, 8.507059e+37
      %v663 = vand.u32 %v550, 2147483648
      %v664 = vor.u32 1.1754944e-38, %v663
      %v665 = vsel %vm662, %v664, %v660
      %v666 = vmul.f32 1.0, %v665
      %v667 = vrcp.pop %v551
      %v668 = vmul.f32 %v551, %v667
      %v669 = vsub.f32 1.0, %v668
      %v670 = vmul.f32 %v667, %v669
      %v671 = vadd.f32 %v667, %v670
      %vm672 = vweird.f32 %v551
      %vm673 = vweird.f32 %v667
      %vm674 = vmor %vm672, %vm673
      %v675 = vsel %vm674, %v667, %v671
      %v676 = vand.u32 2147483647, %v551
      %vm677 = vcmp.eq.f32.partialorder %v676, 8.507059e+37
      %v678 = vand.u32 %v551, 2147483648
      %v679 = vor.u32 1.1754944e-38, %v678
      %v680 = vsel %vm677, %v679, %v675
      %v681 = vmul.f32 1.0, %v680
      %v682 = vrcp.pop %v552
      %v683 = vmul.f32 %v552, %v682
      %v684 = vsub.f32 1.0, %v683
      %v685 = vmul.f32 %v682, %v684
      %v686 = vadd.f32 %v682, %v685
      %vm687 = vweird.f32 %v552
      %vm688 = vweird.f32 %v682
      %vm689 = vmor %vm687, %vm688
      %v690 = vsel %vm689, %v682, %v686
      %v691 = vand.u32 2147483647, %v552
      %vm692 = vcmp.eq.f32.partialorder %v691, 8.507059e+37
      %v693 = vand.u32 %v552, 2147483648
      %v694 = vor.u32 1.1754944e-38, %v693
      %v695 = vsel %vm692, %v694, %v690
      %v696 = vmul.f32 1.0, %v695
      %v697 = vrcp.pop %v553
      %v698 = vmul.f32 %v553, %v697
      %v699 = vsub.f32 1.0, %v698
      %v700 = vmul.f32 %v697, %v699
      %v701 = vadd.f32 %v697, %v700
      %vm702 = vweird.f32 %v553
      %vm703 = vweird.f32 %v697
      %vm704 = vmor %vm702, %vm703
      %v705 = vsel %vm704, %v697, %v701
      %v706 = vand.u32 2147483647, %v553
      %vm707 = vcmp.eq.f32.partialorder %v706, 8.507059e+37
      %v708 = vand.u32 %v553, 2147483648
      %v709 = vor.u32 1.1754944e-38, %v708
      %v710 = vsel %vm707, %v709, %v705
      %v711 = vmul.f32 1.0, %v710
      %v712 = vrcp.pop %v554
      %v713 = vmul.f32 %v554, %v712
      %v714 = vsub.f32 1.0, %v713
      %v715 = vmul.f32 %v712, %v714
      %v716 = vadd.f32 %v712, %v715
      %vm717 = vweird.f32 %v554
      %vm718 = vweird.f32 %v712
      %vm719 = vmor %vm717, %vm718
      %v720 = vsel %vm719, %v712, %v716
      %v721 = vand.u32 2147483647, %v554
      %vm722 = vcmp.eq.f32.partialorder %v721, 8.507059e+37
      %v723 = vand.u32 %v554, 2147483648
      %v724 = vor.u32 1.1754944e-38, %v723
      %v725 = vsel %vm722, %v724, %v720
      %v726 = vmul.f32 1.0, %v725
      %v727 = vrcp.pop %v555
      %v728 = vmul.f32 %v555, %v727
      %v729 = vsub.f32 1.0, %v728
      %v730 = vmul.f32 %v727, %v729
      %v731 = vadd.f32 %v727, %v730
      %vm732 = vweird.f32 %v555
      %vm733 = vweird.f32 %v727
      %vm734 = vmor %vm732, %vm733
      %v735 = vsel %vm734, %v727, %v731
      %v736 = vand.u32 2147483647, %v555
      %vm737 = vcmp.eq.f32.partialorder %v736, 8.507059e+37
      %v738 = vand.u32 %v555, 2147483648
      %v739 = vor.u32 1.1754944e-38, %v738
      %v740 = vsel %vm737, %v739, %v735
      %v741 = vmul.f32 1.0, %v740
      %v742 = vrcp.pop %v556
      %v743 = vmul.f32 %v556, %v742
      %v744 = vsub.f32 1.0, %v743
      %v745 = vmul.f32 %v742, %v744
      %v746 = vadd.f32 %v742, %v745
      %vm747 = vweird.f32 %v556
      %vm748 = vweird.f32 %v742
      %vm749 = vmor %vm747, %vm748
      %v750 = vsel %vm749, %v742, %v746
      %v751 = vand.u32 2147483647, %v556
      %vm752 = vcmp.eq.f32.partialorder %v751, 8.507059e+37
      %v753 = vand.u32 %v556, 2147483648
      %v754 = vor.u32 1.1754944e-38, %v753
      %v755 = vsel %vm752, %v754, %v750
      %v756 = vmul.f32 1.0, %v755
      %v757 = vrcp.pop %v557
      %v758 = vmul.f32 %v557, %v757
      %v759 = vsub.f32 1.0, %v758
      %v760 = vmul.f32 %v757, %v759
      %v761 = vadd.f32 %v757, %v760
      %vm762 = vweird.f32 %v557
      %vm763 = vweird.f32 %v757
      %vm764 = vmor %vm762, %vm763
      %v765 = vsel %vm764, %v757, %v761
      %v766 = vand.u32 2147483647, %v557
      %vm767 = vcmp.eq.f32.partialorder %v766, 8.507059e+37
      %v768 = vand.u32 %v557, 2147483648
      %v769 = vor.u32 1.1754944e-38, %v768
      %v770 = vsel %vm767, %v769, %v765
      %v771 = vmul.f32 1.0, %v770
      %v772 = vrcp.pop %v558
      %v773 = vmul.f32 %v558, %v772
      %v774 = vsub.f32 1.0, %v773
      %v775 = vmul.f32 %v772, %v774
      %v776 = vadd.f32 %v772, %v775
      %vm777 = vweird.f32 %v558
      %vm778 = vweird.f32 %v772
      %vm779 = vmor %vm777, %vm778
      %v780 = vsel %vm779, %v772, %v776
      %v781 = vand.u32 2147483647, %v558
      %vm782 = vcmp.eq.f32.partialorder %v781, 8.507059e+37
      %v783 = vand.u32 %v558, 2147483648
      %v784 = vor.u32 1.1754944e-38, %v783
      %v785 = vsel %vm782, %v784, %v780
      %v786 = vmul.f32 1.0, %v785
      %v787 = vrcp.pop %v559
      %v788 = vmul.f32 %v559, %v787
      %v789 = vsub.f32 1.0, %v788
      %v790 = vmul.f32 %v787, %v789
      %v791 = vadd.f32 %v787, %v790
      %vm792 = vweird.f32 %v559
      %vm793 = vweird.f32 %v787
      %vm794 = vmor %vm792, %vm793
      %v795 = vsel %vm794, %v787, %v791
      %v796 = vand.u32 2147483647, %v559
      %vm797 = vcmp.eq.f32.partialorder %v796, 8.507059e+37
      %v798 = vand.u32 %v559, 2147483648
      %v799 = vor.u32 1.1754944e-38, %v798
      %v800 = vsel %vm797, %v799, %v795
      %v801 = vmul.f32 1.0, %v800
      %v802 = vrcp.pop %v560
      %v803 = vmul.f32 %v560, %v802
      %v804 = vsub.f32 1.0, %v803
      %v805 = vmul.f32 %v802, %v804
      %v806 = vadd.f32 %v802, %v805
      %vm807 = vweird.f32 %v560
      %vm808 = vweird.f32 %v802
      %vm809 = vmor %vm807, %vm808
      %v810 = vsel %vm809, %v802, %v806
      %v811 = vand.u32 2147483647, %v560
      %vm812 = vcmp.eq.f32.partialorder %v811, 8.507059e+37
      %v813 = vand.u32 %v560, 2147483648
      %v814 = vor.u32 1.1754944e-38, %v813
      %v815 = vsel %vm812, %v814, %v810
      %v816 = vmul.f32 1.0, %v815
      %v817 = vrcp.pop %v561
      %v818 = vmul.f32 %v561, %v817
      %v819 = vsub.f32 1.0, %v818
      %v820 = vmul.f32 %v817, %v819
      %v821 = vadd.f32 %v817, %v820
      %vm822 = vweird.f32 %v561
      %vm823 = vweird.f32 %v817
      %vm824 = vmor %vm822, %vm823
      %v825 = vsel %vm824, %v817, %v821
      %v826 = vand.u32 2147483647, %v561
      %vm827 = vcmp.eq.f32.partialorder %v826, 8.507059e+37
      %v828 = vand.u32 %v561, 2147483648
      %v829 = vor.u32 1.1754944e-38, %v828
      %v830 = vsel %vm827, %v829, %v825
      %v831 = vmul.f32 1.0, %v830
      %v832 = vrcp.pop %v562
      %v833 = vmul.f32 %v562, %v832
      %v834 = vsub.f32 1.0, %v833
      %v835 = vmul.f32 %v832, %v834
      %v836 = vadd.f32 %v832, %v835
      %vm837 = vweird.f32 %v562
      %vm838 = vweird.f32 %v832
      %vm839 = vmor %vm837, %vm838
      %v840 = vsel %vm839, %v832, %v836
      %v841 = vand.u32 2147483647, %v562
      %vm842 = vcmp.eq.f32.partialorder %v841, 8.507059e+37
      %v843 = vand.u32 %v562, 2147483648
      %v844 = vor.u32 1.1754944e-38, %v843
      %v845 = vsel %vm842, %v844, %v840
      %v846 = vmul.f32 1.0, %v845
      %v847 = vrcp.pop %v563
      %v848 = vmul.f32 %v563, %v847
      %v849 = vsub.f32 1.0, %v848
      %v850 = vmul.f32 %v847, %v849
      %v851 = vadd.f32 %v847, %v850
      %vm852 = vweird.f32 %v563
      %vm853 = vweird.f32 %v847
      %vm854 = vmor %vm852, %vm853
      %v855 = vsel %vm854, %v847, %v851
      %v856 = vand.u32 2147483647, %v563
      %vm857 = vcmp.eq.f32.partialorder %v856, 8.507059e+37
      %v858 = vand.u32 %v563, 2147483648
      %v859 = vor.u32 1.1754944e-38, %v858
      %v860 = vsel %vm857, %v859, %v855
      %v861 = vmul.f32 1.0, %v860
      %v862 = vrcp.pop %v564
      %v863 = vmul.f32 %v564, %v862
      %v864 = vsub.f32 1.0, %v863
      %v865 = vmul.f32 %v862, %v864
      %v866 = vadd.f32 %v862, %v865
      %vm867 = vweird.f32 %v564
      %vm868 = vweird.f32 %v862
      %vm869 = vmor %vm867, %vm868
      %v870 = vsel %vm869, %v862, %v866
      %v871 = vand.u32 2147483647, %v564
      %vm872 = vcmp.eq.f32.partialorder %v871, 8.507059e+37
      %v873 = vand.u32 %v564, 2147483648
      %v874 = vor.u32 1.1754944e-38, %v873
      %v875 = vsel %vm872, %v874, %v870
      %v876 = vmul.f32 1.0, %v875
      %v877 = vrcp.pop %v565
      %v878 = vmul.f32 %v565, %v877
      %v879 = vsub.f32 1.0, %v878
      %v880 = vmul.f32 %v877, %v879
      %v881 = vadd.f32 %v877, %v880
      %vm882 = vweird.f32 %v565
      %vm883 = vweird.f32 %v877
      %vm884 = vmor %vm882, %vm883
      %v885 = vsel %vm884, %v877, %v881
      %v886 = vand.u32 2147483647, %v565
      %vm887 = vcmp.eq.f32.partialorder %v886, 8.507059e+37
      %v888 = vand.u32 %v565, 2147483648
      %v889 = vor.u32 1.1754944e-38, %v888
      %v890 = vsel %vm887, %v889, %v885
      %v891 = vmul.f32 1.0, %v890
      %v892 = vrcp.pop %v566
      %v893 = vmul.f32 %v566, %v892
      %v894 = vsub.f32 1.0, %v893
      %v895 = vmul.f32 %v892, %v894
      %v896 = vadd.f32 %v892, %v895
      %vm897 = vweird.f32 %v566
      %vm898 = vweird.f32 %v892
      %vm899 = vmor %vm897, %vm898
      %v900 = vsel %vm899, %v892, %v896
      %v901 = vand.u32 2147483647, %v566
      %vm902 = vcmp.eq.f32.partialorder %v901, 8.507059e+37
      %v903 = vand.u32 %v566, 2147483648
      %v904 = vor.u32 1.1754944e-38, %v903
      %v905 = vsel %vm902, %v904, %v900
      %v906 = vmul.f32 1.0, %v905
      %v907 = vrcp.pop %v567
      %v908 = vmul.f32 %v567, %v907
      %v909 = vsub.f32 1.0, %v908
      %v910 = vmul.f32 %v907, %v909
      %v911 = vadd.f32 %v907, %v910
      %vm912 = vweird.f32 %v567
      %vm913 = vweird.f32 %v907
      %vm914 = vmor %vm912, %vm913
      %v915 = vsel %vm914, %v907, %v911
      %v916 = vand.u32 2147483647, %v567
      %vm917 = vcmp.eq.f32.partialorder %v916, 8.507059e+37
      %v918 = vand.u32 %v567, 2147483648
      %v919 = vor.u32 1.1754944e-38, %v918
      %v920 = vsel %vm917, %v919, %v915
      %v921 = vmul.f32 1.0, %v920
      %v922 = vrcp.pop %v568
      %v923 = vmul.f32 %v568, %v922
      %v924 = vsub.f32 1.0, %v923
      %v925 = vmul.f32 %v922, %v924
      %v926 = vadd.f32 %v922, %v925
      %vm927 = vweird.f32 %v568
      %vm928 = vweird.f32 %v922
      %vm929 = vmor %vm927, %vm928
      %v930 = vsel %vm929, %v922, %v926
      %v931 = vand.u32 2147483647, %v568
      %vm932 = vcmp.eq.f32.partialorder %v931, 8.507059e+37
      %v933 = vand.u32 %v568, 2147483648
      %v934 = vor.u32 1.1754944e-38, %v933
      %v935 = vsel %vm932, %v934, %v930
      %v936 = vmul.f32 1.0, %v935
      %v937 = vrcp.pop %v569
      %v938 = vmul.f32 %v569, %v937
      %v939 = vsub.f32 1.0, %v938
      %v940 = vmul.f32 %v937, %v939
      %v941 = vadd.f32 %v937, %v940
      %vm942 = vweird.f32 %v569
      %vm943 = vweird.f32 %v937
      %vm944 = vmor %vm942, %vm943
      %v945 = vsel %vm944, %v937, %v941
      %v946 = vand.u32 2147483647, %v569
      %vm947 = vcmp.eq.f32.partialorder %v946, 8.507059e+37
      %v948 = vand.u32 %v569, 2147483648
      %v949 = vor.u32 1.1754944e-38, %v948
      %v950 = vsel %vm947, %v949, %v945
      %v951 = vmul.f32 1.0, %v950
      %v952 = vrcp.pop %v570
      %v953 = vmul.f32 %v570, %v952
      %v954 = vsub.f32 1.0, %v953
      %v955 = vmul.f32 %v952, %v954
      %v956 = vadd.f32 %v952, %v955
      %vm957 = vweird.f32 %v570
      %vm958 = vweird.f32 %v952
      %vm959 = vmor %vm957, %vm958
      %v960 = vsel %vm959, %v952, %v956
      %v961 = vand.u32 2147483647, %v570
      %vm962 = vcmp.eq.f32.partialorder %v961, 8.507059e+37
      %v963 = vand.u32 %v570, 2147483648
      %v964 = vor.u32 1.1754944e-38, %v963
      %v965 = vsel %vm962, %v964, %v960
      %v966 = vmul.f32 1.0, %v965
      %v967 = vrcp.pop %v571
      %v968 = vmul.f32 %v571, %v967
      %v969 = vsub.f32 1.0, %v968
      %v970 = vmul.f32 %v967, %v969
      %v971 = vadd.f32 %v967, %v970
      %vm972 = vweird.f32 %v571
      %vm973 = vweird.f32 %v967
      %vm974 = vmor %vm972, %vm973
      %v975 = vsel %vm974, %v967, %v971
      %v976 = vand.u32 2147483647, %v571
      %vm977 = vcmp.eq.f32.partialorder %v976, 8.507059e+37
      %v978 = vand.u32 %v571, 2147483648
      %v979 = vor.u32 1.1754944e-38, %v978
      %v980 = vsel %vm977, %v979, %v975
      %v981 = vmul.f32 1.0, %v980
      %v982 = vrcp.pop %v572
      %v983 = vmul.f32 %v572, %v982
      %v984 = vsub.f32 1.0, %v983
      %v985 = vmul.f32 %v982, %v984
      %v986 = vadd.f32 %v982, %v985
      %vm987 = vweird.f32 %v572
      %vm988 = vweird.f32 %v982
      %vm989 = vmor %vm987, %vm988
      %v990 = vsel %vm989, %v982, %v986
      %v991 = vand.u32 2147483647, %v572
      %vm992 = vcmp.eq.f32.partialorder %v991, 8.507059e+37
      %v993 = vand.u32 %v572, 2147483648
      %v994 = vor.u32 1.1754944e-38, %v993
      %v995 = vsel %vm992, %v994, %v990
      %v996 = vmul.f32 1.0, %v995
      %v997 = vrcp.pop %v573
      %v998 = vmul.f32 %v573, %v997
      %v999 = vsub.f32 1.0, %v998
      %v1000 = vmul.f32 %v997, %v999
      %v1001 = vadd.f32 %v997, %v1000
      %vm1002 = vweird.f32 %v573
      %vm1003 = vweird.f32 %v997
      %vm1004 = vmor %vm1002, %vm1003
      %v1005 = vsel %vm1004, %v997, %v1001
      %v1006 = vand.u32 2147483647, %v573
      %vm1007 = vcmp.eq.f32.partialorder %v1006, 8.507059e+37
      %v1008 = vand.u32 %v573, 2147483648
      %v1009 = vor.u32 1.1754944e-38, %v1008
      %v1010 = vsel %vm1007, %v1009, %v1005
      %v1011 = vmul.f32 1.0, %v1010
      %v1012 = vrcp.pop %v574
      %v1013 = vmul.f32 %v574, %v1012
      %v1014 = vsub.f32 1.0, %v1013
      %v1015 = vmul.f32 %v1012, %v1014
      %v1016 = vadd.f32 %v1012, %v1015
      %vm1017 = vweird.f32 %v574
      %vm1018 = vweird.f32 %v1012
      %vm1019 = vmor %vm1017, %vm1018
      %v1020 = vsel %vm1019, %v1012, %v1016
      %v1021 = vand.u32 2147483647, %v574
      %vm1022 = vcmp.eq.f32.partialorder %v1021, 8.507059e+37
      %v1023 = vand.u32 %v574, 2147483648
      %v1024 = vor.u32 1.1754944e-38, %v1023
      %v1025 = vsel %vm1022, %v1024, %v1020
      %v1026 = vmul.f32 1.0, %v1025
      %v1027 = vrcp.pop %v575
      %v1028 = vmul.f32 %v575, %v1027
      %v1029 = vsub.f32 1.0, %v1028
      %v1030 = vmul.f32 %v1027, %v1029
      %v1031 = vadd.f32 %v1027, %v1030
      %vm1032 = vweird.f32 %v575
      %vm1033 = vweird.f32 %v1027
      %vm1034 = vmor %vm1032, %vm1033
      %v1035 = vsel %vm1034, %v1027, %v1031
      %v1036 = vand.u32 2147483647, %v575
      %vm1037 = vcmp.eq.f32.partialorder %v1036, 8.507059e+37
      %v1038 = vand.u32 %v575, 2147483648
      %v1039 = vor.u32 1.1754944e-38, %v1038
      %v1040 = vsel %vm1037, %v1039, %v1035
      %v1041 = vmul.f32 1.0, %v1040
      %v1042 = vrcp.pop %v576
      %v1043 = vmul.f32 %v576, %v1042
      %v1044 = vsub.f32 1.0, %v1043
      %v1045 = vmul.f32 %v1042, %v1044
      %v1046 = vadd.f32 %v1042, %v1045
      %vm1047 = vweird.f32 %v576
      %vm1048 = vweird.f32 %v1042
      %vm1049 = vmor %vm1047, %vm1048
      %v1050 = vsel %vm1049, %v1042, %v1046
      %v1051 = vand.u32 2147483647, %v576
      %vm1052 = vcmp.eq.f32.partialorder %v1051, 8.507059e+37
      %v1053 = vand.u32 %v576, 2147483648
      %v1054 = vor.u32 1.1754944e-38, %v1053
      %v1055 = vsel %vm1052, %v1054, %v1050
      %v1056 = vmul.f32 1.0, %v1055
      %v1057 = vmul.f32 %v417, %v591
      %v1058 = vmul.f32 %v418, %v606
      %v1059 = vmul.f32 %v419, %v621
      %v1060 = vmul.f32 %v420, %v636
      %v1061 = vmul.f32 %v421, %v651
      %v1062 = vmul.f32 %v422, %v666
      %v1063 = vmul.f32 %v423, %v681
      %v1064 = vmul.f32 %v424, %v696
      %v1065 = vmul.f32 %v425, %v711
      %v1066 = vmul.f32 %v426, %v726
      %v1067 = vmul.f32 %v427, %v741
      %v1068 = vmul.f32 %v428, %v756
      %v1069 = vmul.f32 %v429, %v771
      %v1070 = vmul.f32 %v430, %v786
      %v1071 = vmul.f32 %v431, %v801
      %v1072 = vmul.f32 %v432, %v816
      %v1073 = vmul.f32 %v433, %v831
      %v1074 = vmul.f32 %v434, %v846
      %v1075 = vmul.f32 %v435, %v861
      %v1076 = vmul.f32 %v436, %v876
      %v1077 = vmul.f32 %v437, %v891
      %v1078 = vmul.f32 %v438, %v906
      %v1079 = vmul.f32 %v439, %v921
      %v1080 = vmul.f32 %v440, %v936
      %v1081 = vmul.f32 %v441, %v951
      %v1082 = vmul.f32 %v442, %v966
      %v1083 = vmul.f32 %v443, %v981
      %v1084 = vmul.f32 %v444, %v996
      %v1085 = vmul.f32 %v445, %v1011
      %v1086 = vmul.f32 %v446, %v1026
      %v1087 = vmul.f32 %v447, %v1041
      %v1088 = vmul.f32 %v448, %v1056
      %v1089 = vpack.c.bf16 %v1057, %v1057
      %v1090 = vpack.c.bf16 %v1058, %v1058
      %v1091 = vpack.c.bf16 %v1059, %v1059
      %v1092 = vpack.c.bf16 %v1060, %v1060
      %v1093 = vpack.c.bf16 %v1061, %v1061
      %v1094 = vpack.c.bf16 %v1062, %v1062
      %v1095 = vpack.c.bf16 %v1063, %v1063
      %v1096 = vpack.c.bf16 %v1064, %v1064
      %v1097 = vpack.c.bf16 %v1065, %v1065
      %v1098 = vpack.c.bf16 %v1066, %v1066
      %v1099 = vpack.c.bf16 %v1067, %v1067
      %v1100 = vpack.c.bf16 %v1068, %v1068
      %v1101 = vpack.c.bf16 %v1069, %v1069
      %v1102 = vpack.c.bf16 %v1070, %v1070
      %v1103 = vpack.c.bf16 %v1071, %v1071
      %v1104 = vpack.c.bf16 %v1072, %v1072
      %v1105 = vpack.c.bf16 %v1073, %v1073
      %v1106 = vpack.c.bf16 %v1074, %v1074
      %v1107 = vpack.c.bf16 %v1075, %v1075
      %v1108 = vpack.c.bf16 %v1076, %v1076
      %v1109 = vpack.c.bf16 %v1077, %v1077
      %v1110 = vpack.c.bf16 %v1078, %v1078
      %v1111 = vpack.c.bf16 %v1079, %v1079
      %v1112 = vpack.c.bf16 %v1080, %v1080
      %v1113 = vpack.c.bf16 %v1081, %v1081
      %v1114 = vpack.c.bf16 %v1082, %v1082
      %v1115 = vpack.c.bf16 %v1083, %v1083
      %v1116 = vpack.c.bf16 %v1084, %v1084
      %v1117 = vpack.c.bf16 %v1085, %v1085
      %v1118 = vpack.c.bf16 %v1086, %v1086
      %v1119 = vpack.c.bf16 %v1087, %v1087
      %v1120 = vpack.c.bf16 %v1088, %v1088
      %v1121 = vld [vmem:[%s3] sm:$0xf]
      %v1122 = vld [vmem:[%s3 + $0x4] sm:$0xf]
      %v1123 = vld [vmem:[%s3 + $0x8] sm:$0xf]
      %v1124 = vld [vmem:[%s3 + $0xc] sm:$0xf]
      %v1125 = vld [vmem:[%s3 + $0x10] sm:$0xf]
      %v1126 = vld [vmem:[%s3 + $0x14] sm:$0xf]
      %v1127 = vld [vmem:[%s3 + $0x18] sm:$0xf]
      %v1128 = vld [vmem:[%s3 + $0x1c] sm:$0xf]
      %v1129 = vld [vmem:[%s3 + $0x20] sm:$0xf]
      %v1130 = vld [vmem:[%s3 + $0x24] sm:$0xf]
      %v1131 = vld [vmem:[%s3 + $0x28] sm:$0xf]
      %v1132 = vld [vmem:[%s3 + $0x2c] sm:$0xf]
      %v1133 = vld [vmem:[%s3 + $0x30] sm:$0xf]
      %v1134 = vld [vmem:[%s3 + $0x34] sm:$0xf]
      %v1135 = vld [vmem:[%s3 + $0x38] sm:$0xf]
      %v1136 = vld [vmem:[%s3 + $0x3c] sm:$0xf]
      %s1137 = scalar_lea.vmem %s3, 64
      %v1138 = vld [vmem:[%s1137] sm:$0xf]
      %v1139 = vld [vmem:[%s1137 + $0x4] sm:$0xf]
      %v1140 = vld [vmem:[%s1137 + $0x8] sm:$0xf]
      %v1141 = vld [vmem:[%s1137 + $0xc] sm:$0xf]
      %v1142 = vld [vmem:[%s1137 + $0x10] sm:$0xf]
      %v1143 = vld [vmem:[%s1137 + $0x14] sm:$0xf]
      %v1144 = vld [vmem:[%s1137 + $0x18] sm:$0xf]
      %v1145 = vld [vmem:[%s1137 + $0x1c] sm:$0xf]
      %v1146 = vld [vmem:[%s1137 + $0x20] sm:$0xf]
      %v1147 = vld [vmem:[%s1137 + $0x24] sm:$0xf]
      %v1148 = vld [vmem:[%s1137 + $0x28] sm:$0xf]
      %v1149 = vld [vmem:[%s1137 + $0x2c] sm:$0xf]
      %v1150 = vld [vmem:[%s1137 + $0x30] sm:$0xf]
      %v1151 = vld [vmem:[%s1137 + $0x34] sm:$0xf]
      %v1152 = vld [vmem:[%s1137 + $0x38] sm:$0xf]
      %v1153 = vld [vmem:[%s1137 + $0x3c] sm:$0xf]
      %s1154 = scalar_lea.vmem %s3, 128
      %v1155 = vld [vmem:[%s1154] sm:$0xf]
      %v1156 = vld [vmem:[%s1154 + $0x4] sm:$0xf]
      %v1157 = vld [vmem:[%s1154 + $0x8] sm:$0xf]
      %v1158 = vld [vmem:[%s1154 + $0xc] sm:$0xf]
      %v1159 = vld [vmem:[%s1154 + $0x10] sm:$0xf]
      %v1160 = vld [vmem:[%s1154 + $0x14] sm:$0xf]
      %v1161 = vld [vmem:[%s1154 + $0x18] sm:$0xf]
      %v1162 = vld [vmem:[%s1154 + $0x1c] sm:$0xf]
      %v1163 = vld [vmem:[%s1154 + $0x20] sm:$0xf]
      %v1164 = vld [vmem:[%s1154 + $0x24] sm:$0xf]
      %v1165 = vld [vmem:[%s1154 + $0x28] sm:$0xf]
      %v1166 = vld [vmem:[%s1154 + $0x2c] sm:$0xf]
      %v1167 = vld [vmem:[%s1154 + $0x30] sm:$0xf]
      %v1168 = vld [vmem:[%s1154 + $0x34] sm:$0xf]
      %v1169 = vld [vmem:[%s1154 + $0x38] sm:$0xf]
      %v1170 = vld [vmem:[%s1154 + $0x3c] sm:$0xf]
      %v1171 = vld [vmem:[%s4] sm:$0x1]
      %v1204 = vunpack.c.l.b16 %v1089
      %v1205 = vunpack.c.l.b16 %v1090
      %v1206 = vunpack.c.l.b16 %v1091
      %v1207 = vunpack.c.l.b16 %v1092
      %v1208 = vunpack.c.l.b16 %v1093
      %v1209 = vunpack.c.l.b16 %v1094
      %v1210 = vunpack.c.l.b16 %v1095
      %v1211 = vunpack.c.l.b16 %v1096
      %v1212 = vunpack.c.l.b16 %v1097
      %v1213 = vunpack.c.l.b16 %v1098
      %v1214 = vunpack.c.l.b16 %v1099
      %v1215 = vunpack.c.l.b16 %v1100
      %v1216 = vunpack.c.l.b16 %v1101
      %v1217 = vunpack.c.l.b16 %v1102
      %v1218 = vunpack.c.l.b16 %v1103
      %v1219 = vunpack.c.l.b16 %v1104
      %v1220 = vunpack.c.l.b16 %v1105
      %v1221 = vunpack.c.l.b16 %v1106
      %v1222 = vunpack.c.l.b16 %v1107
      %v1223 = vunpack.c.l.b16 %v1108
      %v1224 = vunpack.c.l.b16 %v1109
      %v1225 = vunpack.c.l.b16 %v1110
      %v1226 = vunpack.c.l.b16 %v1111
      %v1227 = vunpack.c.l.b16 %v1112
      %v1228 = vunpack.c.l.b16 %v1113
      %v1229 = vunpack.c.l.b16 %v1114
      %v1230 = vunpack.c.l.b16 %v1115
      %v1231 = vunpack.c.l.b16 %v1116
      %v1232 = vunpack.c.l.b16 %v1117
      %v1233 = vunpack.c.l.b16 %v1118
      %v1234 = vunpack.c.l.b16 %v1119
      %v1235 = vunpack.c.l.b16 %v1120
      %v1236 = vpack.c.b16 %v1205, %v1204
      %v1237 = vpack.c.b16 %v1207, %v1206
      %v1238 = vpack.c.b16 %v1209, %v1208
      %v1239 = vpack.c.b16 %v1211, %v1210
      %v1240 = vpack.c.b16 %v1213, %v1212
      %v1241 = vpack.c.b16 %v1215, %v1214
      %v1242 = vpack.c.b16 %v1217, %v1216
      %v1243 = vpack.c.b16 %v1219, %v1218
      %v1244 = vpack.c.b16 %v1221, %v1220
      %v1245 = vpack.c.b16 %v1223, %v1222
      %v1246 = vpack.c.b16 %v1225, %v1224
      %v1247 = vpack.c.b16 %v1227, %v1226
      %v1248 = vpack.c.b16 %v1229, %v1228
      %v1249 = vpack.c.b16 %v1231, %v1230
      %v1250 = vpack.c.b16 %v1233, %v1232
      %v1251 = vpack.c.b16 %v1235, %v1234
      %v1284 = vunpack.c.l.b16 %v1138
      %v1285 = vunpack.c.l.b16 %v1139
      %v1286 = vunpack.c.l.b16 %v1140
      %v1287 = vunpack.c.l.b16 %v1141
      %v1288 = vunpack.c.l.b16 %v1142
      %v1289 = vunpack.c.l.b16 %v1143
      %v1290 = vunpack.c.l.b16 %v1144
      %v1291 = vunpack.c.l.b16 %v1145
      %v1292 = vunpack.c.l.b16 %v1146
      %v1293 = vunpack.c.l.b16 %v1147
      %v1294 = vunpack.c.l.b16 %v1148
      %v1295 = vunpack.c.l.b16 %v1149
      %v1296 = vunpack.c.l.b16 %v1150
      %v1297 = vunpack.c.l.b16 %v1151
      %v1298 = vunpack.c.l.b16 %v1152
      %v1299 = vunpack.c.l.b16 %v1153
      %v1300 = vpack.c.b16 %v1285, %v1284
      %v1301 = vpack.c.b16 %v1287, %v1286
      %v1302 = vpack.c.b16 %v1289, %v1288
      %v1303 = vpack.c.b16 %v1291, %v1290
      %v1304 = vpack.c.b16 %v1293, %v1292
      %v1305 = vpack.c.b16 %v1295, %v1294
      %v1306 = vpack.c.b16 %v1297, %v1296
      %v1307 = vpack.c.b16 %v1299, %v1298
      %1316 = vmatpush.bf16.msra.mxu0 %v1307
      %1317 = vmatpush.bf16.msra.mxu0 %v1306
      %1318 = vmatpush.bf16.msra.mxu0 %v1305
      %1319 = vmatpush.bf16.msra.mxu0 %v1304
      %1320 = vmatpush.bf16.msra.mxu0 %v1303
      %1321 = vmatpush.bf16.msra.mxu0 %v1302
      %1322 = vmatpush.bf16.msra.mxu0 %v1301
      %1323 = vmatpush.bf16.msra.mxu0 %v1300
      %1324 = vmatmul.bf16.gmra.mxu0 %v1236
      %v1325 = vpop.f32.mrf.mxu0
      %v1326 = vadd.f32 0.0, %v1325
      %v1327 = vpop.f32.mrf.mxu0
      %v1328 = vadd.f32 0.0, %v1327
      %1329 = vmatmul.bf16.gmra.mxu0 %v1237
      %v1330 = vpop.f32.mrf.mxu0
      %v1331 = vadd.f32 0.0, %v1330
      %v1332 = vpop.f32.mrf.mxu0
      %v1333 = vadd.f32 0.0, %v1332
      %1334 = vmatmul.bf16.gmra.mxu0 %v1238
      %v1335 = vpop.f32.mrf.mxu0
      %v1336 = vadd.f32 0.0, %v1335
      %v1337 = vpop.f32.mrf.mxu0
      %v1338 = vadd.f32 0.0, %v1337
      %1339 = vmatmul.bf16.gmra.mxu0 %v1239
      %v1340 = vpop.f32.mrf.mxu0
      %v1341 = vadd.f32 0.0, %v1340
      %v1342 = vpop.f32.mrf.mxu0
      %v1343 = vadd.f32 0.0, %v1342
      %1344 = vmatmul.bf16.gmra.mxu0 %v1240
      %v1345 = vpop.f32.mrf.mxu0
      %v1346 = vadd.f32 0.0, %v1345
      %v1347 = vpop.f32.mrf.mxu0
      %v1348 = vadd.f32 0.0, %v1347
      %1349 = vmatmul.bf16.gmra.mxu0 %v1241
      %v1350 = vpop.f32.mrf.mxu0
      %v1351 = vadd.f32 0.0, %v1350
      %v1352 = vpop.f32.mrf.mxu0
      %v1353 = vadd.f32 0.0, %v1352
      %1354 = vmatmul.bf16.gmra.mxu0 %v1242
      %v1355 = vpop.f32.mrf.mxu0
      %v1356 = vadd.f32 0.0, %v1355
      %v1357 = vpop.f32.mrf.mxu0
      %v1358 = vadd.f32 0.0, %v1357
      %1359 = vmatmul.bf16.gmra.mxu0 %v1243
      %v1360 = vpop.f32.mrf.mxu0
      %v1361 = vadd.f32 0.0, %v1360
      %v1362 = vpop.f32.mrf.mxu0
      %v1363 = vadd.f32 0.0, %v1362
      %1364 = vmatmul.bf16.gmra.mxu0 %v1244
      %v1365 = vpop.f32.mrf.mxu0
      %v1366 = vadd.f32 0.0, %v1365
      %v1367 = vpop.f32.mrf.mxu0
      %v1368 = vadd.f32 0.0, %v1367
      %1369 = vmatmul.bf16.gmra.mxu0 %v1245
      %v1370 = vpop.f32.mrf.mxu0
      %v1371 = vadd.f32 0.0, %v1370
      %v1372 = vpop.f32.mrf.mxu0
      %v1373 = vadd.f32 0.0, %v1372
      %1374 = vmatmul.bf16.gmra.mxu0 %v1246
      %v1375 = vpop.f32.mrf.mxu0
      %v1376 = vadd.f32 0.0, %v1375
      %v1377 = vpop.f32.mrf.mxu0
      %v1378 = vadd.f32 0.0, %v1377
      %1379 = vmatmul.bf16.gmra.mxu0 %v1247
      %v1380 = vpop.f32.mrf.mxu0
      %v1381 = vadd.f32 0.0, %v1380
      %v1382 = vpop.f32.mrf.mxu0
      %v1383 = vadd.f32 0.0, %v1382
      %1384 = vmatmul.bf16.gmra.mxu0 %v1248
      %v1385 = vpop.f32.mrf.mxu0
      %v1386 = vadd.f32 0.0, %v1385
      %v1387 = vpop.f32.mrf.mxu0
      %v1388 = vadd.f32 0.0, %v1387
      %1389 = vmatmul.bf16.gmra.mxu0 %v1249
      %v1390 = vpop.f32.mrf.mxu0
      %v1391 = vadd.f32 0.0, %v1390
      %v1392 = vpop.f32.mrf.mxu0
      %v1393 = vadd.f32 0.0, %v1392
      %1394 = vmatmul.bf16.gmra.mxu0 %v1250
      %v1395 = vpop.f32.mrf.mxu0
      %v1396 = vadd.f32 0.0, %v1395
      %v1397 = vpop.f32.mrf.mxu0
      %v1398 = vadd.f32 0.0, %v1397
      %1399 = vmatmul.bf16.gmra.mxu0 %v1251
      %v1400 = vpop.f32.mrf.mxu0
      %v1401 = vadd.f32 0.0, %v1400
      %v1402 = vpop.f32.mrf.mxu0
      %v1403 = vadd.f32 0.0, %v1402
      %1404 = vdwg.mxu0
      %v1406 = vperm.slane %v1171, 0
      %v1408 = vadd.f32 %v1326, %v1406
      %v1409 = vadd.f32 %v1328, %v1406
      %v1410 = vadd.f32 %v1331, %v1406
      %v1411 = vadd.f32 %v1333, %v1406
      %v1412 = vadd.f32 %v1336, %v1406
      %v1413 = vadd.f32 %v1338, %v1406
      %v1414 = vadd.f32 %v1341, %v1406
      %v1415 = vadd.f32 %v1343, %v1406
      %v1416 = vadd.f32 %v1346, %v1406
      %v1417 = vadd.f32 %v1348, %v1406
      %v1418 = vadd.f32 %v1351, %v1406
      %v1419 = vadd.f32 %v1353, %v1406
      %v1420 = vadd.f32 %v1356, %v1406
      %v1421 = vadd.f32 %v1358, %v1406
      %v1422 = vadd.f32 %v1361, %v1406
      %v1423 = vadd.f32 %v1363, %v1406
      %v1424 = vadd.f32 %v1366, %v1406
      %v1425 = vadd.f32 %v1368, %v1406
      %v1426 = vadd.f32 %v1371, %v1406
      %v1427 = vadd.f32 %v1373, %v1406
      %v1428 = vadd.f32 %v1376, %v1406
      %v1429 = vadd.f32 %v1378, %v1406
      %v1430 = vadd.f32 %v1381, %v1406
      %v1431 = vadd.f32 %v1383, %v1406
      %v1432 = vadd.f32 %v1386, %v1406
      %v1433 = vadd.f32 %v1388, %v1406
      %v1434 = vadd.f32 %v1391, %v1406
      %v1435 = vadd.f32 %v1393, %v1406
      %v1436 = vadd.f32 %v1396, %v1406
      %v1437 = vadd.f32 %v1398, %v1406
      %v1438 = vadd.f32 %v1401, %v1406
      %v1439 = vadd.f32 %v1403, %v1406
      %v1456 = vunpack.c.l.b16 %v1121
      %v1457 = vunpack.c.l.b16 %v1122
      %v1458 = vunpack.c.l.b16 %v1123
      %v1459 = vunpack.c.l.b16 %v1124
      %v1460 = vunpack.c.l.b16 %v1125
      %v1461 = vunpack.c.l.b16 %v1126
      %v1462 = vunpack.c.l.b16 %v1127
      %v1463 = vunpack.c.l.b16 %v1128
      %v1464 = vunpack.c.l.b16 %v1129
      %v1465 = vunpack.c.l.b16 %v1130
      %v1466 = vunpack.c.l.b16 %v1131
      %v1467 = vunpack.c.l.b16 %v1132
      %v1468 = vunpack.c.l.b16 %v1133
      %v1469 = vunpack.c.l.b16 %v1134
      %v1470 = vunpack.c.l.b16 %v1135
      %v1471 = vunpack.c.l.b16 %v1136
      %v1472 = vpack.c.b16 %v1457, %v1456
      %v1473 = vpack.c.b16 %v1459, %v1458
      %v1474 = vpack.c.b16 %v1461, %v1460
      %v1475 = vpack.c.b16 %v1463, %v1462
      %v1476 = vpack.c.b16 %v1465, %v1464
      %v1477 = vpack.c.b16 %v1467, %v1466
      %v1478 = vpack.c.b16 %v1469, %v1468
      %v1479 = vpack.c.b16 %v1471, %v1470
      %1488 = vmatpush.bf16.msra.mxu0 %v1479
      %1489 = vmatpush.bf16.msra.mxu0 %v1478
      %1490 = vmatpush.bf16.msra.mxu0 %v1477
      %1491 = vmatpush.bf16.msra.mxu0 %v1476
      %1492 = vmatpush.bf16.msra.mxu0 %v1475
      %1493 = vmatpush.bf16.msra.mxu0 %v1474
      %1494 = vmatpush.bf16.msra.mxu0 %v1473
      %1495 = vmatpush.bf16.msra.mxu0 %v1472
      %1496 = vmatmul.bf16.gmra.mxu0 %v1236
      %v1497 = vpop.f32.mrf.mxu0
      %v1498 = vadd.f32 0.0, %v1497
      %v1499 = vpop.f32.mrf.mxu0
      %v1500 = vadd.f32 0.0, %v1499
      %1501 = vmatmul.bf16.gmra.mxu0 %v1237
      %v1502 = vpop.f32.mrf.mxu0
      %v1503 = vadd.f32 0.0, %v1502
      %v1504 = vpop.f32.mrf.mxu0
      %v1505 = vadd.f32 0.0, %v1504
      %1506 = vmatmul.bf16.gmra.mxu0 %v1238
      %v1507 = vpop.f32.mrf.mxu0
      %v1508 = vadd.f32 0.0, %v1507
      %v1509 = vpop.f32.mrf.mxu0
      %v1510 = vadd.f32 0.0, %v1509
      %1511 = vmatmul.bf16.gmra.mxu0 %v1239
      %v1512 = vpop.f32.mrf.mxu0
      %v1513 = vadd.f32 0.0, %v1512
      %v1514 = vpop.f32.mrf.mxu0
      %v1515 = vadd.f32 0.0, %v1514
      %1516 = vmatmul.bf16.gmra.mxu0 %v1240
      %v1517 = vpop.f32.mrf.mxu0
      %v1518 = vadd.f32 0.0, %v1517
      %v1519 = vpop.f32.mrf.mxu0
      %v1520 = vadd.f32 0.0, %v1519
      %1521 = vmatmul.bf16.gmra.mxu0 %v1241
      %v1522 = vpop.f32.mrf.mxu0
      %v1523 = vadd.f32 0.0, %v1522
      %v1524 = vpop.f32.mrf.mxu0
      %v1525 = vadd.f32 0.0, %v1524
      %1526 = vmatmul.bf16.gmra.mxu0 %v1242
      %v1527 = vpop.f32.mrf.mxu0
      %v1528 = vadd.f32 0.0, %v1527
      %v1529 = vpop.f32.mrf.mxu0
      %v1530 = vadd.f32 0.0, %v1529
      %1531 = vmatmul.bf16.gmra.mxu0 %v1243
      %v1532 = vpop.f32.mrf.mxu0
      %v1533 = vadd.f32 0.0, %v1532
      %v1534 = vpop.f32.mrf.mxu0
      %v1535 = vadd.f32 0.0, %v1534
      %1536 = vmatmul.bf16.gmra.mxu0 %v1244
      %v1537 = vpop.f32.mrf.mxu0
      %v1538 = vadd.f32 0.0, %v1537
      %v1539 = vpop.f32.mrf.mxu0
      %v1540 = vadd.f32 0.0, %v1539
      %1541 = vmatmul.bf16.gmra.mxu0 %v1245
      %v1542 = vpop.f32.mrf.mxu0
      %v1543 = vadd.f32 0.0, %v1542
      %v1544 = vpop.f32.mrf.mxu0
      %v1545 = vadd.f32 0.0, %v1544
      %1546 = vmatmul.bf16.gmra.mxu0 %v1246
      %v1547 = vpop.f32.mrf.mxu0
      %v1548 = vadd.f32 0.0, %v1547
      %v1549 = vpop.f32.mrf.mxu0
      %v1550 = vadd.f32 0.0, %v1549
      %1551 = vmatmul.bf16.gmra.mxu0 %v1247
      %v1552 = vpop.f32.mrf.mxu0
      %v1553 = vadd.f32 0.0, %v1552
      %v1554 = vpop.f32.mrf.mxu0
      %v1555 = vadd.f32 0.0, %v1554
      %1556 = vdwg.mxu0
      %v1573 = vunpack.c.l.b16 %v1155
      %v1574 = vunpack.c.l.b16 %v1156
      %v1575 = vunpack.c.l.b16 %v1157
      %v1576 = vunpack.c.l.b16 %v1158
      %v1577 = vunpack.c.l.b16 %v1159
      %v1578 = vunpack.c.l.b16 %v1160
      %v1579 = vunpack.c.l.b16 %v1161
      %v1580 = vunpack.c.l.b16 %v1162
      %v1581 = vunpack.c.l.b16 %v1163
      %v1582 = vunpack.c.l.b16 %v1164
      %v1583 = vunpack.c.l.b16 %v1165
      %v1584 = vunpack.c.l.b16 %v1166
      %v1585 = vunpack.c.l.b16 %v1167
      %v1586 = vunpack.c.l.b16 %v1168
      %v1587 = vunpack.c.l.b16 %v1169
      %v1588 = vunpack.c.l.b16 %v1170
      %v1589 = vpack.c.b16 %v1574, %v1573
      %v1590 = vpack.c.b16 %v1576, %v1575
      %v1591 = vpack.c.b16 %v1578, %v1577
      %v1592 = vpack.c.b16 %v1580, %v1579
      %v1593 = vpack.c.b16 %v1582, %v1581
      %v1594 = vpack.c.b16 %v1584, %v1583
      %v1595 = vpack.c.b16 %v1586, %v1585
      %v1596 = vpack.c.b16 %v1588, %v1587
      %1605 = vmatpush.bf16.msra.mxu0 %v1596
      %1606 = vmatpush.bf16.msra.mxu0 %v1595
      %1607 = vmatpush.bf16.msra.mxu0 %v1594
      %1608 = vmatpush.bf16.msra.mxu0 %v1593
      %1609 = vmatpush.bf16.msra.mxu0 %v1592
      %1610 = vmatpush.bf16.msra.mxu0 %v1591
      %1611 = vmatpush.bf16.msra.mxu0 %v1590
      %1612 = vmatpush.bf16.msra.mxu0 %v1589
      %1613 = vmatmul.bf16.gmra.mxu0 %v1240
      %v1614 = vpop.f32.mrf.mxu0
      %v1615 = vadd.f32 0.0, %v1614
      %v1616 = vpop.f32.mrf.mxu0
      %v1617 = vadd.f32 0.0, %v1616
      %1618 = vmatmul.bf16.gmra.mxu0 %v1241
      %v1619 = vpop.f32.mrf.mxu0
      %v1620 = vadd.f32 0.0, %v1619
      %v1621 = vpop.f32.mrf.mxu0
      %v1622 = vadd.f32 0.0, %v1621
      %1623 = vmatmul.bf16.gmra.mxu0 %v1242
      %v1624 = vpop.f32.mrf.mxu0
      %v1625 = vadd.f32 0.0, %v1624
      %v1626 = vpop.f32.mrf.mxu0
      %v1627 = vadd.f32 0.0, %v1626
      %1628 = vmatmul.bf16.gmra.mxu0 %v1243
      %v1629 = vpop.f32.mrf.mxu0
      %v1630 = vadd.f32 0.0, %v1629
      %v1631 = vpop.f32.mrf.mxu0
      %v1632 = vadd.f32 0.0, %v1631
      %1633 = vmatmul.bf16.gmra.mxu0 %v1244
      %v1634 = vpop.f32.mrf.mxu0
      %v1635 = vadd.f32 0.0, %v1634
      %v1636 = vpop.f32.mrf.mxu0
      %v1637 = vadd.f32 0.0, %v1636
      %1638 = vmatmul.bf16.gmra.mxu0 %v1245
      %v1639 = vpop.f32.mrf.mxu0
      %v1640 = vadd.f32 0.0, %v1639
      %v1641 = vpop.f32.mrf.mxu0
      %v1642 = vadd.f32 0.0, %v1641
      %1643 = vmatmul.bf16.gmra.mxu0 %v1246
      %v1644 = vpop.f32.mrf.mxu0
      %v1645 = vadd.f32 0.0, %v1644
      %v1646 = vpop.f32.mrf.mxu0
      %v1647 = vadd.f32 0.0, %v1646
      %1648 = vmatmul.bf16.gmra.mxu0 %v1247
      %v1649 = vpop.f32.mrf.mxu0
      %v1650 = vadd.f32 0.0, %v1649
      %v1651 = vpop.f32.mrf.mxu0
      %v1652 = vadd.f32 0.0, %v1651
      %1653 = vmatmul.bf16.gmra.mxu0 %v1248
      %v1654 = vpop.f32.mrf.mxu0
      %v1655 = vadd.f32 0.0, %v1654
      %v1656 = vpop.f32.mrf.mxu0
      %v1657 = vadd.f32 0.0, %v1656
      %1658 = vmatmul.bf16.gmra.mxu0 %v1249
      %v1659 = vpop.f32.mrf.mxu0
      %v1660 = vadd.f32 0.0, %v1659
      %v1661 = vpop.f32.mrf.mxu0
      %v1662 = vadd.f32 0.0, %v1661
      %1663 = vmatmul.bf16.gmra.mxu0 %v1250
      %v1664 = vpop.f32.mrf.mxu0
      %v1665 = vadd.f32 0.0, %v1664
      %v1666 = vpop.f32.mrf.mxu0
      %v1667 = vadd.f32 0.0, %v1666
      %1668 = vmatmul.bf16.gmra.mxu0 %v1251
      %v1669 = vpop.f32.mrf.mxu0
      %v1670 = vadd.f32 0.0, %v1669
      %v1671 = vpop.f32.mrf.mxu0
      %v1672 = vadd.f32 0.0, %v1671
      %1673 = vdwg.mxu0
      %v1674 = vadd.f32 %v1408, 0.0
      %v1675 = vadd.f32 %v1409, 0.0
      %v1676 = vadd.f32 %v1410, 0.0
      %v1677 = vadd.f32 %v1411, 0.0
      %v1678 = vadd.f32 %v1412, 0.0
      %v1679 = vadd.f32 %v1413, 0.0
      %v1680 = vadd.f32 %v1414, 0.0
      %v1681 = vadd.f32 %v1415, 0.0
      %v1682 = vadd.f32 %v1416, %v1498
      %v1683 = vadd.f32 %v1417, %v1500
      %v1684 = vadd.f32 %v1418, %v1503
      %v1685 = vadd.f32 %v1419, %v1505
      %v1686 = vadd.f32 %v1420, %v1508
      %v1687 = vadd.f32 %v1421, %v1510
      %v1688 = vadd.f32 %v1422, %v1513
      %v1689 = vadd.f32 %v1423, %v1515
      %v1690 = vadd.f32 %v1424, %v1518
      %v1691 = vadd.f32 %v1425, %v1520
      %v1692 = vadd.f32 %v1426, %v1523
      %v1693 = vadd.f32 %v1427, %v1525
      %v1694 = vadd.f32 %v1428, %v1528
      %v1695 = vadd.f32 %v1429, %v1530
      %v1696 = vadd.f32 %v1430, %v1533
      %v1697 = vadd.f32 %v1431, %v1535
      %v1698 = vadd.f32 %v1432, %v1538
      %v1699 = vadd.f32 %v1433, %v1540
      %v1700 = vadd.f32 %v1434, %v1543
      %v1701 = vadd.f32 %v1435, %v1545
      %v1702 = vadd.f32 %v1436, %v1548
      %v1703 = vadd.f32 %v1437, %v1550
      %v1704 = vadd.f32 %v1438, %v1553
      %v1705 = vadd.f32 %v1439, %v1555
      %v1706 = vadd.f32 %v1674, %v1615
      %v1707 = vadd.f32 %v1675, %v1617
      %v1708 = vadd.f32 %v1676, %v1620
      %v1709 = vadd.f32 %v1677, %v1622
      %v1710 = vadd.f32 %v1678, %v1625
      %v1711 = vadd.f32 %v1679, %v1627
      %v1712 = vadd.f32 %v1680, %v1630
      %v1713 = vadd.f32 %v1681, %v1632
      %v1714 = vadd.f32 %v1682, %v1635
      %v1715 = vadd.f32 %v1683, %v1637
      %v1716 = vadd.f32 %v1684, %v1640
      %v1717 = vadd.f32 %v1685, %v1642
      %v1718 = vadd.f32 %v1686, %v1645
      %v1719 = vadd.f32 %v1687, %v1647
      %v1720 = vadd.f32 %v1688, %v1650
      %v1721 = vadd.f32 %v1689, %v1652
      %v1722 = vadd.f32 %v1690, %v1655
      %v1723 = vadd.f32 %v1691, %v1657
      %v1724 = vadd.f32 %v1692, %v1660
      %v1725 = vadd.f32 %v1693, %v1662
      %v1726 = vadd.f32 %v1694, %v1665
      %v1727 = vadd.f32 %v1695, %v1667
      %v1728 = vadd.f32 %v1696, %v1670
      %v1729 = vadd.f32 %v1697, %v1672
      %v1730 = vadd.f32 %v1698, 0.0
      %v1731 = vadd.f32 %v1699, 0.0
      %v1732 = vadd.f32 %v1700, 0.0
      %v1733 = vadd.f32 %v1701, 0.0
      %v1734 = vadd.f32 %v1702, 0.0
      %v1735 = vadd.f32 %v1703, 0.0
      %v1736 = vadd.f32 %v1704, 0.0
      %v1737 = vadd.f32 %v1705, 0.0
      %v1738 = vld [vmem:[%s301] sm:$0xff]
      %v1739 = vld [vmem:[%s301 + $0x8] sm:$0xff]
      %v1740 = vld [vmem:[%s301 + $0x10] sm:$0xff]
      %v1741 = vld [vmem:[%s301 + $0x18] sm:$0xff]
      %v1742 = vld [vmem:[%s301 + $0x20] sm:$0xff]
      %v1743 = vld [vmem:[%s301 + $0x28] sm:$0xff]
      %v1744 = vld [vmem:[%s301 + $0x30] sm:$0xff]
      %v1745 = vld [vmem:[%s301 + $0x38] sm:$0xff]
      %v1746 = vld [vmem:[%s301 + $0x40] sm:$0xff]
      %v1747 = vld [vmem:[%s301 + $0x48] sm:$0xff]
      %v1748 = vld [vmem:[%s301 + $0x50] sm:$0xff]
      %v1749 = vld [vmem:[%s301 + $0x58] sm:$0xff]
      %v1750 = vld [vmem:[%s301 + $0x60] sm:$0xff]
      %v1751 = vld [vmem:[%s301 + $0x68] sm:$0xff]
      %v1752 = vld [vmem:[%s301 + $0x70] sm:$0xff]
      %v1753 = vld [vmem:[%s301 + $0x78] sm:$0xff]
      %v1754 = vld [vmem:[%s301 + $0x80] sm:$0xff]
      %v1755 = vld [vmem:[%s301 + $0x88] sm:$0xff]
      %v1756 = vld [vmem:[%s301 + $0x90] sm:$0xff]
      %v1757 = vld [vmem:[%s301 + $0x98] sm:$0xff]
      %v1758 = vld [vmem:[%s301 + $0xa0] sm:$0xff]
      %v1759 = vld [vmem:[%s301 + $0xa8] sm:$0xff]
      %v1760 = vld [vmem:[%s301 + $0xb0] sm:$0xff]
      %v1761 = vld [vmem:[%s301 + $0xb8] sm:$0xff]
      %v1762 = vld [vmem:[%s301 + $0xc0] sm:$0xff]
      %v1763 = vld [vmem:[%s301 + $0xc8] sm:$0xff]
      %v1764 = vld [vmem:[%s301 + $0xd0] sm:$0xff]
      %v1765 = vld [vmem:[%s301 + $0xd8] sm:$0xff]
      %v1766 = vld [vmem:[%s301 + $0xe0] sm:$0xff]
      %v1767 = vld [vmem:[%s301 + $0xe8] sm:$0xff]
      %v1768 = vld [vmem:[%s301 + $0xf0] sm:$0xff]
      %v1769 = vld [vmem:[%s301 + $0xf8] sm:$0xff]
      %v1770 = vadd.f32 %v1738, %v1706
      %v1771 = vadd.f32 %v1739, %v1707
      %v1772 = vadd.f32 %v1740, %v1708
      %v1773 = vadd.f32 %v1741, %v1709
      %v1774 = vadd.f32 %v1742, %v1710
      %v1775 = vadd.f32 %v1743, %v1711
      %v1776 = vadd.f32 %v1744, %v1712
      %v1777 = vadd.f32 %v1745, %v1713
      %v1778 = vadd.f32 %v1746, %v1714
      %v1779 = vadd.f32 %v1747, %v1715
      %v1780 = vadd.f32 %v1748, %v1716
      %v1781 = vadd.f32 %v1749, %v1717
      %v1782 = vadd.f32 %v1750, %v1718
      %v1783 = vadd.f32 %v1751, %v1719
      %v1784 = vadd.f32 %v1752, %v1720
      %v1785 = vadd.f32 %v1753, %v1721
      %v1786 = vadd.f32 %v1754, %v1722
      %v1787 = vadd.f32 %v1755, %v1723
      %v1788 = vadd.f32 %v1756, %v1724
      %v1789 = vadd.f32 %v1757, %v1725
      %v1790 = vadd.f32 %v1758, %v1726
      %v1791 = vadd.f32 %v1759, %v1727
      %v1792 = vadd.f32 %v1760, %v1728
      %v1793 = vadd.f32 %v1761, %v1729
      %v1794 = vadd.f32 %v1762, %v1730
      %v1795 = vadd.f32 %v1763, %v1731
      %v1796 = vadd.f32 %v1764, %v1732
      %v1797 = vadd.f32 %v1765, %v1733
      %v1798 = vadd.f32 %v1766, %v1734
      %v1799 = vadd.f32 %v1767, %v1735
      %v1800 = vadd.f32 %v1768, %v1736
      %v1801 = vadd.f32 %v1769, %v1737
      %1802 = vst [vmem:[%s315] sm:$0xff] %v1770
      %1803 = vst [vmem:[%s315 + $0x8] sm:$0xff] %v1771
      %1804 = vst [vmem:[%s315 + $0x10] sm:$0xff] %v1772
      %1805 = vst [vmem:[%s315 + $0x18] sm:$0xff] %v1773
      %1806 = vst [vmem:[%s315 + $0x20] sm:$0xff] %v1774
      %1807 = vst [vmem:[%s315 + $0x28] sm:$0xff] %v1775
      %1808 = vst [vmem:[%s315 + $0x30] sm:$0xff] %v1776
      %1809 = vst [vmem:[%s315 + $0x38] sm:$0xff] %v1777
      %1810 = vst [vmem:[%s315 + $0x40] sm:$0xff] %v1778
      %1811 = vst [vmem:[%s315 + $0x48] sm:$0xff] %v1779
      %1812 = vst [vmem:[%s315 + $0x50] sm:$0xff] %v1780
      %1813 = vst [vmem:[%s315 + $0x58] sm:$0xff] %v1781
      %1814 = vst [vmem:[%s315 + $0x60] sm:$0xff] %v1782
      %1815 = vst [vmem:[%s315 + $0x68] sm:$0xff] %v1783
      %1816 = vst [vmem:[%s315 + $0x70] sm:$0xff] %v1784
      %1817 = vst [vmem:[%s315 + $0x78] sm:$0xff] %v1785
      %1818 = vst [vmem:[%s315 + $0x80] sm:$0xff] %v1786
      %1819 = vst [vmem:[%s315 + $0x88] sm:$0xff] %v1787
      %1820 = vst [vmem:[%s315 + $0x90] sm:$0xff] %v1788
      %1821 = vst [vmem:[%s315 + $0x98] sm:$0xff] %v1789
      %1822 = vst [vmem:[%s315 + $0xa0] sm:$0xff] %v1790
      %1823 = vst [vmem:[%s315 + $0xa8] sm:$0xff] %v1791
      %1824 = vst [vmem:[%s315 + $0xb0] sm:$0xff] %v1792
      %1825 = vst [vmem:[%s315 + $0xb8] sm:$0xff] %v1793
      %1826 = vst [vmem:[%s315 + $0xc0] sm:$0xff] %v1794
      %1827 = vst [vmem:[%s315 + $0xc8] sm:$0xff] %v1795
      %1828 = vst [vmem:[%s315 + $0xd0] sm:$0xff] %v1796
      %1829 = vst [vmem:[%s315 + $0xd8] sm:$0xff] %v1797
      %1830 = vst [vmem:[%s315 + $0xe0] sm:$0xff] %v1798
      %1831 = vst [vmem:[%s315 + $0xe8] sm:$0xff] %v1799
      %1832 = vst [vmem:[%s315 + $0xf0] sm:$0xff] %v1800
      %1833 = vst [vmem:[%s315 + $0xf8] sm:$0xff] %v1801
      %s1834 = smul.u32 8, %s21
      %p1835 = scmp.lt.s32.totalorder %s20, 1
      %s1836 = scalar_select %p1835, %s20, 1
      %p1837 = scmp.lt.s32.totalorder %s1834, 7
      %s1838 = scalar_select %p1837, %s1834, 7
      %s1839 = smul.addr %s1836, 32
      %s1840 = sadd.s32 %s1838, %s1839
      %s1841 = smul.addr %s1840, 8
      %s1842 = scalar_lea.vmem %s5, %s1841
      // Predicated region
      $region41: #{temporal_conv_block.7} parent=39 // pred_check
        %p1843 = pneg %p172
      $region42: #{temporal_conv_block.7} parent=39 // pred_check_branch
        %1845 = sbr.rel (%p1843) target = $region44
      $region43: #{temporal_conv_block.7} parent=39 // pred_region
        %s1846 = smul.u32 8, %s21
      $region44: #{temporal_conv_block.7} parent=39 // pred_fallthru
        _
    $region40: #{temporal_conv_block.7} parent=5 // pred_fallthru
      _
    %p1847 = scmp.le.s32.totalorder 2, %s11
    // Predicated region
    $region45: #{temporal_conv_block.7} parent=5 // pred_check
      %p1848 = pneg %p1847
    $region46: #{temporal_conv_block.7} parent=5 // pred_check_branch
      %1850 = sbr.rel (%p1848) target = $region48
    $region47: #{temporal_conv_block.7} parent=5 // pred_region
      %s1851 = ssub.s32 %s11, 2
      // Predicated region
      $region49: #{temporal_conv_block.7} parent=47 // pred_check
        %p1852 = pneg %p178
      $region50: #{temporal_conv_block.7} parent=47 // pred_check_branch
        %1854 = sbr.rel (%p1852) target = $region52
      $region51: #{temporal_conv_block.7} parent=47 // pred_region
        %s1855 = smul.u32 8, %s23
        %p1856 = scmp.lt.s32.totalorder %s22, 1
        %s1857 = scalar_select %p1856, %s22, 1
        %p1858 = scmp.lt.s32.totalorder %s1855, 7
        %s1859 = scalar_select %p1858, %s1855, 7
        %s1860 = smul.addr %s1857, 32
        %s1861 = sadd.s32 %s1859, %s1860
        %s1862 = smul.addr %s1861, 8
        %s1863 = scalar_lea.vmem %s5, %s1862
      $region52: #{temporal_conv_block.7} parent=47 // pred_fallthru
        _
    $region48: #{temporal_conv_block.7} parent=5 // pred_fallthru
      _
  $region6: #{temporal_conv_block.7} parent=0 // loop_footer
    %s15 = sadd.s32 1, %s11
  $region7: #{temporal_conv_block.7} parent=0 // loop_footer_branch
    %10 = sbr.rel target = $region3
  $region8: #{temporal_conv_block.7} parent=0 // loop_exit
    _

// kernel: temporal_conv_block.5
$region0: #{temporal_conv_block.5}
  #allocation0 [shape = 'u32[]', space=smem, size = 0x4, offset = 0x4, fixed_abs, tag = 'smem constant byte address 0x4 - core index']
  #allocation1 [shape = 'u32[72,128]{1,0:T(1,128)}', space=vmem, size = 0x9000, scoped, tag = 'internal scratch']
  %s0 = inlined_call_operand.vmem [shape: bf16[2,4,64,128], index: 0, kind: input, shape index: {}]
  %s1 = inlined_call_operand.vmem [shape: f32[2,2,128], index: 1, kind: input, shape index: {}]
  %s2 = inlined_call_operand.vmem [shape: bf16[3,128,128], index: 2, kind: input, shape index: {}]
  %s3 = inlined_call_operand.vmem [shape: f32[1,128], index: 3, kind: input, shape index: {}]
  %s4 = inlined_call_operand.vmem [shape: bf16[2,4,64,128], index: 4, kind: output, shape index: {0}]
  %s5 = inlined_call_operand.vmem [shape: f32[2,1,2,128], index: 5, kind: output, shape index: {1}]
  %6 = xla_tuple %s4, %s5
  %s7 = sld [smem:[#allocation0]]
  $region57: #{temporal_conv_block.5} parent=0
    _
  %s9 = ssub.s32 1, %s7
  %s10 = scalar_select 0, %s9, %s7
  loop: start=0, step=1, limit=4
  $region2: #{temporal_conv_block.5} parent=0 // loop_pre_header
    _
  $region3: #{temporal_conv_block.5} parent=0 // loop_header
    %s12 = sphi 0, %s16
    %p13 = scmp.ge.s32.totalorder %s12, 4
    %s19 = sphi 0, %s31
    %s20 = sphi 0, %s27
    %s21 = sphi 0, %s19
    %s22 = sphi 0, %s20
    %s23 = sphi 0, %s21
    %s24 = sphi 0, %s22
    %s36 = sphi 0, %s38
    %s39 = sphi 0, %s36
    %s40 = sphi 0, %s39
    %s56 = sphi 0, %s40
    %s62 = sphi 0, %s64
    %s65 = sphi 0, %s62
    %s66 = sphi 0, %s65
    %s82 = sphi 0, %s66
    %s86 = sphi 0, %s86
    %s88 = sphi 0, %s86
    %s89 = sphi 0, %s88
    %s103 = sphi 0, %s89
    %s107 = sphi 0, %s107
    %s109 = sphi 0, %s107
    %s110 = sphi 0, %s109
    %s124 = sphi 0, %s110
    %s132 = sphi 0, %s134
    %s135 = sphi 0, %s132
    %s136 = sphi 0, %s135
    %s152 = sphi 0, %s136
    %s160 = sphi 0, %s162
    %s163 = sphi 0, %s160
    %s164 = sphi 0, %s163
    %s180 = sphi 0, %s164
  $region4: #{temporal_conv_block.5} parent=0 // loop_header_branch
    %15 = sbr.rel (%p13) target = $region8
  $region5: #{temporal_conv_block.5} parent=0 // loop_body
    %s17 = ssub.s32 %s12, 1
    %s18 = ssub.s32 %s12, 2
    %s25 = sadd.s32 1, %s20
    %p26 = scmp.ge.s32.totalorder %s25, 1
    %s27 = scalar_select %p26, 0, %s25
    %s28 = sadd.s32 1, %s19
    %s29 = scalar_select %p26, %s28, %s19
    %p30 = scmp.ge.s32.totalorder %s29, 2
    %s31 = scalar_select %p30, 0, %s29
    %s32 = ssub.s32 %s19, %s31
    %s33 = ssub.s32 %s20, %s27
    %s34 = sor.u32 %s32, %s33
    %p35 = scmp.eq.s32.totalorder %s34, 0
    %s37 = sadd.s32 %s36, 1
    %s38 = scalar_select %p35, %s36, %s37
    %p41 = pneg %p35
    %p42 = scmp.eq.s32.totalorder %s12, 1
    %p43 = por %p41, %p42
    %p44 = scmp.ne.s32.totalorder %s36, %s39
    %p45 = scmp.eq.s32.totalorder %s12, 0
    %p46 = por %p44, %p45
    %p47 = scmp.ne.s32.totalorder %s36, %s39
    %p48 = scmp.eq.s32.totalorder %s17, 1
    %p49 = por %p47, %p48
    %p50 = scmp.ne.s32.totalorder %s39, %s40
    %p51 = scmp.eq.s32.totalorder %s17, 0
    %p52 = por %p50, %p51
    %p53 = scmp.ne.s32.totalorder %s39, %s40
    %p54 = scmp.eq.s32.totalorder %s18, 1
    %p55 = por %p53, %p54
    %p57 = scmp.ne.s32.totalorder %s40, %s56
    %p58 = scmp.eq.s32.totalorder %s18, 0
    %p59 = por %p57, %p58
    %s60 = ssub.s32 %s19, %s31
    %p61 = scmp.eq.s32.totalorder %s60, 0
    %s63 = sadd.s32 %s62, 1
    %s64 = scalar_select %p61, %s62, %s63
    %p67 = pneg %p61
    %p68 = scmp.eq.s32.totalorder %s12, 1
    %p69 = por %p67, %p68
    %p70 = scmp.ne.s32.totalorder %s62, %s65
    %p71 = scmp.eq.s32.totalorder %s12, 0
    %p72 = por %p70, %p71
    %p73 = scmp.ne.s32.totalorder %s62, %s65
    %p74 = scmp.eq.s32.totalorder %s17, 1
    %p75 = por %p73, %p74
    %p76 = scmp.ne.s32.totalorder %s65, %s66
    %p77 = scmp.eq.s32.totalorder %s17, 0
    %p78 = por %p76, %p77
    %p79 = scmp.ne.s32.totalorder %s65, %s66
    %p80 = scmp.eq.s32.totalorder %s18, 1
    %p81 = por %p79, %p80
    %p83 = scmp.ne.s32.totalorder %s66, %s82
    %p84 = scmp.eq.s32.totalorder %s18, 0
    %p85 = por %p83, %p84
    %s87 = sadd.s32 %s86, 1
    %p90 = scmp.eq.s32.totalorder %s12, 1
    %p91 = scmp.ne.s32.totalorder %s86, %s88
    %p92 = scmp.eq.s32.totalorder %s12, 0
    %p93 = por %p91, %p92
    %p94 = scmp.ne.s32.totalorder %s86, %s88
    %p95 = scmp.eq.s32.totalorder %s17, 1
    %p96 = por %p94, %p95
    %p97 = scmp.ne.s32.totalorder %s88, %s89
    %p98 = scmp.eq.s32.totalorder %s17, 0
    %p99 = por %p97, %p98
    %p100 = scmp.ne.s32.totalorder %s88, %s89
    %p101 = scmp.eq.s32.totalorder %s18, 1
    %p102 = por %p100, %p101
    %p104 = scmp.ne.s32.totalorder %s89, %s103
    %p105 = scmp.eq.s32.totalorder %s18, 0
    %p106 = por %p104, %p105
    %s108 = sadd.s32 %s107, 1
    %p111 = scmp.eq.s32.totalorder %s12, 1
    %p112 = scmp.ne.s32.totalorder %s107, %s109
    %p113 = scmp.eq.s32.totalorder %s12, 0
    %p114 = por %p112, %p113
    %p115 = scmp.ne.s32.totalorder %s107, %s109
    %p116 = scmp.eq.s32.totalorder %s17, 1
    %p117 = por %p115, %p116
    %p118 = scmp.ne.s32.totalorder %s109, %s110
    %p119 = scmp.eq.s32.totalorder %s17, 0
    %p120 = por %p118, %p119
    %p121 = scmp.ne.s32.totalorder %s109, %s110
    %p122 = scmp.eq.s32.totalorder %s18, 1
    %p123 = por %p121, %p122
    %p125 = scmp.ne.s32.totalorder %s110, %s124
    %p126 = scmp.eq.s32.totalorder %s18, 0
    %p127 = por %p125, %p126
    %s128 = ssub.s32 %s19, %s31
    %s129 = ssub.s32 %s20, %s27
    %s130 = sor.u32 %s128, %s129
    %p131 = scmp.eq.s32.totalorder %s130, 0
    %s133 = sadd.s32 %s132, 1
    %s134 = scalar_select %p131, %s132, %s133
    %p137 = pneg %p131
    %p138 = scmp.eq.s32.totalorder %s12, 1
    %p139 = por %p137, %p138
    %p140 = scmp.ne.s32.totalorder %s132, %s135
    %p141 = scmp.eq.s32.totalorder %s12, 0
    %p142 = por %p140, %p141
    %p143 = scmp.ne.s32.totalorder %s132, %s135
    %p144 = scmp.eq.s32.totalorder %s17, 1
    %p145 = por %p143, %p144
    %p146 = scmp.ne.s32.totalorder %s135, %s136
    %p147 = scmp.eq.s32.totalorder %s17, 0
    %p148 = por %p146, %p147
    %p149 = scmp.ne.s32.totalorder %s135, %s136
    %p150 = scmp.eq.s32.totalorder %s18, 1
    %p151 = por %p149, %p150
    %p153 = scmp.ne.s32.totalorder %s136, %s152
    %p154 = scmp.eq.s32.totalorder %s18, 0
    %p155 = por %p153, %p154
    %s156 = ssub.s32 %s19, %s31
    %s157 = ssub.s32 %s20, %s27
    %s158 = sor.u32 %s156, %s157
    %p159 = scmp.eq.s32.totalorder %s158, 0
    %s161 = sadd.s32 %s160, 1
    %s162 = scalar_select %p159, %s160, %s161
    %p165 = pneg %p159
    %p166 = scmp.eq.s32.totalorder %s12, 1
    %p167 = por %p165, %p166
    %p168 = scmp.ne.s32.totalorder %s160, %s163
    %p169 = scmp.eq.s32.totalorder %s12, 0
    %p170 = por %p168, %p169
    %p171 = scmp.ne.s32.totalorder %s160, %s163
    %p172 = scmp.eq.s32.totalorder %s17, 1
    %p173 = por %p171, %p172
    %p174 = scmp.ne.s32.totalorder %s163, %s164
    %p175 = scmp.eq.s32.totalorder %s17, 0
    %p176 = por %p174, %p175
    %p177 = scmp.ne.s32.totalorder %s163, %s164
    %p178 = scmp.eq.s32.totalorder %s18, 1
    %p179 = por %p177, %p178
    %p181 = scmp.ne.s32.totalorder %s164, %s180
    %p182 = scmp.eq.s32.totalorder %s18, 0
    %p183 = por %p181, %p182
    %p184 = scmp.le.s32.totalorder 1, %s12
    %p185 = scmp.lt.s32.totalorder %s12, 3
    %p186 = pnand %p184, %p185
    %p187 = pneg %p186
    // Predicated region
    $region9: #{temporal_conv_block.5} parent=5 // pred_check
      _
    $region10: #{temporal_conv_block.5} parent=5 // pred_check_branch
      %189 = sbr.rel (%p186) target = $region12
    $region11: #{temporal_conv_block.5} parent=5 // pred_region
      %s190 = ssub.s32 %s12, 1
      // Predicated region
      $region13: #{temporal_conv_block.5} parent=11 // pred_check
        %p191 = pneg %p99
      $region14: #{temporal_conv_block.5} parent=11 // pred_check_branch
        %193 = sbr.rel (%p191) target = $region16
      $region15: #{temporal_conv_block.5} parent=11 // pred_region
        _
      $region16: #{temporal_conv_block.5} parent=11 // pred_fallthru
        _
      // Predicated region
      $region17: #{temporal_conv_block.5} parent=11 // pred_check
        %p194 = pneg %p120
      $region18: #{temporal_conv_block.5} parent=11 // pred_check_branch
        %196 = sbr.rel (%p194) target = $region20
      $region19: #{temporal_conv_block.5} parent=11 // pred_region
        _
      $region20: #{temporal_conv_block.5} parent=11 // pred_fallthru
        _
    $region12: #{temporal_conv_block.5} parent=5 // pred_fallthru
      _
    %p197 = scmp.lt.s32.totalorder %s12, 2
    // Predicated region
    $region21: #{temporal_conv_block.5} parent=5 // pred_check
      %p198 = pneg %p197
    $region22: #{temporal_conv_block.5} parent=5 // pred_check_branch
      %200 = sbr.rel (%p198) target = $region24
    $region23: #{temporal_conv_block.5} parent=5 // pred_region
      // Predicated region
      $region25: #{temporal_conv_block.5} parent=23 // pred_check
        %p201 = pneg %p46
      $region26: #{temporal_conv_block.5} parent=23 // pred_check_branch
        %203 = sbr.rel (%p201) target = $region28
      $region27: #{temporal_conv_block.5} parent=23 // pred_region
        %s204 = smul.u32 8, %s20
        %p205 = scmp.lt.s32.totalorder %s19, 1
        %s206 = scalar_select %p205, %s19, 1
        %p207 = scmp.lt.s32.totalorder %s204, 7
        %s208 = scalar_select %p207, %s204, 7
        %s209 = smul.addr %s206, 32
        %s210 = sadd.s32 %s208, %s209
        %s211 = smul.addr %s210, 4
        %s212 = scalar_lea.vmem %s0, %s211
        %s213 = smul.u32 8, %s20
      $region28: #{temporal_conv_block.5} parent=23 // pred_fallthru
        _
      // Predicated region
      $region29: #{temporal_conv_block.5} parent=23 // pred_check
        %p214 = pneg %p72
      $region30: #{temporal_conv_block.5} parent=23 // pred_check_branch
        %216 = sbr.rel (%p214) target = $region32
      $region31: #{temporal_conv_block.5} parent=23 // pred_region
        %p217 = scmp.lt.s32.totalorder %s19, 1
        %s218 = scalar_select %p217, %s19, 1
        %s219 = smul.addr %s218, 2
        %s220 = scalar_lea.vmem %s1, %s219
      $region32: #{temporal_conv_block.5} parent=23 // pred_fallthru
        _
    $region24: #{temporal_conv_block.5} parent=5 // pred_fallthru
      _
    %p221 = scmp.le.s32.totalorder 1, %s12
    %p222 = scmp.lt.s32.totalorder %s12, 3
    %p223 = pnand %p221, %p222
    %p224 = pneg %p223
    // Predicated region
    $region33: #{temporal_conv_block.5} parent=5 // pred_check
      _
    $region34: #{temporal_conv_block.5} parent=5 // pred_check_branch
      %226 = sbr.rel (%p223) target = $region36
    $region35: #{temporal_conv_block.5} parent=5 // pred_region
      %s227 = ssub.s32 %s12, 1
      %s228 = smul.u32 8, %s22
      %p229 = scmp.lt.s32.totalorder %s21, 1
      %s230 = scalar_select %p229, %s21, 1
      %p231 = scmp.lt.s32.totalorder %s228, 7
      %s232 = scalar_select %p231, %s228, 7
      %s233 = smul.addr %s230, 32
      %s234 = sadd.s32 %s232, %s233
      %s235 = smul.addr %s234, 4
      %s236 = scalar_lea.vmem %s0, %s235
      %p237 = pneg %p52
      %p238 = pneg %p49
      %p239 = scmp.lt.s32.totalorder %s21, 1
      %s240 = scalar_select %p239, %s21, 1
      %s241 = smul.addr %s240, 2
      %s242 = scalar_lea.vmem %s1, %s241
      %p243 = pneg %p78
      %p244 = pneg %p75
      %p245 = pneg %p99
      %p246 = pneg %p96
      %p247 = pneg %p120
      %p248 = pneg %p117
      %p249 = pneg %p148
      %p250 = pneg %p145
      %s251 = smul.u32 8, %s22
      %p252 = scmp.lt.s32.totalorder %s21, 1
      %s253 = scalar_select %p252, %s21, 1
      %p254 = scmp.lt.s32.totalorder %s251, 7
      %s255 = scalar_select %p254, %s251, 7
      %s256 = smul.addr %s253, 32
      %s257 = sadd.s32 %s255, %s256
      %s258 = smul.addr %s257, 4
      %s259 = scalar_lea.vmem %s4, %s258
      %p260 = pneg %p176
      %p261 = pneg %p173
      %p262 = scmp.lt.s32.totalorder %s21, 1
      %s263 = scalar_select %p262, %s21, 1
      %p264 = scmp.lt.s32.totalorder %s22, 0
      %s265 = scalar_select %p264, %s22, 0
      %s266 = sadd.s32 %s265, %s263
      %s267 = smul.addr %s266, 2
      %s268 = scalar_lea.vmem %s5, %s267
      %s269 = smul.u32 8, %s22
      %p270 = scmp.lt.s32.totalorder %s21, 1
      %s271 = scalar_select %p270, %s21, 1
      %p272 = scmp.lt.s32.totalorder %s269, 7
      %s273 = scalar_select %p272, %s269, 7
      %s274 = smul.addr %s271, 32
      %s275 = sadd.s32 %s273, %s274
      %s276 = smul.addr %s275, 4
      %s277 = scalar_lea.vmem %s0, %s276
      %s278 = smul.u32 8, %s22
      %p279 = scmp.lt.s32.totalorder %s21, 1
      %s280 = scalar_select %p279, %s21, 1
      %s281 = smul.addr %s280, 2
      %s282 = scalar_lea.vmem %s1, %s281
      %s283 = smul.u32 8, %s22
      %p284 = scmp.lt.s32.totalorder %s21, 1
      %s285 = scalar_select %p284, %s21, 1
      %p286 = scmp.lt.s32.totalorder %s283, 7
      %s287 = scalar_select %p286, %s283, 7
      %s288 = smul.addr %s285, 32
      %s289 = sadd.s32 %s287, %s288
      %s290 = smul.addr %s289, 4
      %s291 = scalar_lea.vmem %s4, %s290
      %s292 = smul.u32 8, %s22
      %p293 = scmp.lt.s32.totalorder %s21, 1
      %s294 = scalar_select %p293, %s21, 1
      %p295 = scmp.lt.s32.totalorder %s22, 0
      %s296 = scalar_select %p295, %s22, 0
      %s297 = sadd.s32 %s296, %s294
      %s298 = smul.addr %s297, 2
      %s299 = scalar_lea.vmem %s5, %s298
      %v300 = vld [vmem:[%s282] sm:$0x1]
      %v301 = vld [vmem:[%s282 + $0x1] sm:$0x1]
      %v302 = vld [vmem:[%s277] sm:$0xf]
      %v303 = vld [vmem:[%s277 + $0x4] sm:$0xf]
      %v304 = vld [vmem:[%s277 + $0x8] sm:$0xf]
      %v305 = vld [vmem:[%s277 + $0xc] sm:$0xf]
      %v306 = vld [vmem:[%s277 + $0x10] sm:$0xf]
      %v307 = vld [vmem:[%s277 + $0x14] sm:$0xf]
      %v308 = vld [vmem:[%s277 + $0x18] sm:$0xf]
      %v309 = vld [vmem:[%s277 + $0x1c] sm:$0xf]
      %v310 = vld [vmem:[%s277 + $0x20] sm:$0xf]
      %v311 = vld [vmem:[%s277 + $0x24] sm:$0xf]
      %v312 = vld [vmem:[%s277 + $0x28] sm:$0xf]
      %v313 = vld [vmem:[%s277 + $0x2c] sm:$0xf]
      %v314 = vld [vmem:[%s277 + $0x30] sm:$0xf]
      %v315 = vld [vmem:[%s277 + $0x34] sm:$0xf]
      %v316 = vld [vmem:[%s277 + $0x38] sm:$0xf]
      %v317 = vld [vmem:[%s277 + $0x3c] sm:$0xf]
      %v318 = vld [vmem:[%s277 + $0x40] sm:$0xf]
      %v319 = vld [vmem:[%s277 + $0x44] sm:$0xf]
      %v320 = vld [vmem:[%s277 + $0x48] sm:$0xf]
      %v321 = vld [vmem:[%s277 + $0x4c] sm:$0xf]
      %v322 = vld [vmem:[%s277 + $0x50] sm:$0xf]
      %v323 = vld [vmem:[%s277 + $0x54] sm:$0xf]
      %v324 = vld [vmem:[%s277 + $0x58] sm:$0xf]
      %v325 = vld [vmem:[%s277 + $0x5c] sm:$0xf]
      %v326 = vld [vmem:[%s277 + $0x60] sm:$0xf]
      %v327 = vld [vmem:[%s277 + $0x64] sm:$0xf]
      %v328 = vld [vmem:[%s277 + $0x68] sm:$0xf]
      %v329 = vld [vmem:[%s277 + $0x6c] sm:$0xf]
      %v330 = vld [vmem:[%s277 + $0x70] sm:$0xf]
      %v331 = vld [vmem:[%s277 + $0x74] sm:$0xf]
      %v332 = vld [vmem:[%s277 + $0x78] sm:$0xf]
      %v333 = vld [vmem:[%s277 + $0x7c] sm:$0xf]
      %v334 = vunpack.c.l.bf16 %v302
      %v335 = vunpack.c.l.bf16 %v303
      %v336 = vunpack.c.l.bf16 %v304
      %v337 = vunpack.c.l.bf16 %v305
      %v338 = vunpack.c.l.bf16 %v306
      %v339 = vunpack.c.l.bf16 %v307
      %v340 = vunpack.c.l.bf16 %v308
      %v341 = vunpack.c.l.bf16 %v309
      %v342 = vunpack.c.l.bf16 %v310
      %v343 = vunpack.c.l.bf16 %v311
      %v344 = vunpack.c.l.bf16 %v312
      %v345 = vunpack.c.l.bf16 %v313
      %v346 = vunpack.c.l.bf16 %v314
      %v347 = vunpack.c.l.bf16 %v315
      %v348 = vunpack.c.l.bf16 %v316
      %v349 = vunpack.c.l.bf16 %v317
      %v350 = vunpack.c.l.bf16 %v318
      %v351 = vunpack.c.l.bf16 %v319
      %v352 = vunpack.c.l.bf16 %v320
      %v353 = vunpack.c.l.bf16 %v321
      %v354 = vunpack.c.l.bf16 %v322
      %v355 = vunpack.c.l.bf16 %v323
      %v356 = vunpack.c.l.bf16 %v324
      %v357 = vunpack.c.l.bf16 %v325
      %v358 = vunpack.c.l.bf16 %v326
      %v359 = vunpack.c.l.bf16 %v327
      %v360 = vunpack.c.l.bf16 %v328
      %v361 = vunpack.c.l.bf16 %v329
      %v362 = vunpack.c.l.bf16 %v330
      %v363 = vunpack.c.l.bf16 %v331
      %v364 = vunpack.c.l.bf16 %v332
      %v365 = vunpack.c.l.bf16 %v333
      %v366 = vperm.slane %v300, 0
      %v367 = vmul.f32 %v334, %v366
      %v368 = vmul.f32 %v335, %v366
      %v369 = vmul.f32 %v336, %v366
      %v370 = vmul.f32 %v337, %v366
      %v371 = vmul.f32 %v338, %v366
      %v372 = vmul.f32 %v339, %v366
      %v373 = vmul.f32 %v340, %v366
      %v374 = vmul.f32 %v341, %v366
      %v375 = vmul.f32 %v342, %v366
      %v376 = vmul.f32 %v343, %v366
      %v377 = vmul.f32 %v344, %v366
      %v378 = vmul.f32 %v345, %v366
      %v379 = vmul.f32 %v346, %v366
      %v380 = vmul.f32 %v347, %v366
      %v381 = vmul.f32 %v348, %v366
      %v382 = vmul.f32 %v349, %v366
      %v383 = vmul.f32 %v350, %v366
      %v384 = vmul.f32 %v351, %v366
      %v385 = vmul.f32 %v352, %v366
      %v386 = vmul.f32 %v353, %v366
      %v387 = vmul.f32 %v354, %v366
      %v388 = vmul.f32 %v355, %v366
      %v389 = vmul.f32 %v356, %v366
      %v390 = vmul.f32 %v357, %v366
      %v391 = vmul.f32 %v358, %v366
      %v392 = vmul.f32 %v359, %v366
      %v393 = vmul.f32 %v360, %v366
      %v394 = vmul.f32 %v361, %v366
      %v395 = vmul.f32 %v362, %v366
      %v396 = vmul.f32 %v363, %v366
      %v397 = vmul.f32 %v364, %v366
      %v398 = vmul.f32 %v365, %v366
      %v399 = vperm.slane %v301, 0
      %v400 = vadd.f32 %v367, %v399
      %v401 = vadd.f32 %v368, %v399
      %v402 = vadd.f32 %v369, %v399
      %v403 = vadd.f32 %v370, %v399
      %v404 = vadd.f32 %v371, %v399
      %v405 = vadd.f32 %v372, %v399
      %v406 = vadd.f32 %v373, %v399
      %v407 = vadd.f32 %v374, %v399
      %v408 = vadd.f32 %v375, %v399
      %v409 = vadd.f32 %v376, %v399
      %v410 = vadd.f32 %v377, %v399
      %v411 = vadd.f32 %v378, %v399
      %v412 = vadd.f32 %v379, %v399
      %v413 = vadd.f32 %v380, %v399
      %v414 = vadd.f32 %v381, %v399
      %v415 = vadd.f32 %v382, %v399
      %v416 = vadd.f32 %v383, %v399
      %v417 = vadd.f32 %v384, %v399
      %v418 = vadd.f32 %v385, %v399
      %v419 = vadd.f32 %v386, %v399
      %v420 = vadd.f32 %v387, %v399
      %v421 = vadd.f32 %v388, %v399
      %v422 = vadd.f32 %v389, %v399
      %v423 = vadd.f32 %v390, %v399
      %v424 = vadd.f32 %v391, %v399
      %v425 = vadd.f32 %v392, %v399
      %v426 = vadd.f32 %v393, %v399
      %v427 = vadd.f32 %v394, %v399
      %v428 = vadd.f32 %v395, %v399
      %v429 = vadd.f32 %v396, %v399
      %v430 = vadd.f32 %v397, %v399
      %v431 = vadd.f32 %v398, %v399
      %v432 = vxor.u32 %v400, 2147483648
      %v433 = vxor.u32 %v401, 2147483648
      %v434 = vxor.u32 %v402, 2147483648
      %v435 = vxor.u32 %v403, 2147483648
      %v436 = vxor.u32 %v404, 2147483648
      %v437 = vxor.u32 %v405, 2147483648
      %v438 = vxor.u32 %v406, 2147483648
      %v439 = vxor.u32 %v407, 2147483648
      %v440 = vxor.u32 %v408, 2147483648
      %v441 = vxor.u32 %v409, 2147483648
      %v442 = vxor.u32 %v410, 2147483648
      %v443 = vxor.u32 %v411, 2147483648
      %v444 = vxor.u32 %v412, 2147483648
      %v445 = vxor.u32 %v413, 2147483648
      %v446 = vxor.u32 %v414, 2147483648
      %v447 = vxor.u32 %v415, 2147483648
      %v448 = vxor.u32 %v416, 2147483648
      %v449 = vxor.u32 %v417, 2147483648
      %v450 = vxor.u32 %v418, 2147483648
      %v451 = vxor.u32 %v419, 2147483648
      %v452 = vxor.u32 %v420, 2147483648
      %v453 = vxor.u32 %v421, 2147483648
      %v454 = vxor.u32 %v422, 2147483648
      %v455 = vxor.u32 %v423, 2147483648
      %v456 = vxor.u32 %v424, 2147483648
      %v457 = vxor.u32 %v425, 2147483648
      %v458 = vxor.u32 %v426, 2147483648
      %v459 = vxor.u32 %v427, 2147483648
      %v460 = vxor.u32 %v428, 2147483648
      %v461 = vxor.u32 %v429, 2147483648
      %v462 = vxor.u32 %v430, 2147483648
      %v463 = vxor.u32 %v431, 2147483648
      %v464 = vmul.f32 %v432, 1.442695
      %v465 = vpow.pop %v464
      %v466 = vmul.f32 %v433, 1.442695
      %v467 = vpow.pop %v466
      %v468 = vmul.f32 %v434, 1.442695
      %v469 = vpow.pop %v468
      %v470 = vmul.f32 %v435, 1.442695
      %v471 = vpow.pop %v470
      %v472 = vmul.f32 %v436, 1.442695
      %v473 = vpow.pop %v472
      %v474 = vmul.f32 %v437, 1.442695
      %v475 = vpow.pop %v474
      %v476 = vmul.f32 %v438, 1.442695
      %v477 = vpow.pop %v476
      %v478 = vmul.f32 %v439, 1.442695
      %v479 = vpow.pop %v478
      %v480 = vmul.f32 %v440, 1.442695
      %v481 = vpow.pop %v480
      %v482 = vmul.f32 %v441, 1.442695
      %v483 = vpow.pop %v482
      %v484 = vmul.f32 %v442, 1.442695
      %v485 = vpow.pop %v484
      %v486 = vmul.f32 %v443, 1.442695
      %v487 = vpow.pop %v486
      %v488 = vmul.f32 %v444, 1.442695
      %v489 = vpow.pop %v488
      %v490 = vmul.f32 %v445, 1.442695
      %v491 = vpow.pop %v490
      %v492 = vmul.f32 %v446, 1.442695
      %v493 = vpow.pop %v492
      %v494 = vmul.f32 %v447, 1.442695
      %v495 = vpow.pop %v494
      %v496 = vmul.f32 %v448, 1.442695
      %v497 = vpow.pop %v496
      %v498 = vmul.f32 %v449, 1.442695
      %v499 = vpow.pop %v498
      %v500 = vmul.f32 %v450, 1.442695
      %v501 = vpow.pop %v500
      %v502 = vmul.f32 %v451, 1.442695
      %v503 = vpow.pop %v502
      %v504 = vmul.f32 %v452, 1.442695
      %v505 = vpow.pop %v504
      %v506 = vmul.f32 %v453, 1.442695
      %v507 = vpow.pop %v506
      %v508 = vmul.f32 %v454, 1.442695
      %v509 = vpow.pop %v508
      %v510 = vmul.f32 %v455, 1.442695
      %v511 = vpow.pop %v510
      %v512 = vmul.f32 %v456, 1.442695
      %v513 = vpow.pop %v512
      %v514 = vmul.f32 %v457, 1.442695
      %v515 = vpow.pop %v514
      %v516 = vmul.f32 %v458, 1.442695
      %v517 = vpow.pop %v516
      %v518 = vmul.f32 %v459, 1.442695
      %v519 = vpow.pop %v518
      %v520 = vmul.f32 %v460, 1.442695
      %v521 = vpow.pop %v520
      %v522 = vmul.f32 %v461, 1.442695
      %v523 = vpow.pop %v522
      %v524 = vmul.f32 %v462, 1.442695
      %v525 = vpow.pop %v524
      %v526 = vmul.f32 %v463, 1.442695
      %v527 = vpow.pop %v526
      %v528 = vadd.f32 %v465, 1.0
      %v529 = vadd.f32 %v467, 1.0
      %v530 = vadd.f32 %v469, 1.0
      %v531 = vadd.f32 %v471, 1.0
      %v532 = vadd.f32 %v473, 1.0
      %v533 = vadd.f32 %v475, 1.0
      %v534 = vadd.f32 %v477, 1.0
      %v535 = vadd.f32 %v479, 1.0
      %v536 = vadd.f32 %v481, 1.0
      %v537 = vadd.f32 %v483, 1.0
      %v538 = vadd.f32 %v485, 1.0
      %v539 = vadd.f32 %v487, 1.0
      %v540 = vadd.f32 %v489, 1.0
      %v541 = vadd.f32 %v491, 1.0
      %v542 = vadd.f32 %v493, 1.0
      %v543 = vadd.f32 %v495, 1.0
      %v544 = vadd.f32 %v497, 1.0
      %v545 = vadd.f32 %v499, 1.0
      %v546 = vadd.f32 %v501, 1.0
      %v547 = vadd.f32 %v503, 1.0
      %v548 = vadd.f32 %v505, 1.0
      %v549 = vadd.f32 %v507, 1.0
      %v550 = vadd.f32 %v509, 1.0
      %v551 = vadd.f32 %v511, 1.0
      %v552 = vadd.f32 %v513, 1.0
      %v553 = vadd.f32 %v515, 1.0
      %v554 = vadd.f32 %v517, 1.0
      %v555 = vadd.f32 %v519, 1.0
      %v556 = vadd.f32 %v521, 1.0
      %v557 = vadd.f32 %v523, 1.0
      %v558 = vadd.f32 %v525, 1.0
      %v559 = vadd.f32 %v527, 1.0
      %v560 = vrcp.pop %v528
      %v561 = vmul.f32 %v528, %v560
      %v562 = vsub.f32 1.0, %v561
      %v563 = vmul.f32 %v560, %v562
      %v564 = vadd.f32 %v560, %v563
      %vm565 = vweird.f32 %v528
      %vm566 = vweird.f32 %v560
      %vm567 = vmor %vm565, %vm566
      %v568 = vsel %vm567, %v560, %v564
      %v569 = vand.u32 2147483647, %v528
      %vm570 = vcmp.eq.f32.partialorder %v569, 8.507059e+37
      %v571 = vand.u32 %v528, 2147483648
      %v572 = vor.u32 1.1754944e-38, %v571
      %v573 = vsel %vm570, %v572, %v568
      %v574 = vmul.f32 1.0, %v573
      %v575 = vrcp.pop %v529
      %v576 = vmul.f32 %v529, %v575
      %v577 = vsub.f32 1.0, %v576
      %v578 = vmul.f32 %v575, %v577
      %v579 = vadd.f32 %v575, %v578
      %vm580 = vweird.f32 %v529
      %vm581 = vweird.f32 %v575
      %vm582 = vmor %vm580, %vm581
      %v583 = vsel %vm582, %v575, %v579
      %v584 = vand.u32 2147483647, %v529
      %vm585 = vcmp.eq.f32.partialorder %v584, 8.507059e+37
      %v586 = vand.u32 %v529, 2147483648
      %v587 = vor.u32 1.1754944e-38, %v586
      %v588 = vsel %vm585, %v587, %v583
      %v589 = vmul.f32 1.0, %v588
      %v590 = vrcp.pop %v530
      %v591 = vmul.f32 %v530, %v590
      %v592 = vsub.f32 1.0, %v591
      %v593 = vmul.f32 %v590, %v592
      %v594 = vadd.f32 %v590, %v593
      %vm595 = vweird.f32 %v530
      %vm596 = vweird.f32 %v590
      %vm597 = vmor %vm595, %vm596
      %v598 = vsel %vm597, %v590, %v594
      %v599 = vand.u32 2147483647, %v530
      %vm600 = vcmp.eq.f32.partialorder %v599, 8.507059e+37
      %v601 = vand.u32 %v530, 2147483648
      %v602 = vor.u32 1.1754944e-38, %v601
      %v603 = vsel %vm600, %v602, %v598
      %v604 = vmul.f32 1.0, %v603
      %v605 = vrcp.pop %v531
      %v606 = vmul.f32 %v531, %v605
      %v607 = vsub.f32 1.0, %v606
      %v608 = vmul.f32 %v605, %v607
      %v609 = vadd.f32 %v605, %v608
      %vm610 = vweird.f32 %v531
      %vm611 = vweird.f32 %v605
      %vm612 = vmor %vm610, %vm611
      %v613 = vsel %vm612, %v605, %v609
      %v614 = vand.u32 2147483647, %v531
      %vm615 = vcmp.eq.f32.partialorder %v614, 8.507059e+37
      %v616 = vand.u32 %v531, 2147483648
      %v617 = vor.u32 1.1754944e-38, %v616
      %v618 = vsel %vm615, %v617, %v613
      %v619 = vmul.f32 1.0, %v618
      %v620 = vrcp.pop %v532
      %v621 = vmul.f32 %v532, %v620
      %v622 = vsub.f32 1.0, %v621
      %v623 = vmul.f32 %v620, %v622
      %v624 = vadd.f32 %v620, %v623
      %vm625 = vweird.f32 %v532
      %vm626 = vweird.f32 %v620
      %vm627 = vmor %vm625, %vm626
      %v628 = vsel %vm627, %v620, %v624
      %v629 = vand.u32 2147483647, %v532
      %vm630 = vcmp.eq.f32.partialorder %v629, 8.507059e+37
      %v631 = vand.u32 %v532, 2147483648
      %v632 = vor.u32 1.1754944e-38, %v631
      %v633 = vsel %vm630, %v632, %v628
      %v634 = vmul.f32 1.0, %v633
      %v635 = vrcp.pop %v533
      %v636 = vmul.f32 %v533, %v635
      %v637 = vsub.f32 1.0, %v636
      %v638 = vmul.f32 %v635, %v637
      %v639 = vadd.f32 %v635, %v638
      %vm640 = vweird.f32 %v533
      %vm641 = vweird.f32 %v635
      %vm642 = vmor %vm640, %vm641
      %v643 = vsel %vm642, %v635, %v639
      %v644 = vand.u32 2147483647, %v533
      %vm645 = vcmp.eq.f32.partialorder %v644, 8.507059e+37
      %v646 = vand.u32 %v533, 2147483648
      %v647 = vor.u32 1.1754944e-38, %v646
      %v648 = vsel %vm645, %v647, %v643
      %v649 = vmul.f32 1.0, %v648
      %v650 = vrcp.pop %v534
      %v651 = vmul.f32 %v534, %v650
      %v652 = vsub.f32 1.0, %v651
      %v653 = vmul.f32 %v650, %v652
      %v654 = vadd.f32 %v650, %v653
      %vm655 = vweird.f32 %v534
      %vm656 = vweird.f32 %v650
      %vm657 = vmor %vm655, %vm656
      %v658 = vsel %vm657, %v650, %v654
      %v659 = vand.u32 2147483647, %v534
      %vm660 = vcmp.eq.f32.partialorder %v659, 8.507059e+37
      %v661 = vand.u32 %v534, 2147483648
      %v662 = vor.u32 1.1754944e-38, %v661
      %v663 = vsel %vm660, %v662, %v658
      %v664 = vmul.f32 1.0, %v663
      %v665 = vrcp.pop %v535
      %v666 = vmul.f32 %v535, %v665
      %v667 = vsub.f32 1.0, %v666
      %v668 = vmul.f32 %v665, %v667
      %v669 = vadd.f32 %v665, %v668
      %vm670 = vweird.f32 %v535
      %vm671 = vweird.f32 %v665
      %vm672 = vmor %vm670, %vm671
      %v673 = vsel %vm672, %v665, %v669
      %v674 = vand.u32 2147483647, %v535
      %vm675 = vcmp.eq.f32.partialorder %v674, 8.507059e+37
      %v676 = vand.u32 %v535, 2147483648
      %v677 = vor.u32 1.1754944e-38, %v676
      %v678 = vsel %vm675, %v677, %v673
      %v679 = vmul.f32 1.0, %v678
      %v680 = vrcp.pop %v536
      %v681 = vmul.f32 %v536, %v680
      %v682 = vsub.f32 1.0, %v681
      %v683 = vmul.f32 %v680, %v682
      %v684 = vadd.f32 %v680, %v683
      %vm685 = vweird.f32 %v536
      %vm686 = vweird.f32 %v680
      %vm687 = vmor %vm685, %vm686
      %v688 = vsel %vm687, %v680, %v684
      %v689 = vand.u32 2147483647, %v536
      %vm690 = vcmp.eq.f32.partialorder %v689, 8.507059e+37
      %v691 = vand.u32 %v536, 2147483648
      %v692 = vor.u32 1.1754944e-38, %v691
      %v693 = vsel %vm690, %v692, %v688
      %v694 = vmul.f32 1.0, %v693
      %v695 = vrcp.pop %v537
      %v696 = vmul.f32 %v537, %v695
      %v697 = vsub.f32 1.0, %v696
      %v698 = vmul.f32 %v695, %v697
      %v699 = vadd.f32 %v695, %v698
      %vm700 = vweird.f32 %v537
      %vm701 = vweird.f32 %v695
      %vm702 = vmor %vm700, %vm701
      %v703 = vsel %vm702, %v695, %v699
      %v704 = vand.u32 2147483647, %v537
      %vm705 = vcmp.eq.f32.partialorder %v704, 8.507059e+37
      %v706 = vand.u32 %v537, 2147483648
      %v707 = vor.u32 1.1754944e-38, %v706
      %v708 = vsel %vm705, %v707, %v703
      %v709 = vmul.f32 1.0, %v708
      %v710 = vrcp.pop %v538
      %v711 = vmul.f32 %v538, %v710
      %v712 = vsub.f32 1.0, %v711
      %v713 = vmul.f32 %v710, %v712
      %v714 = vadd.f32 %v710, %v713
      %vm715 = vweird.f32 %v538
      %vm716 = vweird.f32 %v710
      %vm717 = vmor %vm715, %vm716
      %v718 = vsel %vm717, %v710, %v714
      %v719 = vand.u32 2147483647, %v538
      %vm720 = vcmp.eq.f32.partialorder %v719, 8.507059e+37
      %v721 = vand.u32 %v538, 2147483648
      %v722 = vor.u32 1.1754944e-38, %v721
      %v723 = vsel %vm720, %v722, %v718
      %v724 = vmul.f32 1.0, %v723
      %v725 = vrcp.pop %v539
      %v726 = vmul.f32 %v539, %v725
      %v727 = vsub.f32 1.0, %v726
      %v728 = vmul.f32 %v725, %v727
      %v729 = vadd.f32 %v725, %v728
      %vm730 = vweird.f32 %v539
      %vm731 = vweird.f32 %v725
      %vm732 = vmor %vm730, %vm731
      %v733 = vsel %vm732, %v725, %v729
      %v734 = vand.u32 2147483647, %v539
      %vm735 = vcmp.eq.f32.partialorder %v734, 8.507059e+37
      %v736 = vand.u32 %v539, 2147483648
      %v737 = vor.u32 1.1754944e-38, %v736
      %v738 = vsel %vm735, %v737, %v733
      %v739 = vmul.f32 1.0, %v738
      %v740 = vrcp.pop %v540
      %v741 = vmul.f32 %v540, %v740
      %v742 = vsub.f32 1.0, %v741
      %v743 = vmul.f32 %v740, %v742
      %v744 = vadd.f32 %v740, %v743
      %vm745 = vweird.f32 %v540
      %vm746 = vweird.f32 %v740
      %vm747 = vmor %vm745, %vm746
      %v748 = vsel %vm747, %v740, %v744
      %v749 = vand.u32 2147483647, %v540
      %vm750 = vcmp.eq.f32.partialorder %v749, 8.507059e+37
      %v751 = vand.u32 %v540, 2147483648
      %v752 = vor.u32 1.1754944e-38, %v751
      %v753 = vsel %vm750, %v752, %v748
      %v754 = vmul.f32 1.0, %v753
      %v755 = vrcp.pop %v541
      %v756 = vmul.f32 %v541, %v755
      %v757 = vsub.f32 1.0, %v756
      %v758 = vmul.f32 %v755, %v757
      %v759 = vadd.f32 %v755, %v758
      %vm760 = vweird.f32 %v541
      %vm761 = vweird.f32 %v755
      %vm762 = vmor %vm760, %vm761
      %v763 = vsel %vm762, %v755, %v759
      %v764 = vand.u32 2147483647, %v541
      %vm765 = vcmp.eq.f32.partialorder %v764, 8.507059e+37
      %v766 = vand.u32 %v541, 2147483648
      %v767 = vor.u32 1.1754944e-38, %v766
      %v768 = vsel %vm765, %v767, %v763
      %v769 = vmul.f32 1.0, %v768
      %v770 = vrcp.pop %v542
      %v771 = vmul.f32 %v542, %v770
      %v772 = vsub.f32 1.0, %v771
      %v773 = vmul.f32 %v770, %v772
      %v774 = vadd.f32 %v770, %v773
      %vm775 = vweird.f32 %v542
      %vm776 = vweird.f32 %v770
      %vm777 = vmor %vm775, %vm776
      %v778 = vsel %vm777, %v770, %v774
      %v779 = vand.u32 2147483647, %v542
      %vm780 = vcmp.eq.f32.partialorder %v779, 8.507059e+37
      %v781 = vand.u32 %v542, 2147483648
      %v782 = vor.u32 1.1754944e-38, %v781
      %v783 = vsel %vm780, %v782, %v778
      %v784 = vmul.f32 1.0, %v783
      %v785 = vrcp.pop %v543
      %v786 = vmul.f32 %v543, %v785
      %v787 = vsub.f32 1.0, %v786
      %v788 = vmul.f32 %v785, %v787
      %v789 = vadd.f32 %v785, %v788
      %vm790 = vweird.f32 %v543
      %vm791 = vweird.f32 %v785
      %vm792 = vmor %vm790, %vm791
      %v793 = vsel %vm792, %v785, %v789
      %v794 = vand.u32 2147483647, %v543
      %vm795 = vcmp.eq.f32.partialorder %v794, 8.507059e+37
      %v796 = vand.u32 %v543, 2147483648
      %v797 = vor.u32 1.1754944e-38, %v796
      %v798 = vsel %vm795, %v797, %v793
      %v799 = vmul.f32 1.0, %v798
      %v800 = vrcp.pop %v544
      %v801 = vmul.f32 %v544, %v800
      %v802 = vsub.f32 1.0, %v801
      %v803 = vmul.f32 %v800, %v802
      %v804 = vadd.f32 %v800, %v803
      %vm805 = vweird.f32 %v544
      %vm806 = vweird.f32 %v800
      %vm807 = vmor %vm805, %vm806
      %v808 = vsel %vm807, %v800, %v804
      %v809 = vand.u32 2147483647, %v544
      %vm810 = vcmp.eq.f32.partialorder %v809, 8.507059e+37
      %v811 = vand.u32 %v544, 2147483648
      %v812 = vor.u32 1.1754944e-38, %v811
      %v813 = vsel %vm810, %v812, %v808
      %v814 = vmul.f32 1.0, %v813
      %v815 = vrcp.pop %v545
      %v816 = vmul.f32 %v545, %v815
      %v817 = vsub.f32 1.0, %v816
      %v818 = vmul.f32 %v815, %v817
      %v819 = vadd.f32 %v815, %v818
      %vm820 = vweird.f32 %v545
      %vm821 = vweird.f32 %v815
      %vm822 = vmor %vm820, %vm821
      %v823 = vsel %vm822, %v815, %v819
      %v824 = vand.u32 2147483647, %v545
      %vm825 = vcmp.eq.f32.partialorder %v824, 8.507059e+37
      %v826 = vand.u32 %v545, 2147483648
      %v827 = vor.u32 1.1754944e-38, %v826
      %v828 = vsel %vm825, %v827, %v823
      %v829 = vmul.f32 1.0, %v828
      %v830 = vrcp.pop %v546
      %v831 = vmul.f32 %v546, %v830
      %v832 = vsub.f32 1.0, %v831
      %v833 = vmul.f32 %v830, %v832
      %v834 = vadd.f32 %v830, %v833
      %vm835 = vweird.f32 %v546
      %vm836 = vweird.f32 %v830
      %vm837 = vmor %vm835, %vm836
      %v838 = vsel %vm837, %v830, %v834
      %v839 = vand.u32 2147483647, %v546
      %vm840 = vcmp.eq.f32.partialorder %v839, 8.507059e+37
      %v841 = vand.u32 %v546, 2147483648
      %v842 = vor.u32 1.1754944e-38, %v841
      %v843 = vsel %vm840, %v842, %v838
      %v844 = vmul.f32 1.0, %v843
      %v845 = vrcp.pop %v547
      %v846 = vmul.f32 %v547, %v845
      %v847 = vsub.f32 1.0, %v846
      %v848 = vmul.f32 %v845, %v847
      %v849 = vadd.f32 %v845, %v848
      %vm850 = vweird.f32 %v547
      %vm851 = vweird.f32 %v845
      %vm852 = vmor %vm850, %vm851
      %v853 = vsel %vm852, %v845, %v849
      %v854 = vand.u32 2147483647, %v547
      %vm855 = vcmp.eq.f32.partialorder %v854, 8.507059e+37
      %v856 = vand.u32 %v547, 2147483648
      %v857 = vor.u32 1.1754944e-38, %v856
      %v858 = vsel %vm855, %v857, %v853
      %v859 = vmul.f32 1.0, %v858
      %v860 = vrcp.pop %v548
      %v861 = vmul.f32 %v548, %v860
      %v862 = vsub.f32 1.0, %v861
      %v863 = vmul.f32 %v860, %v862
      %v864 = vadd.f32 %v860, %v863
      %vm865 = vweird.f32 %v548
      %vm866 = vweird.f32 %v860
      %vm867 = vmor %vm865, %vm866
      %v868 = vsel %vm867, %v860, %v864
      %v869 = vand.u32 2147483647, %v548
      %vm870 = vcmp.eq.f32.partialorder %v869, 8.507059e+37
      %v871 = vand.u32 %v548, 2147483648
      %v872 = vor.u32 1.1754944e-38, %v871
      %v873 = vsel %vm870, %v872, %v868
      %v874 = vmul.f32 1.0, %v873
      %v875 = vrcp.pop %v549
      %v876 = vmul.f32 %v549, %v875
      %v877 = vsub.f32 1.0, %v876
      %v878 = vmul.f32 %v875, %v877
      %v879 = vadd.f32 %v875, %v878
      %vm880 = vweird.f32 %v549
      %vm881 = vweird.f32 %v875
      %vm882 = vmor %vm880, %vm881
      %v883 = vsel %vm882, %v875, %v879
      %v884 = vand.u32 2147483647, %v549
      %vm885 = vcmp.eq.f32.partialorder %v884, 8.507059e+37
      %v886 = vand.u32 %v549, 2147483648
      %v887 = vor.u32 1.1754944e-38, %v886
      %v888 = vsel %vm885, %v887, %v883
      %v889 = vmul.f32 1.0, %v888
      %v890 = vrcp.pop %v550
      %v891 = vmul.f32 %v550, %v890
      %v892 = vsub.f32 1.0, %v891
      %v893 = vmul.f32 %v890, %v892
      %v894 = vadd.f32 %v890, %v893
      %vm895 = vweird.f32 %v550
      %vm896 = vweird.f32 %v890
      %vm897 = vmor %vm895, %vm896
      %v898 = vsel %vm897, %v890, %v894
      %v899 = vand.u32 2147483647, %v550
      %vm900 = vcmp.eq.f32.partialorder %v899, 8.507059e+37
      %v901 = vand.u32 %v550, 2147483648
      %v902 = vor.u32 1.1754944e-38, %v901
      %v903 = vsel %vm900, %v902, %v898
      %v904 = vmul.f32 1.0, %v903
      %v905 = vrcp.pop %v551
      %v906 = vmul.f32 %v551, %v905
      %v907 = vsub.f32 1.0, %v906
      %v908 = vmul.f32 %v905, %v907
      %v909 = vadd.f32 %v905, %v908
      %vm910 = vweird.f32 %v551
      %vm911 = vweird.f32 %v905
      %vm912 = vmor %vm910, %vm911
      %v913 = vsel %vm912, %v905, %v909
      %v914 = vand.u32 2147483647, %v551
      %vm915 = vcmp.eq.f32.partialorder %v914, 8.507059e+37
      %v916 = vand.u32 %v551, 2147483648
      %v917 = vor.u32 1.1754944e-38, %v916
      %v918 = vsel %vm915, %v917, %v913
      %v919 = vmul.f32 1.0, %v918
      %v920 = vrcp.pop %v552
      %v921 = vmul.f32 %v552, %v920
      %v922 = vsub.f32 1.0, %v921
      %v923 = vmul.f32 %v920, %v922
      %v924 = vadd.f32 %v920, %v923
      %vm925 = vweird.f32 %v552
      %vm926 = vweird.f32 %v920
      %vm927 = vmor %vm925, %vm926
      %v928 = vsel %vm927, %v920, %v924
      %v929 = vand.u32 2147483647, %v552
      %vm930 = vcmp.eq.f32.partialorder %v929, 8.507059e+37
      %v931 = vand.u32 %v552, 2147483648
      %v932 = vor.u32 1.1754944e-38, %v931
      %v933 = vsel %vm930, %v932, %v928
      %v934 = vmul.f32 1.0, %v933
      %v935 = vrcp.pop %v553
      %v936 = vmul.f32 %v553, %v935
      %v937 = vsub.f32 1.0, %v936
      %v938 = vmul.f32 %v935, %v937
      %v939 = vadd.f32 %v935, %v938
      %vm940 = vweird.f32 %v553
      %vm941 = vweird.f32 %v935
      %vm942 = vmor %vm940, %vm941
      %v943 = vsel %vm942, %v935, %v939
      %v944 = vand.u32 2147483647, %v553
      %vm945 = vcmp.eq.f32.partialorder %v944, 8.507059e+37
      %v946 = vand.u32 %v553, 2147483648
      %v947 = vor.u32 1.1754944e-38, %v946
      %v948 = vsel %vm945, %v947, %v943
      %v949 = vmul.f32 1.0, %v948
      %v950 = vrcp.pop %v554
      %v951 = vmul.f32 %v554, %v950
      %v952 = vsub.f32 1.0, %v951
      %v953 = vmul.f32 %v950, %v952
      %v954 = vadd.f32 %v950, %v953
      %vm955 = vweird.f32 %v554
      %vm956 = vweird.f32 %v950
      %vm957 = vmor %vm955, %vm956
      %v958 = vsel %vm957, %v950, %v954
      %v959 = vand.u32 2147483647, %v554
      %vm960 = vcmp.eq.f32.partialorder %v959, 8.507059e+37
      %v961 = vand.u32 %v554, 2147483648
      %v962 = vor.u32 1.1754944e-38, %v961
      %v963 = vsel %vm960, %v962, %v958
      %v964 = vmul.f32 1.0, %v963
      %v965 = vrcp.pop %v555
      %v966 = vmul.f32 %v555, %v965
      %v967 = vsub.f32 1.0, %v966
      %v968 = vmul.f32 %v965, %v967
      %v969 = vadd.f32 %v965, %v968
      %vm970 = vweird.f32 %v555
      %vm971 = vweird.f32 %v965
      %vm972 = vmor %vm970, %vm971
      %v973 = vsel %vm972, %v965, %v969
      %v974 = vand.u32 2147483647, %v555
      %vm975 = vcmp.eq.f32.partialorder %v974, 8.507059e+37
      %v976 = vand.u32 %v555, 2147483648
      %v977 = vor.u32 1.1754944e-38, %v976
      %v978 = vsel %vm975, %v977, %v973
      %v979 = vmul.f32 1.0, %v978
      %v980 = vrcp.pop %v556
      %v981 = vmul.f32 %v556, %v980
      %v982 = vsub.f32 1.0, %v981
      %v983 = vmul.f32 %v980, %v982
      %v984 = vadd.f32 %v980, %v983
      %vm985 = vweird.f32 %v556
      %vm986 = vweird.f32 %v980
      %vm987 = vmor %vm985, %vm986
      %v988 = vsel %vm987, %v980, %v984
      %v989 = vand.u32 2147483647, %v556
      %vm990 = vcmp.eq.f32.partialorder %v989, 8.507059e+37
      %v991 = vand.u32 %v556, 2147483648
      %v992 = vor.u32 1.1754944e-38, %v991
      %v993 = vsel %vm990, %v992, %v988
      %v994 = vmul.f32 1.0, %v993
      %v995 = vrcp.pop %v557
      %v996 = vmul.f32 %v557, %v995
      %v997 = vsub.f32 1.0, %v996
      %v998 = vmul.f32 %v995, %v997
      %v999 = vadd.f32 %v995, %v998
      %vm1000 = vweird.f32 %v557
      %vm1001 = vweird.f32 %v995
      %vm1002 = vmor %vm1000, %vm1001
      %v1003 = vsel %vm1002, %v995, %v999
      %v1004 = vand.u32 2147483647, %v557
      %vm1005 = vcmp.eq.f32.partialorder %v1004, 8.507059e+37
      %v1006 = vand.u32 %v557, 2147483648
      %v1007 = vor.u32 1.1754944e-38, %v1006
      %v1008 = vsel %vm1005, %v1007, %v1003
      %v1009 = vmul.f32 1.0, %v1008
      %v1010 = vrcp.pop %v558
      %v1011 = vmul.f32 %v558, %v1010
      %v1012 = vsub.f32 1.0, %v1011
      %v1013 = vmul.f32 %v1010, %v1012
      %v1014 = vadd.f32 %v1010, %v1013
      %vm1015 = vweird.f32 %v558
      %vm1016 = vweird.f32 %v1010
      %vm1017 = vmor %vm1015, %vm1016
      %v1018 = vsel %vm1017, %v1010, %v1014
      %v1019 = vand.u32 2147483647, %v558
      %vm1020 = vcmp.eq.f32.partialorder %v1019, 8.507059e+37
      %v1021 = vand.u32 %v558, 2147483648
      %v1022 = vor.u32 1.1754944e-38, %v1021
      %v1023 = vsel %vm1020, %v1022, %v1018
      %v1024 = vmul.f32 1.0, %v1023
      %v1025 = vrcp.pop %v559
      %v1026 = vmul.f32 %v559, %v1025
      %v1027 = vsub.f32 1.0, %v1026
      %v1028 = vmul.f32 %v1025, %v1027
      %v1029 = vadd.f32 %v1025, %v1028
      %vm1030 = vweird.f32 %v559
      %vm1031 = vweird.f32 %v1025
      %vm1032 = vmor %vm1030, %vm1031
      %v1033 = vsel %vm1032, %v1025, %v1029
      %v1034 = vand.u32 2147483647, %v559
      %vm1035 = vcmp.eq.f32.partialorder %v1034, 8.507059e+37
      %v1036 = vand.u32 %v559, 2147483648
      %v1037 = vor.u32 1.1754944e-38, %v1036
      %v1038 = vsel %vm1035, %v1037, %v1033
      %v1039 = vmul.f32 1.0, %v1038
      %v1040 = vmul.f32 %v400, %v574
      %v1041 = vmul.f32 %v401, %v589
      %v1042 = vmul.f32 %v402, %v604
      %v1043 = vmul.f32 %v403, %v619
      %v1044 = vmul.f32 %v404, %v634
      %v1045 = vmul.f32 %v405, %v649
      %v1046 = vmul.f32 %v406, %v664
      %v1047 = vmul.f32 %v407, %v679
      %v1048 = vmul.f32 %v408, %v694
      %v1049 = vmul.f32 %v409, %v709
      %v1050 = vmul.f32 %v410, %v724
      %v1051 = vmul.f32 %v411, %v739
      %v1052 = vmul.f32 %v412, %v754
      %v1053 = vmul.f32 %v413, %v769
      %v1054 = vmul.f32 %v414, %v784
      %v1055 = vmul.f32 %v415, %v799
      %v1056 = vmul.f32 %v416, %v814
      %v1057 = vmul.f32 %v417, %v829
      %v1058 = vmul.f32 %v418, %v844
      %v1059 = vmul.f32 %v419, %v859
      %v1060 = vmul.f32 %v420, %v874
      %v1061 = vmul.f32 %v421, %v889
      %v1062 = vmul.f32 %v422, %v904
      %v1063 = vmul.f32 %v423, %v919
      %v1064 = vmul.f32 %v424, %v934
      %v1065 = vmul.f32 %v425, %v949
      %v1066 = vmul.f32 %v426, %v964
      %v1067 = vmul.f32 %v427, %v979
      %v1068 = vmul.f32 %v428, %v994
      %v1069 = vmul.f32 %v429, %v1009
      %v1070 = vmul.f32 %v430, %v1024
      %v1071 = vmul.f32 %v431, %v1039
      %v1072 = vpack.c.bf16 %v1040, %v1040
      %v1073 = vpack.c.bf16 %v1041, %v1041
      %v1074 = vpack.c.bf16 %v1042, %v1042
      %v1075 = vpack.c.bf16 %v1043, %v1043
      %v1076 = vpack.c.bf16 %v1044, %v1044
      %v1077 = vpack.c.bf16 %v1045, %v1045
      %v1078 = vpack.c.bf16 %v1046, %v1046
      %v1079 = vpack.c.bf16 %v1047, %v1047
      %v1080 = vpack.c.bf16 %v1048, %v1048
      %v1081 = vpack.c.bf16 %v1049, %v1049
      %v1082 = vpack.c.bf16 %v1050, %v1050
      %v1083 = vpack.c.bf16 %v1051, %v1051
      %v1084 = vpack.c.bf16 %v1052, %v1052
      %v1085 = vpack.c.bf16 %v1053, %v1053
      %v1086 = vpack.c.bf16 %v1054, %v1054
      %v1087 = vpack.c.bf16 %v1055, %v1055
      %v1088 = vpack.c.bf16 %v1056, %v1056
      %v1089 = vpack.c.bf16 %v1057, %v1057
      %v1090 = vpack.c.bf16 %v1058, %v1058
      %v1091 = vpack.c.bf16 %v1059, %v1059
      %v1092 = vpack.c.bf16 %v1060, %v1060
      %v1093 = vpack.c.bf16 %v1061, %v1061
      %v1094 = vpack.c.bf16 %v1062, %v1062
      %v1095 = vpack.c.bf16 %v1063, %v1063
      %v1096 = vpack.c.bf16 %v1064, %v1064
      %v1097 = vpack.c.bf16 %v1065, %v1065
      %v1098 = vpack.c.bf16 %v1066, %v1066
      %v1099 = vpack.c.bf16 %v1067, %v1067
      %v1100 = vpack.c.bf16 %v1068, %v1068
      %v1101 = vpack.c.bf16 %v1069, %v1069
      %v1102 = vpack.c.bf16 %v1070, %v1070
      %v1103 = vpack.c.bf16 %v1071, %v1071
      %v1104 = vld [vmem:[%s2] sm:$0xf]
      %v1105 = vld [vmem:[%s2 + $0x4] sm:$0xf]
      %v1106 = vld [vmem:[%s2 + $0x8] sm:$0xf]
      %v1107 = vld [vmem:[%s2 + $0xc] sm:$0xf]
      %v1108 = vld [vmem:[%s2 + $0x10] sm:$0xf]
      %v1109 = vld [vmem:[%s2 + $0x14] sm:$0xf]
      %v1110 = vld [vmem:[%s2 + $0x18] sm:$0xf]
      %v1111 = vld [vmem:[%s2 + $0x1c] sm:$0xf]
      %v1112 = vld [vmem:[%s2 + $0x20] sm:$0xf]
      %v1113 = vld [vmem:[%s2 + $0x24] sm:$0xf]
      %v1114 = vld [vmem:[%s2 + $0x28] sm:$0xf]
      %v1115 = vld [vmem:[%s2 + $0x2c] sm:$0xf]
      %v1116 = vld [vmem:[%s2 + $0x30] sm:$0xf]
      %v1117 = vld [vmem:[%s2 + $0x34] sm:$0xf]
      %v1118 = vld [vmem:[%s2 + $0x38] sm:$0xf]
      %v1119 = vld [vmem:[%s2 + $0x3c] sm:$0xf]
      %s1120 = scalar_lea.vmem %s2, 64
      %v1121 = vld [vmem:[%s1120] sm:$0xf]
      %v1122 = vld [vmem:[%s1120 + $0x4] sm:$0xf]
      %v1123 = vld [vmem:[%s1120 + $0x8] sm:$0xf]
      %v1124 = vld [vmem:[%s1120 + $0xc] sm:$0xf]
      %v1125 = vld [vmem:[%s1120 + $0x10] sm:$0xf]
      %v1126 = vld [vmem:[%s1120 + $0x14] sm:$0xf]
      %v1127 = vld [vmem:[%s1120 + $0x18] sm:$0xf]
      %v1128 = vld [vmem:[%s1120 + $0x1c] sm:$0xf]
      %v1129 = vld [vmem:[%s1120 + $0x20] sm:$0xf]
      %v1130 = vld [vmem:[%s1120 + $0x24] sm:$0xf]
      %v1131 = vld [vmem:[%s1120 + $0x28] sm:$0xf]
      %v1132 = vld [vmem:[%s1120 + $0x2c] sm:$0xf]
      %v1133 = vld [vmem:[%s1120 + $0x30] sm:$0xf]
      %v1134 = vld [vmem:[%s1120 + $0x34] sm:$0xf]
      %v1135 = vld [vmem:[%s1120 + $0x38] sm:$0xf]
      %v1136 = vld [vmem:[%s1120 + $0x3c] sm:$0xf]
      %s1137 = scalar_lea.vmem %s2, 128
      %v1138 = vld [vmem:[%s1137] sm:$0xf]
      %v1139 = vld [vmem:[%s1137 + $0x4] sm:$0xf]
      %v1140 = vld [vmem:[%s1137 + $0x8] sm:$0xf]
      %v1141 = vld [vmem:[%s1137 + $0xc] sm:$0xf]
      %v1142 = vld [vmem:[%s1137 + $0x10] sm:$0xf]
      %v1143 = vld [vmem:[%s1137 + $0x14] sm:$0xf]
      %v1144 = vld [vmem:[%s1137 + $0x18] sm:$0xf]
      %v1145 = vld [vmem:[%s1137 + $0x1c] sm:$0xf]
      %v1146 = vld [vmem:[%s1137 + $0x20] sm:$0xf]
      %v1147 = vld [vmem:[%s1137 + $0x24] sm:$0xf]
      %v1148 = vld [vmem:[%s1137 + $0x28] sm:$0xf]
      %v1149 = vld [vmem:[%s1137 + $0x2c] sm:$0xf]
      %v1150 = vld [vmem:[%s1137 + $0x30] sm:$0xf]
      %v1151 = vld [vmem:[%s1137 + $0x34] sm:$0xf]
      %v1152 = vld [vmem:[%s1137 + $0x38] sm:$0xf]
      %v1153 = vld [vmem:[%s1137 + $0x3c] sm:$0xf]
      %v1154 = vld [vmem:[%s3] sm:$0x1]
      %v1187 = vunpack.c.l.b16 %v1072
      %v1188 = vunpack.c.l.b16 %v1073
      %v1189 = vunpack.c.l.b16 %v1074
      %v1190 = vunpack.c.l.b16 %v1075
      %v1191 = vunpack.c.l.b16 %v1076
      %v1192 = vunpack.c.l.b16 %v1077
      %v1193 = vunpack.c.l.b16 %v1078
      %v1194 = vunpack.c.l.b16 %v1079
      %v1195 = vunpack.c.l.b16 %v1080
      %v1196 = vunpack.c.l.b16 %v1081
      %v1197 = vunpack.c.l.b16 %v1082
      %v1198 = vunpack.c.l.b16 %v1083
      %v1199 = vunpack.c.l.b16 %v1084
      %v1200 = vunpack.c.l.b16 %v1085
      %v1201 = vunpack.c.l.b16 %v1086
      %v1202 = vunpack.c.l.b16 %v1087
      %v1203 = vunpack.c.l.b16 %v1088
      %v1204 = vunpack.c.l.b16 %v1089
      %v1205 = vunpack.c.l.b16 %v1090
      %v1206 = vunpack.c.l.b16 %v1091
      %v1207 = vunpack.c.l.b16 %v1092
      %v1208 = vunpack.c.l.b16 %v1093
      %v1209 = vunpack.c.l.b16 %v1094
      %v1210 = vunpack.c.l.b16 %v1095
      %v1211 = vunpack.c.l.b16 %v1096
      %v1212 = vunpack.c.l.b16 %v1097
      %v1213 = vunpack.c.l.b16 %v1098
      %v1214 = vunpack.c.l.b16 %v1099
      %v1215 = vunpack.c.l.b16 %v1100
      %v1216 = vunpack.c.l.b16 %v1101
      %v1217 = vunpack.c.l.b16 %v1102
      %v1218 = vunpack.c.l.b16 %v1103
      %v1219 = vpack.c.b16 %v1188, %v1187
      %v1220 = vpack.c.b16 %v1190, %v1189
      %v1221 = vpack.c.b16 %v1192, %v1191
      %v1222 = vpack.c.b16 %v1194, %v1193
      %v1223 = vpack.c.b16 %v1196, %v1195
      %v1224 = vpack.c.b16 %v1198, %v1197
      %v1225 = vpack.c.b16 %v1200, %v1199
      %v1226 = vpack.c.b16 %v1202, %v1201
      %v1227 = vpack.c.b16 %v1204, %v1203
      %v1228 = vpack.c.b16 %v1206, %v1205
      %v1229 = vpack.c.b16 %v1208, %v1207
      %v1230 = vpack.c.b16 %v1210, %v1209
      %v1231 = vpack.c.b16 %v1212, %v1211
      %v1232 = vpack.c.b16 %v1214, %v1213
      %v1233 = vpack.c.b16 %v1216, %v1215
      %v1234 = vpack.c.b16 %v1218, %v1217
      %v1267 = vunpack.c.l.b16 %v1121
      %v1268 = vunpack.c.l.b16 %v1122
      %v1269 = vunpack.c.l.b16 %v1123
      %v1270 = vunpack.c.l.b16 %v1124
      %v1271 = vunpack.c.l.b16 %v1125
      %v1272 = vunpack.c.l.b16 %v1126
      %v1273 = vunpack.c.l.b16 %v1127
      %v1274 = vunpack.c.l.b16 %v1128
      %v1275 = vunpack.c.l.b16 %v1129
      %v1276 = vunpack.c.l.b16 %v1130
      %v1277 = vunpack.c.l.b16 %v1131
      %v1278 = vunpack.c.l.b16 %v1132
      %v1279 = vunpack.c.l.b16 %v1133
      %v1280 = vunpack.c.l.b16 %v1134
      %v1281 = vunpack.c.l.b16 %v1135
      %v1282 = vunpack.c.l.b16 %v1136
      %v1283 = vpack.c.b16 %v1268, %v1267
      %v1284 = vpack.c.b16 %v1270, %v1269
      %v1285 = vpack.c.b16 %v1272, %v1271
      %v1286 = vpack.c.b16 %v1274, %v1273
      %v1287 = vpack.c.b16 %v1276, %v1275
      %v1288 = vpack.c.b16 %v1278, %v1277
      %v1289 = vpack.c.b16 %v1280, %v1279
      %v1290 = vpack.c.b16 %v1282, %v1281
      %1299 = vmatpush.bf16.msra.mxu0 %v1290
      %1300 = vmatpush.bf16.msra.mxu0 %v1289
      %1301 = vmatpush.bf16.msra.mxu0 %v1288
      %1302 = vmatpush.bf16.msra.mxu0 %v1287
      %1303 = vmatpush.bf16.msra.mxu0 %v1286
      %1304 = vmatpush.bf16.msra.mxu0 %v1285
      %1305 = vmatpush.bf16.msra.mxu0 %v1284
      %1306 = vmatpush.bf16.msra.mxu0 %v1283
      %1307 = vmatmul.bf16.gmra.mxu0 %v1219
      %v1308 = vpop.f32.mrf.mxu0
      %v1309 = vadd.f32 0.0, %v1308
      %v1310 = vpop.f32.mrf.mxu0
      %v1311 = vadd.f32 0.0, %v1310
      %1312 = vmatmul.bf16.gmra.mxu0 %v1220
      %v1313 = vpop.f32.mrf.mxu0
      %v1314 = vadd.f32 0.0, %v1313
      %v1315 = vpop.f32.mrf.mxu0
      %v1316 = vadd.f32 0.0, %v1315
      %1317 = vmatmul.bf16.gmra.mxu0 %v1221
      %v1318 = vpop.f32.mrf.mxu0
      %v1319 = vadd.f32 0.0, %v1318
      %v1320 = vpop.f32.mrf.mxu0
      %v1321 = vadd.f32 0.0, %v1320
      %1322 = vmatmul.bf16.gmra.mxu0 %v1222
      %v1323 = vpop.f32.mrf.mxu0
      %v1324 = vadd.f32 0.0, %v1323
      %v1325 = vpop.f32.mrf.mxu0
      %v1326 = vadd.f32 0.0, %v1325
      %1327 = vmatmul.bf16.gmra.mxu0 %v1223
      %v1328 = vpop.f32.mrf.mxu0
      %v1329 = vadd.f32 0.0, %v1328
      %v1330 = vpop.f32.mrf.mxu0
      %v1331 = vadd.f32 0.0, %v1330
      %1332 = vmatmul.bf16.gmra.mxu0 %v1224
      %v1333 = vpop.f32.mrf.mxu0
      %v1334 = vadd.f32 0.0, %v1333
      %v1335 = vpop.f32.mrf.mxu0
      %v1336 = vadd.f32 0.0, %v1335
      %1337 = vmatmul.bf16.gmra.mxu0 %v1225
      %v1338 = vpop.f32.mrf.mxu0
      %v1339 = vadd.f32 0.0, %v1338
      %v1340 = vpop.f32.mrf.mxu0
      %v1341 = vadd.f32 0.0, %v1340
      %1342 = vmatmul.bf16.gmra.mxu0 %v1226
      %v1343 = vpop.f32.mrf.mxu0
      %v1344 = vadd.f32 0.0, %v1343
      %v1345 = vpop.f32.mrf.mxu0
      %v1346 = vadd.f32 0.0, %v1345
      %1347 = vmatmul.bf16.gmra.mxu0 %v1227
      %v1348 = vpop.f32.mrf.mxu0
      %v1349 = vadd.f32 0.0, %v1348
      %v1350 = vpop.f32.mrf.mxu0
      %v1351 = vadd.f32 0.0, %v1350
      %1352 = vmatmul.bf16.gmra.mxu0 %v1228
      %v1353 = vpop.f32.mrf.mxu0
      %v1354 = vadd.f32 0.0, %v1353
      %v1355 = vpop.f32.mrf.mxu0
      %v1356 = vadd.f32 0.0, %v1355
      %1357 = vmatmul.bf16.gmra.mxu0 %v1229
      %v1358 = vpop.f32.mrf.mxu0
      %v1359 = vadd.f32 0.0, %v1358
      %v1360 = vpop.f32.mrf.mxu0
      %v1361 = vadd.f32 0.0, %v1360
      %1362 = vmatmul.bf16.gmra.mxu0 %v1230
      %v1363 = vpop.f32.mrf.mxu0
      %v1364 = vadd.f32 0.0, %v1363
      %v1365 = vpop.f32.mrf.mxu0
      %v1366 = vadd.f32 0.0, %v1365
      %1367 = vmatmul.bf16.gmra.mxu0 %v1231
      %v1368 = vpop.f32.mrf.mxu0
      %v1369 = vadd.f32 0.0, %v1368
      %v1370 = vpop.f32.mrf.mxu0
      %v1371 = vadd.f32 0.0, %v1370
      %1372 = vmatmul.bf16.gmra.mxu0 %v1232
      %v1373 = vpop.f32.mrf.mxu0
      %v1374 = vadd.f32 0.0, %v1373
      %v1375 = vpop.f32.mrf.mxu0
      %v1376 = vadd.f32 0.0, %v1375
      %1377 = vmatmul.bf16.gmra.mxu0 %v1233
      %v1378 = vpop.f32.mrf.mxu0
      %v1379 = vadd.f32 0.0, %v1378
      %v1380 = vpop.f32.mrf.mxu0
      %v1381 = vadd.f32 0.0, %v1380
      %1382 = vmatmul.bf16.gmra.mxu0 %v1234
      %v1383 = vpop.f32.mrf.mxu0
      %v1384 = vadd.f32 0.0, %v1383
      %v1385 = vpop.f32.mrf.mxu0
      %v1386 = vadd.f32 0.0, %v1385
      %1387 = vdwg.mxu0
      %v1389 = vperm.slane %v1154, 0
      %v1391 = vadd.f32 %v1309, %v1389
      %v1392 = vadd.f32 %v1311, %v1389
      %v1393 = vadd.f32 %v1314, %v1389
      %v1394 = vadd.f32 %v1316, %v1389
      %v1395 = vadd.f32 %v1319, %v1389
      %v1396 = vadd.f32 %v1321, %v1389
      %v1397 = vadd.f32 %v1324, %v1389
      %v1398 = vadd.f32 %v1326, %v1389
      %v1399 = vadd.f32 %v1329, %v1389
      %v1400 = vadd.f32 %v1331, %v1389
      %v1401 = vadd.f32 %v1334, %v1389
      %v1402 = vadd.f32 %v1336, %v1389
      %v1403 = vadd.f32 %v1339, %v1389
      %v1404 = vadd.f32 %v1341, %v1389
      %v1405 = vadd.f32 %v1344, %v1389
      %v1406 = vadd.f32 %v1346, %v1389
      %v1407 = vadd.f32 %v1349, %v1389
      %v1408 = vadd.f32 %v1351, %v1389
      %v1409 = vadd.f32 %v1354, %v1389
      %v1410 = vadd.f32 %v1356, %v1389
      %v1411 = vadd.f32 %v1359, %v1389
      %v1412 = vadd.f32 %v1361, %v1389
      %v1413 = vadd.f32 %v1364, %v1389
      %v1414 = vadd.f32 %v1366, %v1389
      %v1415 = vadd.f32 %v1369, %v1389
      %v1416 = vadd.f32 %v1371, %v1389
      %v1417 = vadd.f32 %v1374, %v1389
      %v1418 = vadd.f32 %v1376, %v1389
      %v1419 = vadd.f32 %v1379, %v1389
      %v1420 = vadd.f32 %v1381, %v1389
      %v1421 = vadd.f32 %v1384, %v1389
      %v1422 = vadd.f32 %v1386, %v1389
      %v1439 = vunpack.c.l.b16 %v1104
      %v1440 = vunpack.c.l.b16 %v1105
      %v1441 = vunpack.c.l.b16 %v1106
      %v1442 = vunpack.c.l.b16 %v1107
      %v1443 = vunpack.c.l.b16 %v1108
      %v1444 = vunpack.c.l.b16 %v1109
      %v1445 = vunpack.c.l.b16 %v1110
      %v1446 = vunpack.c.l.b16 %v1111
      %v1447 = vunpack.c.l.b16 %v1112
      %v1448 = vunpack.c.l.b16 %v1113
      %v1449 = vunpack.c.l.b16 %v1114
      %v1450 = vunpack.c.l.b16 %v1115
      %v1451 = vunpack.c.l.b16 %v1116
      %v1452 = vunpack.c.l.b16 %v1117
      %v1453 = vunpack.c.l.b16 %v1118
      %v1454 = vunpack.c.l.b16 %v1119
      %v1455 = vpack.c.b16 %v1440, %v1439
      %v1456 = vpack.c.b16 %v1442, %v1441
      %v1457 = vpack.c.b16 %v1444, %v1443
      %v1458 = vpack.c.b16 %v1446, %v1445
      %v1459 = vpack.c.b16 %v1448, %v1447
      %v1460 = vpack.c.b16 %v1450, %v1449
      %v1461 = vpack.c.b16 %v1452, %v1451
      %v1462 = vpack.c.b16 %v1454, %v1453
      %1471 = vmatpush.bf16.msra.mxu0 %v1462
      %1472 = vmatpush.bf16.msra.mxu0 %v1461
      %1473 = vmatpush.bf16.msra.mxu0 %v1460
      %1474 = vmatpush.bf16.msra.mxu0 %v1459
      %1475 = vmatpush.bf16.msra.mxu0 %v1458
      %1476 = vmatpush.bf16.msra.mxu0 %v1457
      %1477 = vmatpush.bf16.msra.mxu0 %v1456
      %1478 = vmatpush.bf16.msra.mxu0 %v1455
      %1479 = vmatmul.bf16.gmra.mxu0 %v1219
      %v1480 = vpop.f32.mrf.mxu0
      %v1481 = vadd.f32 0.0, %v1480
      %v1482 = vpop.f32.mrf.mxu0
      %v1483 = vadd.f32 0.0, %v1482
      %1484 = vmatmul.bf16.gmra.mxu0 %v1220
      %v1485 = vpop.f32.mrf.mxu0
      %v1486 = vadd.f32 0.0, %v1485
      %v1487 = vpop.f32.mrf.mxu0
      %v1488 = vadd.f32 0.0, %v1487
      %1489 = vmatmul.bf16.gmra.mxu0 %v1221
      %v1490 = vpop.f32.mrf.mxu0
      %v1491 = vadd.f32 0.0, %v1490
      %v1492 = vpop.f32.mrf.mxu0
      %v1493 = vadd.f32 0.0, %v1492
      %1494 = vmatmul.bf16.gmra.mxu0 %v1222
      %v1495 = vpop.f32.mrf.mxu0
      %v1496 = vadd.f32 0.0, %v1495
      %v1497 = vpop.f32.mrf.mxu0
      %v1498 = vadd.f32 0.0, %v1497
      %1499 = vmatmul.bf16.gmra.mxu0 %v1223
      %v1500 = vpop.f32.mrf.mxu0
      %v1501 = vadd.f32 0.0, %v1500
      %v1502 = vpop.f32.mrf.mxu0
      %v1503 = vadd.f32 0.0, %v1502
      %1504 = vmatmul.bf16.gmra.mxu0 %v1224
      %v1505 = vpop.f32.mrf.mxu0
      %v1506 = vadd.f32 0.0, %v1505
      %v1507 = vpop.f32.mrf.mxu0
      %v1508 = vadd.f32 0.0, %v1507
      %1509 = vmatmul.bf16.gmra.mxu0 %v1225
      %v1510 = vpop.f32.mrf.mxu0
      %v1511 = vadd.f32 0.0, %v1510
      %v1512 = vpop.f32.mrf.mxu0
      %v1513 = vadd.f32 0.0, %v1512
      %1514 = vmatmul.bf16.gmra.mxu0 %v1226
      %v1515 = vpop.f32.mrf.mxu0
      %v1516 = vadd.f32 0.0, %v1515
      %v1517 = vpop.f32.mrf.mxu0
      %v1518 = vadd.f32 0.0, %v1517
      %1519 = vmatmul.bf16.gmra.mxu0 %v1227
      %v1520 = vpop.f32.mrf.mxu0
      %v1521 = vadd.f32 0.0, %v1520
      %v1522 = vpop.f32.mrf.mxu0
      %v1523 = vadd.f32 0.0, %v1522
      %1524 = vmatmul.bf16.gmra.mxu0 %v1228
      %v1525 = vpop.f32.mrf.mxu0
      %v1526 = vadd.f32 0.0, %v1525
      %v1527 = vpop.f32.mrf.mxu0
      %v1528 = vadd.f32 0.0, %v1527
      %1529 = vmatmul.bf16.gmra.mxu0 %v1229
      %v1530 = vpop.f32.mrf.mxu0
      %v1531 = vadd.f32 0.0, %v1530
      %v1532 = vpop.f32.mrf.mxu0
      %v1533 = vadd.f32 0.0, %v1532
      %1534 = vmatmul.bf16.gmra.mxu0 %v1230
      %v1535 = vpop.f32.mrf.mxu0
      %v1536 = vadd.f32 0.0, %v1535
      %v1537 = vpop.f32.mrf.mxu0
      %v1538 = vadd.f32 0.0, %v1537
      %1539 = vdwg.mxu0
      %v1556 = vunpack.c.l.b16 %v1138
      %v1557 = vunpack.c.l.b16 %v1139
      %v1558 = vunpack.c.l.b16 %v1140
      %v1559 = vunpack.c.l.b16 %v1141
      %v1560 = vunpack.c.l.b16 %v1142
      %v1561 = vunpack.c.l.b16 %v1143
      %v1562 = vunpack.c.l.b16 %v1144
      %v1563 = vunpack.c.l.b16 %v1145
      %v1564 = vunpack.c.l.b16 %v1146
      %v1565 = vunpack.c.l.b16 %v1147
      %v1566 = vunpack.c.l.b16 %v1148
      %v1567 = vunpack.c.l.b16 %v1149
      %v1568 = vunpack.c.l.b16 %v1150
      %v1569 = vunpack.c.l.b16 %v1151
      %v1570 = vunpack.c.l.b16 %v1152
      %v1571 = vunpack.c.l.b16 %v1153
      %v1572 = vpack.c.b16 %v1557, %v1556
      %v1573 = vpack.c.b16 %v1559, %v1558
      %v1574 = vpack.c.b16 %v1561, %v1560
      %v1575 = vpack.c.b16 %v1563, %v1562
      %v1576 = vpack.c.b16 %v1565, %v1564
      %v1577 = vpack.c.b16 %v1567, %v1566
      %v1578 = vpack.c.b16 %v1569, %v1568
      %v1579 = vpack.c.b16 %v1571, %v1570
      %1588 = vmatpush.bf16.msra.mxu0 %v1579
      %1589 = vmatpush.bf16.msra.mxu0 %v1578
      %1590 = vmatpush.bf16.msra.mxu0 %v1577
      %1591 = vmatpush.bf16.msra.mxu0 %v1576
      %1592 = vmatpush.bf16.msra.mxu0 %v1575
      %1593 = vmatpush.bf16.msra.mxu0 %v1574
      %1594 = vmatpush.bf16.msra.mxu0 %v1573
      %1595 = vmatpush.bf16.msra.mxu0 %v1572
      %1596 = vmatmul.bf16.gmra.mxu0 %v1223
      %v1597 = vpop.f32.mrf.mxu0
      %v1598 = vadd.f32 0.0, %v1597
      %v1599 = vpop.f32.mrf.mxu0
      %v1600 = vadd.f32 0.0, %v1599
      %1601 = vmatmul.bf16.gmra.mxu0 %v1224
      %v1602 = vpop.f32.mrf.mxu0
      %v1603 = vadd.f32 0.0, %v1602
      %v1604 = vpop.f32.mrf.mxu0
      %v1605 = vadd.f32 0.0, %v1604
      %1606 = vmatmul.bf16.gmra.mxu0 %v1225
      %v1607 = vpop.f32.mrf.mxu0
      %v1608 = vadd.f32 0.0, %v1607
      %v1609 = vpop.f32.mrf.mxu0
      %v1610 = vadd.f32 0.0, %v1609
      %1611 = vmatmul.bf16.gmra.mxu0 %v1226
      %v1612 = vpop.f32.mrf.mxu0
      %v1613 = vadd.f32 0.0, %v1612
      %v1614 = vpop.f32.mrf.mxu0
      %v1615 = vadd.f32 0.0, %v1614
      %1616 = vmatmul.bf16.gmra.mxu0 %v1227
      %v1617 = vpop.f32.mrf.mxu0
      %v1618 = vadd.f32 0.0, %v1617
      %v1619 = vpop.f32.mrf.mxu0
      %v1620 = vadd.f32 0.0, %v1619
      %1621 = vmatmul.bf16.gmra.mxu0 %v1228
      %v1622 = vpop.f32.mrf.mxu0
      %v1623 = vadd.f32 0.0, %v1622
      %v1624 = vpop.f32.mrf.mxu0
      %v1625 = vadd.f32 0.0, %v1624
      %1626 = vmatmul.bf16.gmra.mxu0 %v1229
      %v1627 = vpop.f32.mrf.mxu0
      %v1628 = vadd.f32 0.0, %v1627
      %v1629 = vpop.f32.mrf.mxu0
      %v1630 = vadd.f32 0.0, %v1629
      %1631 = vmatmul.bf16.gmra.mxu0 %v1230
      %v1632 = vpop.f32.mrf.mxu0
      %v1633 = vadd.f32 0.0, %v1632
      %v1634 = vpop.f32.mrf.mxu0
      %v1635 = vadd.f32 0.0, %v1634
      %1636 = vmatmul.bf16.gmra.mxu0 %v1231
      %v1637 = vpop.f32.mrf.mxu0
      %v1638 = vadd.f32 0.0, %v1637
      %v1639 = vpop.f32.mrf.mxu0
      %v1640 = vadd.f32 0.0, %v1639
      %1641 = vmatmul.bf16.gmra.mxu0 %v1232
      %v1642 = vpop.f32.mrf.mxu0
      %v1643 = vadd.f32 0.0, %v1642
      %v1644 = vpop.f32.mrf.mxu0
      %v1645 = vadd.f32 0.0, %v1644
      %1646 = vmatmul.bf16.gmra.mxu0 %v1233
      %v1647 = vpop.f32.mrf.mxu0
      %v1648 = vadd.f32 0.0, %v1647
      %v1649 = vpop.f32.mrf.mxu0
      %v1650 = vadd.f32 0.0, %v1649
      %1651 = vmatmul.bf16.gmra.mxu0 %v1234
      %v1652 = vpop.f32.mrf.mxu0
      %v1653 = vadd.f32 0.0, %v1652
      %v1654 = vpop.f32.mrf.mxu0
      %v1655 = vadd.f32 0.0, %v1654
      %1656 = vdwg.mxu0
      %v1657 = vadd.f32 %v1391, 0.0
      %v1658 = vadd.f32 %v1392, 0.0
      %v1659 = vadd.f32 %v1393, 0.0
      %v1660 = vadd.f32 %v1394, 0.0
      %v1661 = vadd.f32 %v1395, 0.0
      %v1662 = vadd.f32 %v1396, 0.0
      %v1663 = vadd.f32 %v1397, 0.0
      %v1664 = vadd.f32 %v1398, 0.0
      %v1665 = vadd.f32 %v1399, %v1481
      %v1666 = vadd.f32 %v1400, %v1483
      %v1667 = vadd.f32 %v1401, %v1486
      %v1668 = vadd.f32 %v1402, %v1488
      %v1669 = vadd.f32 %v1403, %v1491
      %v1670 = vadd.f32 %v1404, %v1493
      %v1671 = vadd.f32 %v1405, %v1496
      %v1672 = vadd.f32 %v1406, %v1498
      %v1673 = vadd.f32 %v1407, %v1501
      %v1674 = vadd.f32 %v1408, %v1503
      %v1675 = vadd.f32 %v1409, %v1506
      %v1676 = vadd.f32 %v1410, %v1508
      %v1677 = vadd.f32 %v1411, %v1511
      %v1678 = vadd.f32 %v1412, %v1513
      %v1679 = vadd.f32 %v1413, %v1516
      %v1680 = vadd.f32 %v1414, %v1518
      %v1681 = vadd.f32 %v1415, %v1521
      %v1682 = vadd.f32 %v1416, %v1523
      %v1683 = vadd.f32 %v1417, %v1526
      %v1684 = vadd.f32 %v1418, %v1528
      %v1685 = vadd.f32 %v1419, %v1531
      %v1686 = vadd.f32 %v1420, %v1533
      %v1687 = vadd.f32 %v1421, %v1536
      %v1688 = vadd.f32 %v1422, %v1538
      %v1689 = vadd.f32 %v1657, %v1598
      %v1690 = vadd.f32 %v1658, %v1600
      %v1691 = vadd.f32 %v1659, %v1603
      %v1692 = vadd.f32 %v1660, %v1605
      %v1693 = vadd.f32 %v1661, %v1608
      %v1694 = vadd.f32 %v1662, %v1610
      %v1695 = vadd.f32 %v1663, %v1613
      %v1696 = vadd.f32 %v1664, %v1615
      %v1697 = vadd.f32 %v1665, %v1618
      %v1698 = vadd.f32 %v1666, %v1620
      %v1699 = vadd.f32 %v1667, %v1623
      %v1700 = vadd.f32 %v1668, %v1625
      %v1701 = vadd.f32 %v1669, %v1628
      %v1702 = vadd.f32 %v1670, %v1630
      %v1703 = vadd.f32 %v1671, %v1633
      %v1704 = vadd.f32 %v1672, %v1635
      %v1705 = vadd.f32 %v1673, %v1638
      %v1706 = vadd.f32 %v1674, %v1640
      %v1707 = vadd.f32 %v1675, %v1643
      %v1708 = vadd.f32 %v1676, %v1645
      %v1709 = vadd.f32 %v1677, %v1648
      %v1710 = vadd.f32 %v1678, %v1650
      %v1711 = vadd.f32 %v1679, %v1653
      %v1712 = vadd.f32 %v1680, %v1655
      %v1713 = vadd.f32 %v1681, 0.0
      %v1714 = vadd.f32 %v1682, 0.0
      %v1715 = vadd.f32 %v1683, 0.0
      %v1716 = vadd.f32 %v1684, 0.0
      %v1717 = vadd.f32 %v1685, 0.0
      %v1718 = vadd.f32 %v1686, 0.0
      %v1719 = vadd.f32 %v1687, 0.0
      %v1720 = vadd.f32 %v1688, 0.0
      %v1721 = vpack.c.bf16 %v1689, %v1689
      %v1722 = vpack.c.bf16 %v1690, %v1690
      %v1723 = vpack.c.bf16 %v1691, %v1691
      %v1724 = vpack.c.bf16 %v1692, %v1692
      %v1725 = vpack.c.bf16 %v1693, %v1693
      %v1726 = vpack.c.bf16 %v1694, %v1694
      %v1727 = vpack.c.bf16 %v1695, %v1695
      %v1728 = vpack.c.bf16 %v1696, %v1696
      %v1729 = vpack.c.bf16 %v1697, %v1697
      %v1730 = vpack.c.bf16 %v1698, %v1698
      %v1731 = vpack.c.bf16 %v1699, %v1699
      %v1732 = vpack.c.bf16 %v1700, %v1700
      %v1733 = vpack.c.bf16 %v1701, %v1701
      %v1734 = vpack.c.bf16 %v1702, %v1702
      %v1735 = vpack.c.bf16 %v1703, %v1703
      %v1736 = vpack.c.bf16 %v1704, %v1704
      %v1737 = vpack.c.bf16 %v1705, %v1705
      %v1738 = vpack.c.bf16 %v1706, %v1706
      %v1739 = vpack.c.bf16 %v1707, %v1707
      %v1740 = vpack.c.bf16 %v1708, %v1708
      %v1741 = vpack.c.bf16 %v1709, %v1709
      %v1742 = vpack.c.bf16 %v1710, %v1710
      %v1743 = vpack.c.bf16 %v1711, %v1711
      %v1744 = vpack.c.bf16 %v1712, %v1712
      %v1745 = vpack.c.bf16 %v1713, %v1713
      %v1746 = vpack.c.bf16 %v1714, %v1714
      %v1747 = vpack.c.bf16 %v1715, %v1715
      %v1748 = vpack.c.bf16 %v1716, %v1716
      %v1749 = vpack.c.bf16 %v1717, %v1717
      %v1750 = vpack.c.bf16 %v1718, %v1718
      %v1751 = vpack.c.bf16 %v1719, %v1719
      %v1752 = vpack.c.bf16 %v1720, %v1720
      %1753 = vst [vmem:[%s291] sm:$0xf] %v1721
      %1754 = vst [vmem:[%s291 + $0x4] sm:$0xf] %v1722
      %1755 = vst [vmem:[%s291 + $0x8] sm:$0xf] %v1723
      %1756 = vst [vmem:[%s291 + $0xc] sm:$0xf] %v1724
      %1757 = vst [vmem:[%s291 + $0x10] sm:$0xf] %v1725
      %1758 = vst [vmem:[%s291 + $0x14] sm:$0xf] %v1726
      %1759 = vst [vmem:[%s291 + $0x18] sm:$0xf] %v1727
      %1760 = vst [vmem:[%s291 + $0x1c] sm:$0xf] %v1728
      %1761 = vst [vmem:[%s291 + $0x20] sm:$0xf] %v1729
      %1762 = vst [vmem:[%s291 + $0x24] sm:$0xf] %v1730
      %1763 = vst [vmem:[%s291 + $0x28] sm:$0xf] %v1731
      %1764 = vst [vmem:[%s291 + $0x2c] sm:$0xf] %v1732
      %1765 = vst [vmem:[%s291 + $0x30] sm:$0xf] %v1733
      %1766 = vst [vmem:[%s291 + $0x34] sm:$0xf] %v1734
      %1767 = vst [vmem:[%s291 + $0x38] sm:$0xf] %v1735
      %1768 = vst [vmem:[%s291 + $0x3c] sm:$0xf] %v1736
      %1769 = vst [vmem:[%s291 + $0x40] sm:$0xf] %v1737
      %1770 = vst [vmem:[%s291 + $0x44] sm:$0xf] %v1738
      %1771 = vst [vmem:[%s291 + $0x48] sm:$0xf] %v1739
      %1772 = vst [vmem:[%s291 + $0x4c] sm:$0xf] %v1740
      %1773 = vst [vmem:[%s291 + $0x50] sm:$0xf] %v1741
      %1774 = vst [vmem:[%s291 + $0x54] sm:$0xf] %v1742
      %1775 = vst [vmem:[%s291 + $0x58] sm:$0xf] %v1743
      %1776 = vst [vmem:[%s291 + $0x5c] sm:$0xf] %v1744
      %1777 = vst [vmem:[%s291 + $0x60] sm:$0xf] %v1745
      %1778 = vst [vmem:[%s291 + $0x64] sm:$0xf] %v1746
      %1779 = vst [vmem:[%s291 + $0x68] sm:$0xf] %v1747
      %1780 = vst [vmem:[%s291 + $0x6c] sm:$0xf] %v1748
      %1781 = vst [vmem:[%s291 + $0x70] sm:$0xf] %v1749
      %1782 = vst [vmem:[%s291 + $0x74] sm:$0xf] %v1750
      %1783 = vst [vmem:[%s291 + $0x78] sm:$0xf] %v1751
      %1784 = vst [vmem:[%s291 + $0x7c] sm:$0xf] %v1752
      %v1785 = vunpack.c.l.bf16 %v1721
      %v1786 = vunpack.c.l.bf16 %v1722
      %v1787 = vunpack.c.l.bf16 %v1723
      %v1788 = vunpack.c.l.bf16 %v1724
      %v1789 = vunpack.c.l.bf16 %v1725
      %v1790 = vunpack.c.l.bf16 %v1726
      %v1791 = vunpack.c.l.bf16 %v1727
      %v1792 = vunpack.c.l.bf16 %v1728
      %v1793 = vunpack.c.l.bf16 %v1729
      %v1794 = vunpack.c.l.bf16 %v1730
      %v1795 = vunpack.c.l.bf16 %v1731
      %v1796 = vunpack.c.l.bf16 %v1732
      %v1797 = vunpack.c.l.bf16 %v1733
      %v1798 = vunpack.c.l.bf16 %v1734
      %v1799 = vunpack.c.l.bf16 %v1735
      %v1800 = vunpack.c.l.bf16 %v1736
      %v1801 = vunpack.c.l.bf16 %v1737
      %v1802 = vunpack.c.l.bf16 %v1738
      %v1803 = vunpack.c.l.bf16 %v1739
      %v1804 = vunpack.c.l.bf16 %v1740
      %v1805 = vunpack.c.l.bf16 %v1741
      %v1806 = vunpack.c.l.bf16 %v1742
      %v1807 = vunpack.c.l.bf16 %v1743
      %v1808 = vunpack.c.l.bf16 %v1744
      %v1809 = vunpack.c.l.bf16 %v1745
      %v1810 = vunpack.c.l.bf16 %v1746
      %v1811 = vunpack.c.l.bf16 %v1747
      %v1812 = vunpack.c.l.bf16 %v1748
      %v1813 = vunpack.c.l.bf16 %v1749
      %v1814 = vunpack.c.l.bf16 %v1750
      %v1815 = vunpack.c.l.bf16 %v1751
      %v1816 = vunpack.c.l.bf16 %v1752
      %v1817 = vadd.f32 %v1785, %v1786
      %v1818 = vadd.f32 %v1817, %v1787
      %v1819 = vadd.f32 %v1818, %v1788
      %v1820 = vadd.f32 %v1819, %v1789
      %v1821 = vadd.f32 %v1820, %v1790
      %v1822 = vadd.f32 %v1821, %v1791
      %v1823 = vadd.f32 %v1822, %v1792
      %v1824 = vadd.f32 %v1823, %v1793
      %v1825 = vadd.f32 %v1824, %v1794
      %v1826 = vadd.f32 %v1825, %v1795
      %v1827 = vadd.f32 %v1826, %v1796
      %v1828 = vadd.f32 %v1827, %v1797
      %v1829 = vadd.f32 %v1828, %v1798
      %v1830 = vadd.f32 %v1829, %v1799
      %v1831 = vadd.f32 %v1830, %v1800
      %v1832 = vadd.f32 %v1831, %v1801
      %v1833 = vadd.f32 %v1832, %v1802
      %v1834 = vadd.f32 %v1833, %v1803
      %v1835 = vadd.f32 %v1834, %v1804
      %v1836 = vadd.f32 %v1835, %v1805
      %v1837 = vadd.f32 %v1836, %v1806
      %v1838 = vadd.f32 %v1837, %v1807
      %v1839 = vadd.f32 %v1838, %v1808
      %v1840 = vadd.f32 %v1839, %v1809
      %v1841 = vadd.f32 %v1840, %v1810
      %v1842 = vadd.f32 %v1841, %v1811
      %v1843 = vadd.f32 %v1842, %v1812
      %v1844 = vadd.f32 %v1843, %v1813
      %v1845 = vadd.f32 %v1844, %v1814
      %v1846 = vadd.f32 %v1845, %v1815
      %v1847 = vadd.f32 %v1846, %v1816
      %v1848 = vrot.slane %v1847, 4
      %v1849 = vadd.f32 %v1847, %v1848
      %v1850 = vrot.slane %v1849, 2
      %v1851 = vadd.f32 %v1849, %v1850
      %v1852 = vrot.slane %v1851, 1
      %v1853 = vadd.f32 %v1851, %v1852
      %v1854 = vmul.f32 %v1785, %v1785
      %v1855 = vmul.f32 %v1786, %v1786
      %v1856 = vmul.f32 %v1787, %v1787
      %v1857 = vmul.f32 %v1788, %v1788
      %v1858 = vmul.f32 %v1789, %v1789
      %v1859 = vmul.f32 %v1790, %v1790
      %v1860 = vmul.f32 %v1791, %v1791
      %v1861 = vmul.f32 %v1792, %v1792
      %v1862 = vmul.f32 %v1793, %v1793
      %v1863 = vmul.f32 %v1794, %v1794
      %v1864 = vmul.f32 %v1795, %v1795
      %v1865 = vmul.f32 %v1796, %v1796
      %v1866 = vmul.f32 %v1797, %v1797
      %v1867 = vmul.f32 %v1798, %v1798
      %v1868 = vmul.f32 %v1799, %v1799
      %v1869 = vmul.f32 %v1800, %v1800
      %v1870 = vmul.f32 %v1801, %v1801
      %v1871 = vmul.f32 %v1802, %v1802
      %v1872 = vmul.f32 %v1803, %v1803
      %v1873 = vmul.f32 %v1804, %v1804
      %v1874 = vmul.f32 %v1805, %v1805
      %v1875 = vmul.f32 %v1806, %v1806
      %v1876 = vmul.f32 %v1807, %v1807
      %v1877 = vmul.f32 %v1808, %v1808
      %v1878 = vmul.f32 %v1809, %v1809
      %v1879 = vmul.f32 %v1810, %v1810
      %v1880 = vmul.f32 %v1811, %v1811
      %v1881 = vmul.f32 %v1812, %v1812
      %v1882 = vmul.f32 %v1813, %v1813
      %v1883 = vmul.f32 %v1814, %v1814
      %v1884 = vmul.f32 %v1815, %v1815
      %v1885 = vmul.f32 %v1816, %v1816
      %v1886 = vadd.f32 %v1854, %v1855
      %v1887 = vadd.f32 %v1886, %v1856
      %v1888 = vadd.f32 %v1887, %v1857
      %v1889 = vadd.f32 %v1888, %v1858
      %v1890 = vadd.f32 %v1889, %v1859
      %v1891 = vadd.f32 %v1890, %v1860
      %v1892 = vadd.f32 %v1891, %v1861
      %v1893 = vadd.f32 %v1892, %v1862
      %v1894 = vadd.f32 %v1893, %v1863
      %v1895 = vadd.f32 %v1894, %v1864
      %v1896 = vadd.f32 %v1895, %v1865
      %v1897 = vadd.f32 %v1896, %v1866
      %v1898 = vadd.f32 %v1897, %v1867
      %v1899 = vadd.f32 %v1898, %v1868
      %v1900 = vadd.f32 %v1899, %v1869
      %v1901 = vadd.f32 %v1900, %v1870
      %v1902 = vadd.f32 %v1901, %v1871
      %v1903 = vadd.f32 %v1902, %v1872
      %v1904 = vadd.f32 %v1903, %v1873
      %v1905 = vadd.f32 %v1904, %v1874
      %v1906 = vadd.f32 %v1905, %v1875
      %v1907 = vadd.f32 %v1906, %v1876
      %v1908 = vadd.f32 %v1907, %v1877
      %v1909 = vadd.f32 %v1908, %v1878
      %v1910 = vadd.f32 %v1909, %v1879
      %v1911 = vadd.f32 %v1910, %v1880
      %v1912 = vadd.f32 %v1911, %v1881
      %v1913 = vadd.f32 %v1912, %v1882
      %v1914 = vadd.f32 %v1913, %v1883
      %v1915 = vadd.f32 %v1914, %v1884
      %v1916 = vadd.f32 %v1915, %v1885
      %v1917 = vrot.slane %v1916, 4
      %v1918 = vadd.f32 %v1916, %v1917
      %v1919 = vrot.slane %v1918, 2
      %v1920 = vadd.f32 %v1918, %v1919
      %v1921 = vrot.slane %v1920, 1
      %v1922 = vadd.f32 %v1920, %v1921
      %v1923 = vlaneseq
      %v1924 = vshrl.u32 %v1923, 7
      %vm1925 = vcmp.eq.s32.totalorder %v1924, 0
      %v1926 = vsel %vm1925, %v1853, %v1922
      %1927 = vst [vmem:[%s299] sm:$0x3] %v1926
      %s1928 = smul.u32 8, %s22
      %p1929 = scmp.lt.s32.totalorder %s21, 1
      %s1930 = scalar_select %p1929, %s21, 1
      %p1931 = scmp.lt.s32.totalorder %s1928, 7
      %s1932 = scalar_select %p1931, %s1928, 7
      %s1933 = smul.addr %s1930, 32
      %s1934 = sadd.s32 %s1932, %s1933
      %s1935 = smul.addr %s1934, 4
      %s1936 = scalar_lea.vmem %s4, %s1935
      %p1937 = scmp.lt.s32.totalorder %s21, 1
      %s1938 = scalar_select %p1937, %s21, 1
      %p1939 = scmp.lt.s32.totalorder %s22, 0
      %s1940 = scalar_select %p1939, %s22, 0
      %s1941 = sadd.s32 %s1940, %s1938
      %s1942 = smul.addr %s1941, 2
      %s1943 = scalar_lea.vmem %s5, %s1942
      // Predicated region
      $region37: #{temporal_conv_block.5} parent=35 // pred_check
        %p1944 = pneg %p145
      $region38: #{temporal_conv_block.5} parent=35 // pred_check_branch
        %1946 = sbr.rel (%p1944) target = $region40
      $region39: #{temporal_conv_block.5} parent=35 // pred_region
        %s1947 = smul.u32 8, %s22
      $region40: #{temporal_conv_block.5} parent=35 // pred_fallthru
        _
      // Predicated region
      $region41: #{temporal_conv_block.5} parent=35 // pred_check
        %p1948 = pneg %p173
      $region42: #{temporal_conv_block.5} parent=35 // pred_check_branch
        %1950 = sbr.rel (%p1948) target = $region44
      $region43: #{temporal_conv_block.5} parent=35 // pred_region
        _
      $region44: #{temporal_conv_block.5} parent=35 // pred_fallthru
        _
    $region36: #{temporal_conv_block.5} parent=5 // pred_fallthru
      _
    %p1951 = scmp.le.s32.totalorder 2, %s12
    // Predicated region
    $region45: #{temporal_conv_block.5} parent=5 // pred_check
      %p1952 = pneg %p1951
    $region46: #{temporal_conv_block.5} parent=5 // pred_check_branch
      %1954 = sbr.rel (%p1952) target = $region48
    $region47: #{temporal_conv_block.5} parent=5 // pred_region
      %s1955 = ssub.s32 %s12, 2
      // Predicated region
      $region49: #{temporal_conv_block.5} parent=47 // pred_check
        %p1956 = pneg %p151
      $region50: #{temporal_conv_block.5} parent=47 // pred_check_branch
        %1958 = sbr.rel (%p1956) target = $region52
      $region51: #{temporal_conv_block.5} parent=47 // pred_region
        %s1959 = smul.u32 8, %s24
        %p1960 = scmp.lt.s32.totalorder %s23, 1
        %s1961 = scalar_select %p1960, %s23, 1
        %p1962 = scmp.lt.s32.totalorder %s1959, 7
        %s1963 = scalar_select %p1962, %s1959, 7
        %s1964 = smul.addr %s1961, 32
        %s1965 = sadd.s32 %s1963, %s1964
        %s1966 = smul.addr %s1965, 4
        %s1967 = scalar_lea.vmem %s4, %s1966
      $region52: #{temporal_conv_block.5} parent=47 // pred_fallthru
        _
      // Predicated region
      $region53: #{temporal_conv_block.5} parent=47 // pred_check
        %p1968 = pneg %p179
      $region54: #{temporal_conv_block.5} parent=47 // pred_check_branch
        %1970 = sbr.rel (%p1968) target = $region56
      $region55: #{temporal_conv_block.5} parent=47 // pred_region
        %p1971 = scmp.lt.s32.totalorder %s23, 1
        %s1972 = scalar_select %p1971, %s23, 1
        %p1973 = scmp.lt.s32.totalorder %s24, 0
        %s1974 = scalar_select %p1973, %s24, 0
        %s1975 = sadd.s32 %s1974, %s1972
        %s1976 = smul.addr %s1975, 2
        %s1977 = scalar_lea.vmem %s5, %s1976
      $region56: #{temporal_conv_block.5} parent=47 // pred_fallthru
        _
    $region48: #{temporal_conv_block.5} parent=5 // pred_fallthru
      _
  $region6: #{temporal_conv_block.5} parent=0 // loop_footer
    %s16 = sadd.s32 1, %s12
  $region7: #{temporal_conv_block.5} parent=0 // loop_footer_branch
    %11 = sbr.rel target = $region3
  $region8: #{temporal_conv_block.5} parent=0 // loop_exit
    _

// kernel: temporal_conv_block.4
$region0: #{temporal_conv_block.4}
  #allocation0 [shape = 'u32[]', space=smem, size = 0x4, offset = 0x4, fixed_abs, tag = 'smem constant byte address 0x4 - core index']
  #allocation1 [shape = 'u32[72,128]{1,0:T(1,128)}', space=vmem, size = 0x9000, scoped, tag = 'internal scratch']
  %s0 = inlined_call_operand.vmem [shape: f32[2,4,64,128], index: 0, kind: input, shape index: {}]
  %s1 = inlined_call_operand.vmem [shape: f32[2,2,128], index: 1, kind: input, shape index: {}]
  %s2 = inlined_call_operand.vmem [shape: bf16[3,128,128], index: 2, kind: input, shape index: {}]
  %s3 = inlined_call_operand.vmem [shape: f32[1,128], index: 3, kind: input, shape index: {}]
  %s4 = inlined_call_operand.vmem [shape: bf16[2,4,64,128], index: 4, kind: output, shape index: {0}]
  %s5 = inlined_call_operand.vmem [shape: f32[2,1,2,128], index: 5, kind: output, shape index: {1}]
  %6 = xla_tuple %s4, %s5
  %s7 = sld [smem:[#allocation0]]
  $region57: #{temporal_conv_block.4} parent=0
    _
  %s9 = ssub.s32 1, %s7
  %s10 = scalar_select 0, %s9, %s7
  loop: start=0, step=1, limit=4
  $region2: #{temporal_conv_block.4} parent=0 // loop_pre_header
    _
  $region3: #{temporal_conv_block.4} parent=0 // loop_header
    %s12 = sphi 0, %s16
    %p13 = scmp.ge.s32.totalorder %s12, 4
    %s19 = sphi 0, %s31
    %s20 = sphi 0, %s27
    %s21 = sphi 0, %s19
    %s22 = sphi 0, %s20
    %s23 = sphi 0, %s21
    %s24 = sphi 0, %s22
    %s36 = sphi 0, %s38
    %s39 = sphi 0, %s36
    %s40 = sphi 0, %s39
    %s56 = sphi 0, %s40
    %s62 = sphi 0, %s64
    %s65 = sphi 0, %s62
    %s66 = sphi 0, %s65
    %s82 = sphi 0, %s66
    %s86 = sphi 0, %s86
    %s88 = sphi 0, %s86
    %s89 = sphi 0, %s88
    %s103 = sphi 0, %s89
    %s107 = sphi 0, %s107
    %s109 = sphi 0, %s107
    %s110 = sphi 0, %s109
    %s124 = sphi 0, %s110
    %s132 = sphi 0, %s134
    %s135 = sphi 0, %s132
    %s136 = sphi 0, %s135
    %s152 = sphi 0, %s136
    %s160 = sphi 0, %s162
    %s163 = sphi 0, %s160
    %s164 = sphi 0, %s163
    %s180 = sphi 0, %s164
  $region4: #{temporal_conv_block.4} parent=0 // loop_header_branch
    %15 = sbr.rel (%p13) target = $region8
  $region5: #{temporal_conv_block.4} parent=0 // loop_body
    %s17 = ssub.s32 %s12, 1
    %s18 = ssub.s32 %s12, 2
    %s25 = sadd.s32 1, %s20
    %p26 = scmp.ge.s32.totalorder %s25, 1
    %s27 = scalar_select %p26, 0, %s25
    %s28 = sadd.s32 1, %s19
    %s29 = scalar_select %p26, %s28, %s19
    %p30 = scmp.ge.s32.totalorder %s29, 2
    %s31 = scalar_select %p30, 0, %s29
    %s32 = ssub.s32 %s19, %s31
    %s33 = ssub.s32 %s20, %s27
    %s34 = sor.u32 %s32, %s33
    %p35 = scmp.eq.s32.totalorder %s34, 0
    %s37 = sadd.s32 %s36, 1
    %s38 = scalar_select %p35, %s36, %s37
    %p41 = pneg %p35
    %p42 = scmp.eq.s32.totalorder %s12, 1
    %p43 = por %p41, %p42
    %p44 = scmp.ne.s32.totalorder %s36, %s39
    %p45 = scmp.eq.s32.totalorder %s12, 0
    %p46 = por %p44, %p45
    %p47 = scmp.ne.s32.totalorder %s36, %s39
    %p48 = scmp.eq.s32.totalorder %s17, 1
    %p49 = por %p47, %p48
    %p50 = scmp.ne.s32.totalorder %s39, %s40
    %p51 = scmp.eq.s32.totalorder %s17, 0
    %p52 = por %p50, %p51
    %p53 = scmp.ne.s32.totalorder %s39, %s40
    %p54 = scmp.eq.s32.totalorder %s18, 1
    %p55 = por %p53, %p54
    %p57 = scmp.ne.s32.totalorder %s40, %s56
    %p58 = scmp.eq.s32.totalorder %s18, 0
    %p59 = por %p57, %p58
    %s60 = ssub.s32 %s19, %s31
    %p61 = scmp.eq.s32.totalorder %s60, 0
    %s63 = sadd.s32 %s62, 1
    %s64 = scalar_select %p61, %s62, %s63
    %p67 = pneg %p61
    %p68 = scmp.eq.s32.totalorder %s12, 1
    %p69 = por %p67, %p68
    %p70 = scmp.ne.s32.totalorder %s62, %s65
    %p71 = scmp.eq.s32.totalorder %s12, 0
    %p72 = por %p70, %p71
    %p73 = scmp.ne.s32.totalorder %s62, %s65
    %p74 = scmp.eq.s32.totalorder %s17, 1
    %p75 = por %p73, %p74
    %p76 = scmp.ne.s32.totalorder %s65, %s66
    %p77 = scmp.eq.s32.totalorder %s17, 0
    %p78 = por %p76, %p77
    %p79 = scmp.ne.s32.totalorder %s65, %s66
    %p80 = scmp.eq.s32.totalorder %s18, 1
    %p81 = por %p79, %p80
    %p83 = scmp.ne.s32.totalorder %s66, %s82
    %p84 = scmp.eq.s32.totalorder %s18, 0
    %p85 = por %p83, %p84
    %s87 = sadd.s32 %s86, 1
    %p90 = scmp.eq.s32.totalorder %s12, 1
    %p91 = scmp.ne.s32.totalorder %s86, %s88
    %p92 = scmp.eq.s32.totalorder %s12, 0
    %p93 = por %p91, %p92
    %p94 = scmp.ne.s32.totalorder %s86, %s88
    %p95 = scmp.eq.s32.totalorder %s17, 1
    %p96 = por %p94, %p95
    %p97 = scmp.ne.s32.totalorder %s88, %s89
    %p98 = scmp.eq.s32.totalorder %s17, 0
    %p99 = por %p97, %p98
    %p100 = scmp.ne.s32.totalorder %s88, %s89
    %p101 = scmp.eq.s32.totalorder %s18, 1
    %p102 = por %p100, %p101
    %p104 = scmp.ne.s32.totalorder %s89, %s103
    %p105 = scmp.eq.s32.totalorder %s18, 0
    %p106 = por %p104, %p105
    %s108 = sadd.s32 %s107, 1
    %p111 = scmp.eq.s32.totalorder %s12, 1
    %p112 = scmp.ne.s32.totalorder %s107, %s109
    %p113 = scmp.eq.s32.totalorder %s12, 0
    %p114 = por %p112, %p113
    %p115 = scmp.ne.s32.totalorder %s107, %s109
    %p116 = scmp.eq.s32.totalorder %s17, 1
    %p117 = por %p115, %p116
    %p118 = scmp.ne.s32.totalorder %s109, %s110
    %p119 = scmp.eq.s32.totalorder %s17, 0
    %p120 = por %p118, %p119
    %p121 = scmp.ne.s32.totalorder %s109, %s110
    %p122 = scmp.eq.s32.totalorder %s18, 1
    %p123 = por %p121, %p122
    %p125 = scmp.ne.s32.totalorder %s110, %s124
    %p126 = scmp.eq.s32.totalorder %s18, 0
    %p127 = por %p125, %p126
    %s128 = ssub.s32 %s19, %s31
    %s129 = ssub.s32 %s20, %s27
    %s130 = sor.u32 %s128, %s129
    %p131 = scmp.eq.s32.totalorder %s130, 0
    %s133 = sadd.s32 %s132, 1
    %s134 = scalar_select %p131, %s132, %s133
    %p137 = pneg %p131
    %p138 = scmp.eq.s32.totalorder %s12, 1
    %p139 = por %p137, %p138
    %p140 = scmp.ne.s32.totalorder %s132, %s135
    %p141 = scmp.eq.s32.totalorder %s12, 0
    %p142 = por %p140, %p141
    %p143 = scmp.ne.s32.totalorder %s132, %s135
    %p144 = scmp.eq.s32.totalorder %s17, 1
    %p145 = por %p143, %p144
    %p146 = scmp.ne.s32.totalorder %s135, %s136
    %p147 = scmp.eq.s32.totalorder %s17, 0
    %p148 = por %p146, %p147
    %p149 = scmp.ne.s32.totalorder %s135, %s136
    %p150 = scmp.eq.s32.totalorder %s18, 1
    %p151 = por %p149, %p150
    %p153 = scmp.ne.s32.totalorder %s136, %s152
    %p154 = scmp.eq.s32.totalorder %s18, 0
    %p155 = por %p153, %p154
    %s156 = ssub.s32 %s19, %s31
    %s157 = ssub.s32 %s20, %s27
    %s158 = sor.u32 %s156, %s157
    %p159 = scmp.eq.s32.totalorder %s158, 0
    %s161 = sadd.s32 %s160, 1
    %s162 = scalar_select %p159, %s160, %s161
    %p165 = pneg %p159
    %p166 = scmp.eq.s32.totalorder %s12, 1
    %p167 = por %p165, %p166
    %p168 = scmp.ne.s32.totalorder %s160, %s163
    %p169 = scmp.eq.s32.totalorder %s12, 0
    %p170 = por %p168, %p169
    %p171 = scmp.ne.s32.totalorder %s160, %s163
    %p172 = scmp.eq.s32.totalorder %s17, 1
    %p173 = por %p171, %p172
    %p174 = scmp.ne.s32.totalorder %s163, %s164
    %p175 = scmp.eq.s32.totalorder %s17, 0
    %p176 = por %p174, %p175
    %p177 = scmp.ne.s32.totalorder %s163, %s164
    %p178 = scmp.eq.s32.totalorder %s18, 1
    %p179 = por %p177, %p178
    %p181 = scmp.ne.s32.totalorder %s164, %s180
    %p182 = scmp.eq.s32.totalorder %s18, 0
    %p183 = por %p181, %p182
    %p184 = scmp.le.s32.totalorder 1, %s12
    %p185 = scmp.lt.s32.totalorder %s12, 3
    %p186 = pnand %p184, %p185
    %p187 = pneg %p186
    // Predicated region
    $region9: #{temporal_conv_block.4} parent=5 // pred_check
      _
    $region10: #{temporal_conv_block.4} parent=5 // pred_check_branch
      %189 = sbr.rel (%p186) target = $region12
    $region11: #{temporal_conv_block.4} parent=5 // pred_region
      %s190 = ssub.s32 %s12, 1
      // Predicated region
      $region13: #{temporal_conv_block.4} parent=11 // pred_check
        %p191 = pneg %p99
      $region14: #{temporal_conv_block.4} parent=11 // pred_check_branch
        %193 = sbr.rel (%p191) target = $region16
      $region15: #{temporal_conv_block.4} parent=11 // pred_region
        _
      $region16: #{temporal_conv_block.4} parent=11 // pred_fallthru
        _
      // Predicated region
      $region17: #{temporal_conv_block.4} parent=11 // pred_check
        %p194 = pneg %p120
      $region18: #{temporal_conv_block.4} parent=11 // pred_check_branch
        %196 = sbr.rel (%p194) target = $region20
      $region19: #{temporal_conv_block.4} parent=11 // pred_region
        _
      $region20: #{temporal_conv_block.4} parent=11 // pred_fallthru
        _
    $region12: #{temporal_conv_block.4} parent=5 // pred_fallthru
      _
    %p197 = scmp.lt.s32.totalorder %s12, 2
    // Predicated region
    $region21: #{temporal_conv_block.4} parent=5 // pred_check
      %p198 = pneg %p197
    $region22: #{temporal_conv_block.4} parent=5 // pred_check_branch
      %200 = sbr.rel (%p198) target = $region24
    $region23: #{temporal_conv_block.4} parent=5 // pred_region
      // Predicated region
      $region25: #{temporal_conv_block.4} parent=23 // pred_check
        %p201 = pneg %p46
      $region26: #{temporal_conv_block.4} parent=23 // pred_check_branch
        %203 = sbr.rel (%p201) target = $region28
      $region27: #{temporal_conv_block.4} parent=23 // pred_region
        %s204 = smul.u32 8, %s20
        %p205 = scmp.lt.s32.totalorder %s19, 1
        %s206 = scalar_select %p205, %s19, 1
        %p207 = scmp.lt.s32.totalorder %s204, 7
        %s208 = scalar_select %p207, %s204, 7
        %s209 = smul.addr %s206, 32
        %s210 = sadd.s32 %s208, %s209
        %s211 = smul.addr %s210, 8
        %s212 = scalar_lea.vmem %s0, %s211
        %s213 = smul.u32 8, %s20
      $region28: #{temporal_conv_block.4} parent=23 // pred_fallthru
        _
      // Predicated region
      $region29: #{temporal_conv_block.4} parent=23 // pred_check
        %p214 = pneg %p72
      $region30: #{temporal_conv_block.4} parent=23 // pred_check_branch
        %216 = sbr.rel (%p214) target = $region32
      $region31: #{temporal_conv_block.4} parent=23 // pred_region
        %p217 = scmp.lt.s32.totalorder %s19, 1
        %s218 = scalar_select %p217, %s19, 1
        %s219 = smul.addr %s218, 2
        %s220 = scalar_lea.vmem %s1, %s219
      $region32: #{temporal_conv_block.4} parent=23 // pred_fallthru
        _
    $region24: #{temporal_conv_block.4} parent=5 // pred_fallthru
      _
    %p221 = scmp.le.s32.totalorder 1, %s12
    %p222 = scmp.lt.s32.totalorder %s12, 3
    %p223 = pnand %p221, %p222
    %p224 = pneg %p223
    // Predicated region
    $region33: #{temporal_conv_block.4} parent=5 // pred_check
      _
    $region34: #{temporal_conv_block.4} parent=5 // pred_check_branch
      %226 = sbr.rel (%p223) target = $region36
    $region35: #{temporal_conv_block.4} parent=5 // pred_region
      %s227 = ssub.s32 %s12, 1
      %s228 = smul.u32 8, %s22
      %p229 = scmp.lt.s32.totalorder %s21, 1
      %s230 = scalar_select %p229, %s21, 1
      %p231 = scmp.lt.s32.totalorder %s228, 7
      %s232 = scalar_select %p231, %s228, 7
      %s233 = smul.addr %s230, 32
      %s234 = sadd.s32 %s232, %s233
      %s235 = smul.addr %s234, 8
      %s236 = scalar_lea.vmem %s0, %s235
      %p237 = pneg %p52
      %p238 = pneg %p49
      %p239 = scmp.lt.s32.totalorder %s21, 1
      %s240 = scalar_select %p239, %s21, 1
      %s241 = smul.addr %s240, 2
      %s242 = scalar_lea.vmem %s1, %s241
      %p243 = pneg %p78
      %p244 = pneg %p75
      %p245 = pneg %p99
      %p246 = pneg %p96
      %p247 = pneg %p120
      %p248 = pneg %p117
      %p249 = pneg %p148
      %p250 = pneg %p145
      %s251 = smul.u32 8, %s22
      %p252 = scmp.lt.s32.totalorder %s21, 1
      %s253 = scalar_select %p252, %s21, 1
      %p254 = scmp.lt.s32.totalorder %s251, 7
      %s255 = scalar_select %p254, %s251, 7
      %s256 = smul.addr %s253, 32
      %s257 = sadd.s32 %s255, %s256
      %s258 = smul.addr %s257, 4
      %s259 = scalar_lea.vmem %s4, %s258
      %p260 = pneg %p176
      %p261 = pneg %p173
      %p262 = scmp.lt.s32.totalorder %s21, 1
      %s263 = scalar_select %p262, %s21, 1
      %p264 = scmp.lt.s32.totalorder %s22, 0
      %s265 = scalar_select %p264, %s22, 0
      %s266 = sadd.s32 %s265, %s263
      %s267 = smul.addr %s266, 2
      %s268 = scalar_lea.vmem %s5, %s267
      %s269 = smul.u32 8, %s22
      %p270 = scmp.lt.s32.totalorder %s21, 1
      %s271 = scalar_select %p270, %s21, 1
      %p272 = scmp.lt.s32.totalorder %s269, 7
      %s273 = scalar_select %p272, %s269, 7
      %s274 = smul.addr %s271, 32
      %s275 = sadd.s32 %s273, %s274
      %s276 = smul.addr %s275, 8
      %s277 = scalar_lea.vmem %s0, %s276
      %s278 = smul.u32 8, %s22
      %p279 = scmp.lt.s32.totalorder %s21, 1
      %s280 = scalar_select %p279, %s21, 1
      %s281 = smul.addr %s280, 2
      %s282 = scalar_lea.vmem %s1, %s281
      %s283 = smul.u32 8, %s22
      %p284 = scmp.lt.s32.totalorder %s21, 1
      %s285 = scalar_select %p284, %s21, 1
      %p286 = scmp.lt.s32.totalorder %s283, 7
      %s287 = scalar_select %p286, %s283, 7
      %s288 = smul.addr %s285, 32
      %s289 = sadd.s32 %s287, %s288
      %s290 = smul.addr %s289, 4
      %s291 = scalar_lea.vmem %s4, %s290
      %s292 = smul.u32 8, %s22
      %p293 = scmp.lt.s32.totalorder %s21, 1
      %s294 = scalar_select %p293, %s21, 1
      %p295 = scmp.lt.s32.totalorder %s22, 0
      %s296 = scalar_select %p295, %s22, 0
      %s297 = sadd.s32 %s296, %s294
      %s298 = smul.addr %s297, 2
      %s299 = scalar_lea.vmem %s5, %s298
      %v300 = vld [vmem:[%s282] sm:$0x1]
      %v301 = vld [vmem:[%s282 + $0x1] sm:$0x1]
      %v302 = vld [vmem:[%s277] sm:$0xff]
      %v303 = vld [vmem:[%s277 + $0x8] sm:$0xff]
      %v304 = vld [vmem:[%s277 + $0x10] sm:$0xff]
      %v305 = vld [vmem:[%s277 + $0x18] sm:$0xff]
      %v306 = vld [vmem:[%s277 + $0x20] sm:$0xff]
      %v307 = vld [vmem:[%s277 + $0x28] sm:$0xff]
      %v308 = vld [vmem:[%s277 + $0x30] sm:$0xff]
      %v309 = vld [vmem:[%s277 + $0x38] sm:$0xff]
      %v310 = vld [vmem:[%s277 + $0x40] sm:$0xff]
      %v311 = vld [vmem:[%s277 + $0x48] sm:$0xff]
      %v312 = vld [vmem:[%s277 + $0x50] sm:$0xff]
      %v313 = vld [vmem:[%s277 + $0x58] sm:$0xff]
      %v314 = vld [vmem:[%s277 + $0x60] sm:$0xff]
      %v315 = vld [vmem:[%s277 + $0x68] sm:$0xff]
      %v316 = vld [vmem:[%s277 + $0x70] sm:$0xff]
      %v317 = vld [vmem:[%s277 + $0x78] sm:$0xff]
      %v318 = vld [vmem:[%s277 + $0x80] sm:$0xff]
      %v319 = vld [vmem:[%s277 + $0x88] sm:$0xff]
      %v320 = vld [vmem:[%s277 + $0x90] sm:$0xff]
      %v321 = vld [vmem:[%s277 + $0x98] sm:$0xff]
      %v322 = vld [vmem:[%s277 + $0xa0] sm:$0xff]
      %v323 = vld [vmem:[%s277 + $0xa8] sm:$0xff]
      %v324 = vld [vmem:[%s277 + $0xb0] sm:$0xff]
      %v325 = vld [vmem:[%s277 + $0xb8] sm:$0xff]
      %v326 = vld [vmem:[%s277 + $0xc0] sm:$0xff]
      %v327 = vld [vmem:[%s277 + $0xc8] sm:$0xff]
      %v328 = vld [vmem:[%s277 + $0xd0] sm:$0xff]
      %v329 = vld [vmem:[%s277 + $0xd8] sm:$0xff]
      %v330 = vld [vmem:[%s277 + $0xe0] sm:$0xff]
      %v331 = vld [vmem:[%s277 + $0xe8] sm:$0xff]
      %v332 = vld [vmem:[%s277 + $0xf0] sm:$0xff]
      %v333 = vld [vmem:[%s277 + $0xf8] sm:$0xff]
      %v334 = vperm.slane %v300, 0
      %v335 = vmul.f32 %v302, %v334
      %v336 = vmul.f32 %v303, %v334
      %v337 = vmul.f32 %v304, %v334
      %v338 = vmul.f32 %v305, %v334
      %v339 = vmul.f32 %v306, %v334
      %v340 = vmul.f32 %v307, %v334
      %v341 = vmul.f32 %v308, %v334
      %v342 = vmul.f32 %v309, %v334
      %v343 = vmul.f32 %v310, %v334
      %v344 = vmul.f32 %v311, %v334
      %v345 = vmul.f32 %v312, %v334
      %v346 = vmul.f32 %v313, %v334
      %v347 = vmul.f32 %v314, %v334
      %v348 = vmul.f32 %v315, %v334
      %v349 = vmul.f32 %v316, %v334
      %v350 = vmul.f32 %v317, %v334
      %v351 = vmul.f32 %v318, %v334
      %v352 = vmul.f32 %v319, %v334
      %v353 = vmul.f32 %v320, %v334
      %v354 = vmul.f32 %v321, %v334
      %v355 = vmul.f32 %v322, %v334
      %v356 = vmul.f32 %v323, %v334
      %v357 = vmul.f32 %v324, %v334
      %v358 = vmul.f32 %v325, %v334
      %v359 = vmul.f32 %v326, %v334
      %v360 = vmul.f32 %v327, %v334
      %v361 = vmul.f32 %v328, %v334
      %v362 = vmul.f32 %v329, %v334
      %v363 = vmul.f32 %v330, %v334
      %v364 = vmul.f32 %v331, %v334
      %v365 = vmul.f32 %v332, %v334
      %v366 = vmul.f32 %v333, %v334
      %v367 = vperm.slane %v301, 0
      %v368 = vadd.f32 %v335, %v367
      %v369 = vadd.f32 %v336, %v367
      %v370 = vadd.f32 %v337, %v367
      %v371 = vadd.f32 %v338, %v367
      %v372 = vadd.f32 %v339, %v367
      %v373 = vadd.f32 %v340, %v367
      %v374 = vadd.f32 %v341, %v367
      %v375 = vadd.f32 %v342, %v367
      %v376 = vadd.f32 %v343, %v367
      %v377 = vadd.f32 %v344, %v367
      %v378 = vadd.f32 %v345, %v367
      %v379 = vadd.f32 %v346, %v367
      %v380 = vadd.f32 %v347, %v367
      %v381 = vadd.f32 %v348, %v367
      %v382 = vadd.f32 %v349, %v367
      %v383 = vadd.f32 %v350, %v367
      %v384 = vadd.f32 %v351, %v367
      %v385 = vadd.f32 %v352, %v367
      %v386 = vadd.f32 %v353, %v367
      %v387 = vadd.f32 %v354, %v367
      %v388 = vadd.f32 %v355, %v367
      %v389 = vadd.f32 %v356, %v367
      %v390 = vadd.f32 %v357, %v367
      %v391 = vadd.f32 %v358, %v367
      %v392 = vadd.f32 %v359, %v367
      %v393 = vadd.f32 %v360, %v367
      %v394 = vadd.f32 %v361, %v367
      %v395 = vadd.f32 %v362, %v367
      %v396 = vadd.f32 %v363, %v367
      %v397 = vadd.f32 %v364, %v367
      %v398 = vadd.f32 %v365, %v367
      %v399 = vadd.f32 %v366, %v367
      %v400 = vxor.u32 %v368, 2147483648
      %v401 = vxor.u32 %v369, 2147483648
      %v402 = vxor.u32 %v370, 2147483648
      %v403 = vxor.u32 %v371, 2147483648
      %v404 = vxor.u32 %v372, 2147483648
      %v405 = vxor.u32 %v373, 2147483648
      %v406 = vxor.u32 %v374, 2147483648
      %v407 = vxor.u32 %v375, 2147483648
      %v408 = vxor.u32 %v376, 2147483648
      %v409 = vxor.u32 %v377, 2147483648
      %v410 = vxor.u32 %v378, 2147483648
      %v411 = vxor.u32 %v379, 2147483648
      %v412 = vxor.u32 %v380, 2147483648
      %v413 = vxor.u32 %v381, 2147483648
      %v414 = vxor.u32 %v382, 2147483648
      %v415 = vxor.u32 %v383, 2147483648
      %v416 = vxor.u32 %v384, 2147483648
      %v417 = vxor.u32 %v385, 2147483648
      %v418 = vxor.u32 %v386, 2147483648
      %v419 = vxor.u32 %v387, 2147483648
      %v420 = vxor.u32 %v388, 2147483648
      %v421 = vxor.u32 %v389, 2147483648
      %v422 = vxor.u32 %v390, 2147483648
      %v423 = vxor.u32 %v391, 2147483648
      %v424 = vxor.u32 %v392, 2147483648
      %v425 = vxor.u32 %v393, 2147483648
      %v426 = vxor.u32 %v394, 2147483648
      %v427 = vxor.u32 %v395, 2147483648
      %v428 = vxor.u32 %v396, 2147483648
      %v429 = vxor.u32 %v397, 2147483648
      %v430 = vxor.u32 %v398, 2147483648
      %v431 = vxor.u32 %v399, 2147483648
      %v432 = vmul.f32 %v400, 1.442695
      %v433 = vpow.pop %v432
      %v434 = vmul.f32 %v401, 1.442695
      %v435 = vpow.pop %v434
      %v436 = vmul.f32 %v402, 1.442695
      %v437 = vpow.pop %v436
      %v438 = vmul.f32 %v403, 1.442695
      %v439 = vpow.pop %v438
      %v440 = vmul.f32 %v404, 1.442695
      %v441 = vpow.pop %v440
      %v442 = vmul.f32 %v405, 1.442695
      %v443 = vpow.pop %v442
      %v444 = vmul.f32 %v406, 1.442695
      %v445 = vpow.pop %v444
      %v446 = vmul.f32 %v407, 1.442695
      %v447 = vpow.pop %v446
      %v448 = vmul.f32 %v408, 1.442695
      %v449 = vpow.pop %v448
      %v450 = vmul.f32 %v409, 1.442695
      %v451 = vpow.pop %v450
      %v452 = vmul.f32 %v410, 1.442695
      %v453 = vpow.pop %v452
      %v454 = vmul.f32 %v411, 1.442695
      %v455 = vpow.pop %v454
      %v456 = vmul.f32 %v412, 1.442695
      %v457 = vpow.pop %v456
      %v458 = vmul.f32 %v413, 1.442695
      %v459 = vpow.pop %v458
      %v460 = vmul.f32 %v414, 1.442695
      %v461 = vpow.pop %v460
      %v462 = vmul.f32 %v415, 1.442695
      %v463 = vpow.pop %v462
      %v464 = vmul.f32 %v416, 1.442695
      %v465 = vpow.pop %v464
      %v466 = vmul.f32 %v417, 1.442695
      %v467 = vpow.pop %v466
      %v468 = vmul.f32 %v418, 1.442695
      %v469 = vpow.pop %v468
      %v470 = vmul.f32 %v419, 1.442695
      %v471 = vpow.pop %v470
      %v472 = vmul.f32 %v420, 1.442695
      %v473 = vpow.pop %v472
      %v474 = vmul.f32 %v421, 1.442695
      %v475 = vpow.pop %v474
      %v476 = vmul.f32 %v422, 1.442695
      %v477 = vpow.pop %v476
      %v478 = vmul.f32 %v423, 1.442695
      %v479 = vpow.pop %v478
      %v480 = vmul.f32 %v424, 1.442695
      %v481 = vpow.pop %v480
      %v482 = vmul.f32 %v425, 1.442695
      %v483 = vpow.pop %v482
      %v484 = vmul.f32 %v426, 1.442695
      %v485 = vpow.pop %v484
      %v486 = vmul.f32 %v427, 1.442695
      %v487 = vpow.pop %v486
      %v488 = vmul.f32 %v428, 1.442695
      %v489 = vpow.pop %v488
      %v490 = vmul.f32 %v429, 1.442695
      %v491 = vpow.pop %v490
      %v492 = vmul.f32 %v430, 1.442695
      %v493 = vpow.pop %v492
      %v494 = vmul.f32 %v431, 1.442695
      %v495 = vpow.pop %v494
      %v496 = vadd.f32 %v433, 1.0
      %v497 = vadd.f32 %v435, 1.0
      %v498 = vadd.f32 %v437, 1.0
      %v499 = vadd.f32 %v439, 1.0
      %v500 = vadd.f32 %v441, 1.0
      %v501 = vadd.f32 %v443, 1.0
      %v502 = vadd.f32 %v445, 1.0
      %v503 = vadd.f32 %v447, 1.0
      %v504 = vadd.f32 %v449, 1.0
      %v505 = vadd.f32 %v451, 1.0
      %v506 = vadd.f32 %v453, 1.0
      %v507 = vadd.f32 %v455, 1.0
      %v508 = vadd.f32 %v457, 1.0
      %v509 = vadd.f32 %v459, 1.0
      %v510 = vadd.f32 %v461, 1.0
      %v511 = vadd.f32 %v463, 1.0
      %v512 = vadd.f32 %v465, 1.0
      %v513 = vadd.f32 %v467, 1.0
      %v514 = vadd.f32 %v469, 1.0
      %v515 = vadd.f32 %v471, 1.0
      %v516 = vadd.f32 %v473, 1.0
      %v517 = vadd.f32 %v475, 1.0
      %v518 = vadd.f32 %v477, 1.0
      %v519 = vadd.f32 %v479, 1.0
      %v520 = vadd.f32 %v481, 1.0
      %v521 = vadd.f32 %v483, 1.0
      %v522 = vadd.f32 %v485, 1.0
      %v523 = vadd.f32 %v487, 1.0
      %v524 = vadd.f32 %v489, 1.0
      %v525 = vadd.f32 %v491, 1.0
      %v526 = vadd.f32 %v493, 1.0
      %v527 = vadd.f32 %v495, 1.0
      %v528 = vrcp.pop %v496
      %v529 = vmul.f32 %v496, %v528
      %v530 = vsub.f32 1.0, %v529
      %v531 = vmul.f32 %v528, %v530
      %v532 = vadd.f32 %v528, %v531
      %vm533 = vweird.f32 %v496
      %vm534 = vweird.f32 %v528
      %vm535 = vmor %vm533, %vm534
      %v536 = vsel %vm535, %v528, %v532
      %v537 = vand.u32 2147483647, %v496
      %vm538 = vcmp.eq.f32.partialorder %v537, 8.507059e+37
      %v539 = vand.u32 %v496, 2147483648
      %v540 = vor.u32 1.1754944e-38, %v539
      %v541 = vsel %vm538, %v540, %v536
      %v542 = vmul.f32 1.0, %v541
      %v543 = vrcp.pop %v497
      %v544 = vmul.f32 %v497, %v543
      %v545 = vsub.f32 1.0, %v544
      %v546 = vmul.f32 %v543, %v545
      %v547 = vadd.f32 %v543, %v546
      %vm548 = vweird.f32 %v497
      %vm549 = vweird.f32 %v543
      %vm550 = vmor %vm548, %vm549
      %v551 = vsel %vm550, %v543, %v547
      %v552 = vand.u32 2147483647, %v497
      %vm553 = vcmp.eq.f32.partialorder %v552, 8.507059e+37
      %v554 = vand.u32 %v497, 2147483648
      %v555 = vor.u32 1.1754944e-38, %v554
      %v556 = vsel %vm553, %v555, %v551
      %v557 = vmul.f32 1.0, %v556
      %v558 = vrcp.pop %v498
      %v559 = vmul.f32 %v498, %v558
      %v560 = vsub.f32 1.0, %v559
      %v561 = vmul.f32 %v558, %v560
      %v562 = vadd.f32 %v558, %v561
      %vm563 = vweird.f32 %v498
      %vm564 = vweird.f32 %v558
      %vm565 = vmor %vm563, %vm564
      %v566 = vsel %vm565, %v558, %v562
      %v567 = vand.u32 2147483647, %v498
      %vm568 = vcmp.eq.f32.partialorder %v567, 8.507059e+37
      %v569 = vand.u32 %v498, 2147483648
      %v570 = vor.u32 1.1754944e-38, %v569
      %v571 = vsel %vm568, %v570, %v566
      %v572 = vmul.f32 1.0, %v571
      %v573 = vrcp.pop %v499
      %v574 = vmul.f32 %v499, %v573
      %v575 = vsub.f32 1.0, %v574
      %v576 = vmul.f32 %v573, %v575
      %v577 = vadd.f32 %v573, %v576
      %vm578 = vweird.f32 %v499
      %vm579 = vweird.f32 %v573
      %vm580 = vmor %vm578, %vm579
      %v581 = vsel %vm580, %v573, %v577
      %v582 = vand.u32 2147483647, %v499
      %vm583 = vcmp.eq.f32.partialorder %v582, 8.507059e+37
      %v584 = vand.u32 %v499, 2147483648
      %v585 = vor.u32 1.1754944e-38, %v584
      %v586 = vsel %vm583, %v585, %v581
      %v587 = vmul.f32 1.0, %v586
      %v588 = vrcp.pop %v500
      %v589 = vmul.f32 %v500, %v588
      %v590 = vsub.f32 1.0, %v589
      %v591 = vmul.f32 %v588, %v590
      %v592 = vadd.f32 %v588, %v591
      %vm593 = vweird.f32 %v500
      %vm594 = vweird.f32 %v588
      %vm595 = vmor %vm593, %vm594
      %v596 = vsel %vm595, %v588, %v592
      %v597 = vand.u32 2147483647, %v500
      %vm598 = vcmp.eq.f32.partialorder %v597, 8.507059e+37
      %v599 = vand.u32 %v500, 2147483648
      %v600 = vor.u32 1.1754944e-38, %v599
      %v601 = vsel %vm598, %v600, %v596
      %v602 = vmul.f32 1.0, %v601
      %v603 = vrcp.pop %v501
      %v604 = vmul.f32 %v501, %v603
      %v605 = vsub.f32 1.0, %v604
      %v606 = vmul.f32 %v603, %v605
      %v607 = vadd.f32 %v603, %v606
      %vm608 = vweird.f32 %v501
      %vm609 = vweird.f32 %v603
      %vm610 = vmor %vm608, %vm609
      %v611 = vsel %vm610, %v603, %v607
      %v612 = vand.u32 2147483647, %v501
      %vm613 = vcmp.eq.f32.partialorder %v612, 8.507059e+37
      %v614 = vand.u32 %v501, 2147483648
      %v615 = vor.u32 1.1754944e-38, %v614
      %v616 = vsel %vm613, %v615, %v611
      %v617 = vmul.f32 1.0, %v616
      %v618 = vrcp.pop %v502
      %v619 = vmul.f32 %v502, %v618
      %v620 = vsub.f32 1.0, %v619
      %v621 = vmul.f32 %v618, %v620
      %v622 = vadd.f32 %v618, %v621
      %vm623 = vweird.f32 %v502
      %vm624 = vweird.f32 %v618
      %vm625 = vmor %vm623, %vm624
      %v626 = vsel %vm625, %v618, %v622
      %v627 = vand.u32 2147483647, %v502
      %vm628 = vcmp.eq.f32.partialorder %v627, 8.507059e+37
      %v629 = vand.u32 %v502, 2147483648
      %v630 = vor.u32 1.1754944e-38, %v629
      %v631 = vsel %vm628, %v630, %v626
      %v632 = vmul.f32 1.0, %v631
      %v633 = vrcp.pop %v503
      %v634 = vmul.f32 %v503, %v633
      %v635 = vsub.f32 1.0, %v634
      %v636 = vmul.f32 %v633, %v635
      %v637 = vadd.f32 %v633, %v636
      %vm638 = vweird.f32 %v503
      %vm639 = vweird.f32 %v633
      %vm640 = vmor %vm638, %vm639
      %v641 = vsel %vm640, %v633, %v637
      %v642 = vand.u32 2147483647, %v503
      %vm643 = vcmp.eq.f32.partialorder %v642, 8.507059e+37
      %v644 = vand.u32 %v503, 2147483648
      %v645 = vor.u32 1.1754944e-38, %v644
      %v646 = vsel %vm643, %v645, %v641
      %v647 = vmul.f32 1.0, %v646
      %v648 = vrcp.pop %v504
      %v649 = vmul.f32 %v504, %v648
      %v650 = vsub.f32 1.0, %v649
      %v651 = vmul.f32 %v648, %v650
      %v652 = vadd.f32 %v648, %v651
      %vm653 = vweird.f32 %v504
      %vm654 = vweird.f32 %v648
      %vm655 = vmor %vm653, %vm654
      %v656 = vsel %vm655, %v648, %v652
      %v657 = vand.u32 2147483647, %v504
      %vm658 = vcmp.eq.f32.partialorder %v657, 8.507059e+37
      %v659 = vand.u32 %v504, 2147483648
      %v660 = vor.u32 1.1754944e-38, %v659
      %v661 = vsel %vm658, %v660, %v656
      %v662 = vmul.f32 1.0, %v661
      %v663 = vrcp.pop %v505
      %v664 = vmul.f32 %v505, %v663
      %v665 = vsub.f32 1.0, %v664
      %v666 = vmul.f32 %v663, %v665
      %v667 = vadd.f32 %v663, %v666
      %vm668 = vweird.f32 %v505
      %vm669 = vweird.f32 %v663
      %vm670 = vmor %vm668, %vm669
      %v671 = vsel %vm670, %v663, %v667
      %v672 = vand.u32 2147483647, %v505
      %vm673 = vcmp.eq.f32.partialorder %v672, 8.507059e+37
      %v674 = vand.u32 %v505, 2147483648
      %v675 = vor.u32 1.1754944e-38, %v674
      %v676 = vsel %vm673, %v675, %v671
      %v677 = vmul.f32 1.0, %v676
      %v678 = vrcp.pop %v506
      %v679 = vmul.f32 %v506, %v678
      %v680 = vsub.f32 1.0, %v679
      %v681 = vmul.f32 %v678, %v680
      %v682 = vadd.f32 %v678, %v681
      %vm683 = vweird.f32 %v506
      %vm684 = vweird.f32 %v678
      %vm685 = vmor %vm683, %vm684
      %v686 = vsel %vm685, %v678, %v682
      %v687 = vand.u32 2147483647, %v506
      %vm688 = vcmp.eq.f32.partialorder %v687, 8.507059e+37
      %v689 = vand.u32 %v506, 2147483648
      %v690 = vor.u32 1.1754944e-38, %v689
      %v691 = vsel %vm688, %v690, %v686
      %v692 = vmul.f32 1.0, %v691
      %v693 = vrcp.pop %v507
      %v694 = vmul.f32 %v507, %v693
      %v695 = vsub.f32 1.0, %v694
      %v696 = vmul.f32 %v693, %v695
      %v697 = vadd.f32 %v693, %v696
      %vm698 = vweird.f32 %v507
      %vm699 = vweird.f32 %v693
      %vm700 = vmor %vm698, %vm699
      %v701 = vsel %vm700, %v693, %v697
      %v702 = vand.u32 2147483647, %v507
      %vm703 = vcmp.eq.f32.partialorder %v702, 8.507059e+37
      %v704 = vand.u32 %v507, 2147483648
      %v705 = vor.u32 1.1754944e-38, %v704
      %v706 = vsel %vm703, %v705, %v701
      %v707 = vmul.f32 1.0, %v706
      %v708 = vrcp.pop %v508
      %v709 = vmul.f32 %v508, %v708
      %v710 = vsub.f32 1.0, %v709
      %v711 = vmul.f32 %v708, %v710
      %v712 = vadd.f32 %v708, %v711
      %vm713 = vweird.f32 %v508
      %vm714 = vweird.f32 %v708
      %vm715 = vmor %vm713, %vm714
      %v716 = vsel %vm715, %v708, %v712
      %v717 = vand.u32 2147483647, %v508
      %vm718 = vcmp.eq.f32.partialorder %v717, 8.507059e+37
      %v719 = vand.u32 %v508, 2147483648
      %v720 = vor.u32 1.1754944e-38, %v719
      %v721 = vsel %vm718, %v720, %v716
      %v722 = vmul.f32 1.0, %v721
      %v723 = vrcp.pop %v509
      %v724 = vmul.f32 %v509, %v723
      %v725 = vsub.f32 1.0, %v724
      %v726 = vmul.f32 %v723, %v725
      %v727 = vadd.f32 %v723, %v726
      %vm728 = vweird.f32 %v509
      %vm729 = vweird.f32 %v723
      %vm730 = vmor %vm728, %vm729
      %v731 = vsel %vm730, %v723, %v727
      %v732 = vand.u32 2147483647, %v509
      %vm733 = vcmp.eq.f32.partialorder %v732, 8.507059e+37
      %v734 = vand.u32 %v509, 2147483648
      %v735 = vor.u32 1.1754944e-38, %v734
      %v736 = vsel %vm733, %v735, %v731
      %v737 = vmul.f32 1.0, %v736
      %v738 = vrcp.pop %v510
      %v739 = vmul.f32 %v510, %v738
      %v740 = vsub.f32 1.0, %v739
      %v741 = vmul.f32 %v738, %v740
      %v742 = vadd.f32 %v738, %v741
      %vm743 = vweird.f32 %v510
      %vm744 = vweird.f32 %v738
      %vm745 = vmor %vm743, %vm744
      %v746 = vsel %vm745, %v738, %v742
      %v747 = vand.u32 2147483647, %v510
      %vm748 = vcmp.eq.f32.partialorder %v747, 8.507059e+37
      %v749 = vand.u32 %v510, 2147483648
      %v750 = vor.u32 1.1754944e-38, %v749
      %v751 = vsel %vm748, %v750, %v746
      %v752 = vmul.f32 1.0, %v751
      %v753 = vrcp.pop %v511
      %v754 = vmul.f32 %v511, %v753
      %v755 = vsub.f32 1.0, %v754
      %v756 = vmul.f32 %v753, %v755
      %v757 = vadd.f32 %v753, %v756
      %vm758 = vweird.f32 %v511
      %vm759 = vweird.f32 %v753
      %vm760 = vmor %vm758, %vm759
      %v761 = vsel %vm760, %v753, %v757
      %v762 = vand.u32 2147483647, %v511
      %vm763 = vcmp.eq.f32.partialorder %v762, 8.507059e+37
      %v764 = vand.u32 %v511, 2147483648
      %v765 = vor.u32 1.1754944e-38, %v764
      %v766 = vsel %vm763, %v765, %v761
      %v767 = vmul.f32 1.0, %v766
      %v768 = vrcp.pop %v512
      %v769 = vmul.f32 %v512, %v768
      %v770 = vsub.f32 1.0, %v769
      %v771 = vmul.f32 %v768, %v770
      %v772 = vadd.f32 %v768, %v771
      %vm773 = vweird.f32 %v512
      %vm774 = vweird.f32 %v768
      %vm775 = vmor %vm773, %vm774
      %v776 = vsel %vm775, %v768, %v772
      %v777 = vand.u32 2147483647, %v512
      %vm778 = vcmp.eq.f32.partialorder %v777, 8.507059e+37
      %v779 = vand.u32 %v512, 2147483648
      %v780 = vor.u32 1.1754944e-38, %v779
      %v781 = vsel %vm778, %v780, %v776
      %v782 = vmul.f32 1.0, %v781
      %v783 = vrcp.pop %v513
      %v784 = vmul.f32 %v513, %v783
      %v785 = vsub.f32 1.0, %v784
      %v786 = vmul.f32 %v783, %v785
      %v787 = vadd.f32 %v783, %v786
      %vm788 = vweird.f32 %v513
      %vm789 = vweird.f32 %v783
      %vm790 = vmor %vm788, %vm789
      %v791 = vsel %vm790, %v783, %v787
      %v792 = vand.u32 2147483647, %v513
      %vm793 = vcmp.eq.f32.partialorder %v792, 8.507059e+37
      %v794 = vand.u32 %v513, 2147483648
      %v795 = vor.u32 1.1754944e-38, %v794
      %v796 = vsel %vm793, %v795, %v791
      %v797 = vmul.f32 1.0, %v796
      %v798 = vrcp.pop %v514
      %v799 = vmul.f32 %v514, %v798
      %v800 = vsub.f32 1.0, %v799
      %v801 = vmul.f32 %v798, %v800
      %v802 = vadd.f32 %v798, %v801
      %vm803 = vweird.f32 %v514
      %vm804 = vweird.f32 %v798
      %vm805 = vmor %vm803, %vm804
      %v806 = vsel %vm805, %v798, %v802
      %v807 = vand.u32 2147483647, %v514
      %vm808 = vcmp.eq.f32.partialorder %v807, 8.507059e+37
      %v809 = vand.u32 %v514, 2147483648
      %v810 = vor.u32 1.1754944e-38, %v809
      %v811 = vsel %vm808, %v810, %v806
      %v812 = vmul.f32 1.0, %v811
      %v813 = vrcp.pop %v515
      %v814 = vmul.f32 %v515, %v813
      %v815 = vsub.f32 1.0, %v814
      %v816 = vmul.f32 %v813, %v815
      %v817 = vadd.f32 %v813, %v816
      %vm818 = vweird.f32 %v515
      %vm819 = vweird.f32 %v813
      %vm820 = vmor %vm818, %vm819
      %v821 = vsel %vm820, %v813, %v817
      %v822 = vand.u32 2147483647, %v515
      %vm823 = vcmp.eq.f32.partialorder %v822, 8.507059e+37
      %v824 = vand.u32 %v515, 2147483648
      %v825 = vor.u32 1.1754944e-38, %v824
      %v826 = vsel %vm823, %v825, %v821
      %v827 = vmul.f32 1.0, %v826
      %v828 = vrcp.pop %v516
      %v829 = vmul.f32 %v516, %v828
      %v830 = vsub.f32 1.0, %v829
      %v831 = vmul.f32 %v828, %v830
      %v832 = vadd.f32 %v828, %v831
      %vm833 = vweird.f32 %v516
      %vm834 = vweird.f32 %v828
      %vm835 = vmor %vm833, %vm834
      %v836 = vsel %vm835, %v828, %v832
      %v837 = vand.u32 2147483647, %v516
      %vm838 = vcmp.eq.f32.partialorder %v837, 8.507059e+37
      %v839 = vand.u32 %v516, 2147483648
      %v840 = vor.u32 1.1754944e-38, %v839
      %v841 = vsel %vm838, %v840, %v836
      %v842 = vmul.f32 1.0, %v841
      %v843 = vrcp.pop %v517
      %v844 = vmul.f32 %v517, %v843
      %v845 = vsub.f32 1.0, %v844
      %v846 = vmul.f32 %v843, %v845
      %v847 = vadd.f32 %v843, %v846
      %vm848 = vweird.f32 %v517
      %vm849 = vweird.f32 %v843
      %vm850 = vmor %vm848, %vm849
      %v851 = vsel %vm850, %v843, %v847
      %v852 = vand.u32 2147483647, %v517
      %vm853 = vcmp.eq.f32.partialorder %v852, 8.507059e+37
      %v854 = vand.u32 %v517, 2147483648
      %v855 = vor.u32 1.1754944e-38, %v854
      %v856 = vsel %vm853, %v855, %v851
      %v857 = vmul.f32 1.0, %v856
      %v858 = vrcp.pop %v518
      %v859 = vmul.f32 %v518, %v858
      %v860 = vsub.f32 1.0, %v859
      %v861 = vmul.f32 %v858, %v860
      %v862 = vadd.f32 %v858, %v861
      %vm863 = vweird.f32 %v518
      %vm864 = vweird.f32 %v858
      %vm865 = vmor %vm863, %vm864
      %v866 = vsel %vm865, %v858, %v862
      %v867 = vand.u32 2147483647, %v518
      %vm868 = vcmp.eq.f32.partialorder %v867, 8.507059e+37
      %v869 = vand.u32 %v518, 2147483648
      %v870 = vor.u32 1.1754944e-38, %v869
      %v871 = vsel %vm868, %v870, %v866
      %v872 = vmul.f32 1.0, %v871
      %v873 = vrcp.pop %v519
      %v874 = vmul.f32 %v519, %v873
      %v875 = vsub.f32 1.0, %v874
      %v876 = vmul.f32 %v873, %v875
      %v877 = vadd.f32 %v873, %v876
      %vm878 = vweird.f32 %v519
      %vm879 = vweird.f32 %v873
      %vm880 = vmor %vm878, %vm879
      %v881 = vsel %vm880, %v873, %v877
      %v882 = vand.u32 2147483647, %v519
      %vm883 = vcmp.eq.f32.partialorder %v882, 8.507059e+37
      %v884 = vand.u32 %v519, 2147483648
      %v885 = vor.u32 1.1754944e-38, %v884
      %v886 = vsel %vm883, %v885, %v881
      %v887 = vmul.f32 1.0, %v886
      %v888 = vrcp.pop %v520
      %v889 = vmul.f32 %v520, %v888
      %v890 = vsub.f32 1.0, %v889
      %v891 = vmul.f32 %v888, %v890
      %v892 = vadd.f32 %v888, %v891
      %vm893 = vweird.f32 %v520
      %vm894 = vweird.f32 %v888
      %vm895 = vmor %vm893, %vm894
      %v896 = vsel %vm895, %v888, %v892
      %v897 = vand.u32 2147483647, %v520
      %vm898 = vcmp.eq.f32.partialorder %v897, 8.507059e+37
      %v899 = vand.u32 %v520, 2147483648
      %v900 = vor.u32 1.1754944e-38, %v899
      %v901 = vsel %vm898, %v900, %v896
      %v902 = vmul.f32 1.0, %v901
      %v903 = vrcp.pop %v521
      %v904 = vmul.f32 %v521, %v903
      %v905 = vsub.f32 1.0, %v904
      %v906 = vmul.f32 %v903, %v905
      %v907 = vadd.f32 %v903, %v906
      %vm908 = vweird.f32 %v521
      %vm909 = vweird.f32 %v903
      %vm910 = vmor %vm908, %vm909
      %v911 = vsel %vm910, %v903, %v907
      %v912 = vand.u32 2147483647, %v521
      %vm913 = vcmp.eq.f32.partialorder %v912, 8.507059e+37
      %v914 = vand.u32 %v521, 2147483648
      %v915 = vor.u32 1.1754944e-38, %v914
      %v916 = vsel %vm913, %v915, %v911
      %v917 = vmul.f32 1.0, %v916
      %v918 = vrcp.pop %v522
      %v919 = vmul.f32 %v522, %v918
      %v920 = vsub.f32 1.0, %v919
      %v921 = vmul.f32 %v918, %v920
      %v922 = vadd.f32 %v918, %v921
      %vm923 = vweird.f32 %v522
      %vm924 = vweird.f32 %v918
      %vm925 = vmor %vm923, %vm924
      %v926 = vsel %vm925, %v918, %v922
      %v927 = vand.u32 2147483647, %v522
      %vm928 = vcmp.eq.f32.partialorder %v927, 8.507059e+37
      %v929 = vand.u32 %v522, 2147483648
      %v930 = vor.u32 1.1754944e-38, %v929
      %v931 = vsel %vm928, %v930, %v926
      %v932 = vmul.f32 1.0, %v931
      %v933 = vrcp.pop %v523
      %v934 = vmul.f32 %v523, %v933
      %v935 = vsub.f32 1.0, %v934
      %v936 = vmul.f32 %v933, %v935
      %v937 = vadd.f32 %v933, %v936
      %vm938 = vweird.f32 %v523
      %vm939 = vweird.f32 %v933
      %vm940 = vmor %vm938, %vm939
      %v941 = vsel %vm940, %v933, %v937
      %v942 = vand.u32 2147483647, %v523
      %vm943 = vcmp.eq.f32.partialorder %v942, 8.507059e+37
      %v944 = vand.u32 %v523, 2147483648
      %v945 = vor.u32 1.1754944e-38, %v944
      %v946 = vsel %vm943, %v945, %v941
      %v947 = vmul.f32 1.0, %v946
      %v948 = vrcp.pop %v524
      %v949 = vmul.f32 %v524, %v948
      %v950 = vsub.f32 1.0, %v949
      %v951 = vmul.f32 %v948, %v950
      %v952 = vadd.f32 %v948, %v951
      %vm953 = vweird.f32 %v524
      %vm954 = vweird.f32 %v948
      %vm955 = vmor %vm953, %vm954
      %v956 = vsel %vm955, %v948, %v952
      %v957 = vand.u32 2147483647, %v524
      %vm958 = vcmp.eq.f32.partialorder %v957, 8.507059e+37
      %v959 = vand.u32 %v524, 2147483648
      %v960 = vor.u32 1.1754944e-38, %v959
      %v961 = vsel %vm958, %v960, %v956
      %v962 = vmul.f32 1.0, %v961
      %v963 = vrcp.pop %v525
      %v964 = vmul.f32 %v525, %v963
      %v965 = vsub.f32 1.0, %v964
      %v966 = vmul.f32 %v963, %v965
      %v967 = vadd.f32 %v963, %v966
      %vm968 = vweird.f32 %v525
      %vm969 = vweird.f32 %v963
      %vm970 = vmor %vm968, %vm969
      %v971 = vsel %vm970, %v963, %v967
      %v972 = vand.u32 2147483647, %v525
      %vm973 = vcmp.eq.f32.partialorder %v972, 8.507059e+37
      %v974 = vand.u32 %v525, 2147483648
      %v975 = vor.u32 1.1754944e-38, %v974
      %v976 = vsel %vm973, %v975, %v971
      %v977 = vmul.f32 1.0, %v976
      %v978 = vrcp.pop %v526
      %v979 = vmul.f32 %v526, %v978
      %v980 = vsub.f32 1.0, %v979
      %v981 = vmul.f32 %v978, %v980
      %v982 = vadd.f32 %v978, %v981
      %vm983 = vweird.f32 %v526
      %vm984 = vweird.f32 %v978
      %vm985 = vmor %vm983, %vm984
      %v986 = vsel %vm985, %v978, %v982
      %v987 = vand.u32 2147483647, %v526
      %vm988 = vcmp.eq.f32.partialorder %v987, 8.507059e+37
      %v989 = vand.u32 %v526, 2147483648
      %v990 = vor.u32 1.1754944e-38, %v989
      %v991 = vsel %vm988, %v990, %v986
      %v992 = vmul.f32 1.0, %v991
      %v993 = vrcp.pop %v527
      %v994 = vmul.f32 %v527, %v993
      %v995 = vsub.f32 1.0, %v994
      %v996 = vmul.f32 %v993, %v995
      %v997 = vadd.f32 %v993, %v996
      %vm998 = vweird.f32 %v527
      %vm999 = vweird.f32 %v993
      %vm1000 = vmor %vm998, %vm999
      %v1001 = vsel %vm1000, %v993, %v997
      %v1002 = vand.u32 2147483647, %v527
      %vm1003 = vcmp.eq.f32.partialorder %v1002, 8.507059e+37
      %v1004 = vand.u32 %v527, 2147483648
      %v1005 = vor.u32 1.1754944e-38, %v1004
      %v1006 = vsel %vm1003, %v1005, %v1001
      %v1007 = vmul.f32 1.0, %v1006
      %v1008 = vmul.f32 %v368, %v542
      %v1009 = vmul.f32 %v369, %v557
      %v1010 = vmul.f32 %v370, %v572
      %v1011 = vmul.f32 %v371, %v587
      %v1012 = vmul.f32 %v372, %v602
      %v1013 = vmul.f32 %v373, %v617
      %v1014 = vmul.f32 %v374, %v632
      %v1015 = vmul.f32 %v375, %v647
      %v1016 = vmul.f32 %v376, %v662
      %v1017 = vmul.f32 %v377, %v677
      %v1018 = vmul.f32 %v378, %v692
      %v1019 = vmul.f32 %v379, %v707
      %v1020 = vmul.f32 %v380, %v722
      %v1021 = vmul.f32 %v381, %v737
      %v1022 = vmul.f32 %v382, %v752
      %v1023 = vmul.f32 %v383, %v767
      %v1024 = vmul.f32 %v384, %v782
      %v1025 = vmul.f32 %v385, %v797
      %v1026 = vmul.f32 %v386, %v812
      %v1027 = vmul.f32 %v387, %v827
      %v1028 = vmul.f32 %v388, %v842
      %v1029 = vmul.f32 %v389, %v857
      %v1030 = vmul.f32 %v390, %v872
      %v1031 = vmul.f32 %v391, %v887
      %v1032 = vmul.f32 %v392, %v902
      %v1033 = vmul.f32 %v393, %v917
      %v1034 = vmul.f32 %v394, %v932
      %v1035 = vmul.f32 %v395, %v947
      %v1036 = vmul.f32 %v396, %v962
      %v1037 = vmul.f32 %v397, %v977
      %v1038 = vmul.f32 %v398, %v992
      %v1039 = vmul.f32 %v399, %v1007
      %v1040 = vpack.c.bf16 %v1008, %v1008
      %v1041 = vpack.c.bf16 %v1009, %v1009
      %v1042 = vpack.c.bf16 %v1010, %v1010
      %v1043 = vpack.c.bf16 %v1011, %v1011
      %v1044 = vpack.c.bf16 %v1012, %v1012
      %v1045 = vpack.c.bf16 %v1013, %v1013
      %v1046 = vpack.c.bf16 %v1014, %v1014
      %v1047 = vpack.c.bf16 %v1015, %v1015
      %v1048 = vpack.c.bf16 %v1016, %v1016
      %v1049 = vpack.c.bf16 %v1017, %v1017
      %v1050 = vpack.c.bf16 %v1018, %v1018
      %v1051 = vpack.c.bf16 %v1019, %v1019
      %v1052 = vpack.c.bf16 %v1020, %v1020
      %v1053 = vpack.c.bf16 %v1021, %v1021
      %v1054 = vpack.c.bf16 %v1022, %v1022
      %v1055 = vpack.c.bf16 %v1023, %v1023
      %v1056 = vpack.c.bf16 %v1024, %v1024
      %v1057 = vpack.c.bf16 %v1025, %v1025
      %v1058 = vpack.c.bf16 %v1026, %v1026
      %v1059 = vpack.c.bf16 %v1027, %v1027
      %v1060 = vpack.c.bf16 %v1028, %v1028
      %v1061 = vpack.c.bf16 %v1029, %v1029
      %v1062 = vpack.c.bf16 %v1030, %v1030
      %v1063 = vpack.c.bf16 %v1031, %v1031
      %v1064 = vpack.c.bf16 %v1032, %v1032
      %v1065 = vpack.c.bf16 %v1033, %v1033
      %v1066 = vpack.c.bf16 %v1034, %v1034
      %v1067 = vpack.c.bf16 %v1035, %v1035
      %v1068 = vpack.c.bf16 %v1036, %v1036
      %v1069 = vpack.c.bf16 %v1037, %v1037
      %v1070 = vpack.c.bf16 %v1038, %v1038
      %v1071 = vpack.c.bf16 %v1039, %v1039
      %v1072 = vld [vmem:[%s2] sm:$0xf]
      %v1073 = vld [vmem:[%s2 + $0x4] sm:$0xf]
      %v1074 = vld [vmem:[%s2 + $0x8] sm:$0xf]
      %v1075 = vld [vmem:[%s2 + $0xc] sm:$0xf]
      %v1076 = vld [vmem:[%s2 + $0x10] sm:$0xf]
      %v1077 = vld [vmem:[%s2 + $0x14] sm:$0xf]
      %v1078 = vld [vmem:[%s2 + $0x18] sm:$0xf]
      %v1079 = vld [vmem:[%s2 + $0x1c] sm:$0xf]
      %v1080 = vld [vmem:[%s2 + $0x20] sm:$0xf]
      %v1081 = vld [vmem:[%s2 + $0x24] sm:$0xf]
      %v1082 = vld [vmem:[%s2 + $0x28] sm:$0xf]
      %v1083 = vld [vmem:[%s2 + $0x2c] sm:$0xf]
      %v1084 = vld [vmem:[%s2 + $0x30] sm:$0xf]
      %v1085 = vld [vmem:[%s2 + $0x34] sm:$0xf]
      %v1086 = vld [vmem:[%s2 + $0x38] sm:$0xf]
      %v1087 = vld [vmem:[%s2 + $0x3c] sm:$0xf]
      %s1088 = scalar_lea.vmem %s2, 64
      %v1089 = vld [vmem:[%s1088] sm:$0xf]
      %v1090 = vld [vmem:[%s1088 + $0x4] sm:$0xf]
      %v1091 = vld [vmem:[%s1088 + $0x8] sm:$0xf]
      %v1092 = vld [vmem:[%s1088 + $0xc] sm:$0xf]
      %v1093 = vld [vmem:[%s1088 + $0x10] sm:$0xf]
      %v1094 = vld [vmem:[%s1088 + $0x14] sm:$0xf]
      %v1095 = vld [vmem:[%s1088 + $0x18] sm:$0xf]
      %v1096 = vld [vmem:[%s1088 + $0x1c] sm:$0xf]
      %v1097 = vld [vmem:[%s1088 + $0x20] sm:$0xf]
      %v1098 = vld [vmem:[%s1088 + $0x24] sm:$0xf]
      %v1099 = vld [vmem:[%s1088 + $0x28] sm:$0xf]
      %v1100 = vld [vmem:[%s1088 + $0x2c] sm:$0xf]
      %v1101 = vld [vmem:[%s1088 + $0x30] sm:$0xf]
      %v1102 = vld [vmem:[%s1088 + $0x34] sm:$0xf]
      %v1103 = vld [vmem:[%s1088 + $0x38] sm:$0xf]
      %v1104 = vld [vmem:[%s1088 + $0x3c] sm:$0xf]
      %s1105 = scalar_lea.vmem %s2, 128
      %v1106 = vld [vmem:[%s1105] sm:$0xf]
      %v1107 = vld [vmem:[%s1105 + $0x4] sm:$0xf]
      %v1108 = vld [vmem:[%s1105 + $0x8] sm:$0xf]
      %v1109 = vld [vmem:[%s1105 + $0xc] sm:$0xf]
      %v1110 = vld [vmem:[%s1105 + $0x10] sm:$0xf]
      %v1111 = vld [vmem:[%s1105 + $0x14] sm:$0xf]
      %v1112 = vld [vmem:[%s1105 + $0x18] sm:$0xf]
      %v1113 = vld [vmem:[%s1105 + $0x1c] sm:$0xf]
      %v1114 = vld [vmem:[%s1105 + $0x20] sm:$0xf]
      %v1115 = vld [vmem:[%s1105 + $0x24] sm:$0xf]
      %v1116 = vld [vmem:[%s1105 + $0x28] sm:$0xf]
      %v1117 = vld [vmem:[%s1105 + $0x2c] sm:$0xf]
      %v1118 = vld [vmem:[%s1105 + $0x30] sm:$0xf]
      %v1119 = vld [vmem:[%s1105 + $0x34] sm:$0xf]
      %v1120 = vld [vmem:[%s1105 + $0x38] sm:$0xf]
      %v1121 = vld [vmem:[%s1105 + $0x3c] sm:$0xf]
      %v1122 = vld [vmem:[%s3] sm:$0x1]
      %v1155 = vunpack.c.l.b16 %v1040
      %v1156 = vunpack.c.l.b16 %v1041
      %v1157 = vunpack.c.l.b16 %v1042
      %v1158 = vunpack.c.l.b16 %v1043
      %v1159 = vunpack.c.l.b16 %v1044
      %v1160 = vunpack.c.l.b16 %v1045
      %v1161 = vunpack.c.l.b16 %v1046
      %v1162 = vunpack.c.l.b16 %v1047
      %v1163 = vunpack.c.l.b16 %v1048
      %v1164 = vunpack.c.l.b16 %v1049
      %v1165 = vunpack.c.l.b16 %v1050
      %v1166 = vunpack.c.l.b16 %v1051
      %v1167 = vunpack.c.l.b16 %v1052
      %v1168 = vunpack.c.l.b16 %v1053
      %v1169 = vunpack.c.l.b16 %v1054
      %v1170 = vunpack.c.l.b16 %v1055
      %v1171 = vunpack.c.l.b16 %v1056
      %v1172 = vunpack.c.l.b16 %v1057
      %v1173 = vunpack.c.l.b16 %v1058
      %v1174 = vunpack.c.l.b16 %v1059
      %v1175 = vunpack.c.l.b16 %v1060
      %v1176 = vunpack.c.l.b16 %v1061
      %v1177 = vunpack.c.l.b16 %v1062
      %v1178 = vunpack.c.l.b16 %v1063
      %v1179 = vunpack.c.l.b16 %v1064
      %v1180 = vunpack.c.l.b16 %v1065
      %v1181 = vunpack.c.l.b16 %v1066
      %v1182 = vunpack.c.l.b16 %v1067
      %v1183 = vunpack.c.l.b16 %v1068
      %v1184 = vunpack.c.l.b16 %v1069
      %v1185 = vunpack.c.l.b16 %v1070
      %v1186 = vunpack.c.l.b16 %v1071
      %v1187 = vpack.c.b16 %v1156, %v1155
      %v1188 = vpack.c.b16 %v1158, %v1157
      %v1189 = vpack.c.b16 %v1160, %v1159
      %v1190 = vpack.c.b16 %v1162, %v1161
      %v1191 = vpack.c.b16 %v1164, %v1163
      %v1192 = vpack.c.b16 %v1166, %v1165
      %v1193 = vpack.c.b16 %v1168, %v1167
      %v1194 = vpack.c.b16 %v1170, %v1169
      %v1195 = vpack.c.b16 %v1172, %v1171
      %v1196 = vpack.c.b16 %v1174, %v1173
      %v1197 = vpack.c.b16 %v1176, %v1175
      %v1198 = vpack.c.b16 %v1178, %v1177
      %v1199 = vpack.c.b16 %v1180, %v1179
      %v1200 = vpack.c.b16 %v1182, %v1181
      %v1201 = vpack.c.b16 %v1184, %v1183
      %v1202 = vpack.c.b16 %v1186, %v1185
      %v1235 = vunpack.c.l.b16 %v1089
      %v1236 = vunpack.c.l.b16 %v1090
      %v1237 = vunpack.c.l.b16 %v1091
      %v1238 = vunpack.c.l.b16 %v1092
      %v1239 = vunpack.c.l.b16 %v1093
      %v1240 = vunpack.c.l.b16 %v1094
      %v1241 = vunpack.c.l.b16 %v1095
      %v1242 = vunpack.c.l.b16 %v1096
      %v1243 = vunpack.c.l.b16 %v1097
      %v1244 = vunpack.c.l.b16 %v1098
      %v1245 = vunpack.c.l.b16 %v1099
      %v1246 = vunpack.c.l.b16 %v1100
      %v1247 = vunpack.c.l.b16 %v1101
      %v1248 = vunpack.c.l.b16 %v1102
      %v1249 = vunpack.c.l.b16 %v1103
      %v1250 = vunpack.c.l.b16 %v1104
      %v1251 = vpack.c.b16 %v1236, %v1235
      %v1252 = vpack.c.b16 %v1238, %v1237
      %v1253 = vpack.c.b16 %v1240, %v1239
      %v1254 = vpack.c.b16 %v1242, %v1241
      %v1255 = vpack.c.b16 %v1244, %v1243
      %v1256 = vpack.c.b16 %v1246, %v1245
      %v1257 = vpack.c.b16 %v1248, %v1247
      %v1258 = vpack.c.b16 %v1250, %v1249
      %1267 = vmatpush.bf16.msra.mxu0 %v1258
      %1268 = vmatpush.bf16.msra.mxu0 %v1257
      %1269 = vmatpush.bf16.msra.mxu0 %v1256
      %1270 = vmatpush.bf16.msra.mxu0 %v1255
      %1271 = vmatpush.bf16.msra.mxu0 %v1254
      %1272 = vmatpush.bf16.msra.mxu0 %v1253
      %1273 = vmatpush.bf16.msra.mxu0 %v1252
      %1274 = vmatpush.bf16.msra.mxu0 %v1251
      %1275 = vmatmul.bf16.gmra.mxu0 %v1187
      %v1276 = vpop.f32.mrf.mxu0
      %v1277 = vadd.f32 0.0, %v1276
      %v1278 = vpop.f32.mrf.mxu0
      %v1279 = vadd.f32 0.0, %v1278
      %1280 = vmatmul.bf16.gmra.mxu0 %v1188
      %v1281 = vpop.f32.mrf.mxu0
      %v1282 = vadd.f32 0.0, %v1281
      %v1283 = vpop.f32.mrf.mxu0
      %v1284 = vadd.f32 0.0, %v1283
      %1285 = vmatmul.bf16.gmra.mxu0 %v1189
      %v1286 = vpop.f32.mrf.mxu0
      %v1287 = vadd.f32 0.0, %v1286
      %v1288 = vpop.f32.mrf.mxu0
      %v1289 = vadd.f32 0.0, %v1288
      %1290 = vmatmul.bf16.gmra.mxu0 %v1190
      %v1291 = vpop.f32.mrf.mxu0
      %v1292 = vadd.f32 0.0, %v1291
      %v1293 = vpop.f32.mrf.mxu0
      %v1294 = vadd.f32 0.0, %v1293
      %1295 = vmatmul.bf16.gmra.mxu0 %v1191
      %v1296 = vpop.f32.mrf.mxu0
      %v1297 = vadd.f32 0.0, %v1296
      %v1298 = vpop.f32.mrf.mxu0
      %v1299 = vadd.f32 0.0, %v1298
      %1300 = vmatmul.bf16.gmra.mxu0 %v1192
      %v1301 = vpop.f32.mrf.mxu0
      %v1302 = vadd.f32 0.0, %v1301
      %v1303 = vpop.f32.mrf.mxu0
      %v1304 = vadd.f32 0.0, %v1303
      %1305 = vmatmul.bf16.gmra.mxu0 %v1193
      %v1306 = vpop.f32.mrf.mxu0
      %v1307 = vadd.f32 0.0, %v1306
      %v1308 = vpop.f32.mrf.mxu0
      %v1309 = vadd.f32 0.0, %v1308
      %1310 = vmatmul.bf16.gmra.mxu0 %v1194
      %v1311 = vpop.f32.mrf.mxu0
      %v1312 = vadd.f32 0.0, %v1311
      %v1313 = vpop.f32.mrf.mxu0
      %v1314 = vadd.f32 0.0, %v1313
      %1315 = vmatmul.bf16.gmra.mxu0 %v1195
      %v1316 = vpop.f32.mrf.mxu0
      %v1317 = vadd.f32 0.0, %v1316
      %v1318 = vpop.f32.mrf.mxu0
      %v1319 = vadd.f32 0.0, %v1318
      %1320 = vmatmul.bf16.gmra.mxu0 %v1196
      %v1321 = vpop.f32.mrf.mxu0
      %v1322 = vadd.f32 0.0, %v1321
      %v1323 = vpop.f32.mrf.mxu0
      %v1324 = vadd.f32 0.0, %v1323
      %1325 = vmatmul.bf16.gmra.mxu0 %v1197
      %v1326 = vpop.f32.mrf.mxu0
      %v1327 = vadd.f32 0.0, %v1326
      %v1328 = vpop.f32.mrf.mxu0
      %v1329 = vadd.f32 0.0, %v1328
      %1330 = vmatmul.bf16.gmra.mxu0 %v1198
      %v1331 = vpop.f32.mrf.mxu0
      %v1332 = vadd.f32 0.0, %v1331
      %v1333 = vpop.f32.mrf.mxu0
      %v1334 = vadd.f32 0.0, %v1333
      %1335 = vmatmul.bf16.gmra.mxu0 %v1199
      %v1336 = vpop.f32.mrf.mxu0
      %v1337 = vadd.f32 0.0, %v1336
      %v1338 = vpop.f32.mrf.mxu0
      %v1339 = vadd.f32 0.0, %v1338
      %1340 = vmatmul.bf16.gmra.mxu0 %v1200
      %v1341 = vpop.f32.mrf.mxu0
      %v1342 = vadd.f32 0.0, %v1341
      %v1343 = vpop.f32.mrf.mxu0
      %v1344 = vadd.f32 0.0, %v1343
      %1345 = vmatmul.bf16.gmra.mxu0 %v1201
      %v1346 = vpop.f32.mrf.mxu0
      %v1347 = vadd.f32 0.0, %v1346
      %v1348 = vpop.f32.mrf.mxu0
      %v1349 = vadd.f32 0.0, %v1348
      %1350 = vmatmul.bf16.gmra.mxu0 %v1202
      %v1351 = vpop.f32.mrf.mxu0
      %v1352 = vadd.f32 0.0, %v1351
      %v1353 = vpop.f32.mrf.mxu0
      %v1354 = vadd.f32 0.0, %v1353
      %1355 = vdwg.mxu0
      %v1357 = vperm.slane %v1122, 0
      %v1359 = vadd.f32 %v1277, %v1357
      %v1360 = vadd.f32 %v1279, %v1357
      %v1361 = vadd.f32 %v1282, %v1357
      %v1362 = vadd.f32 %v1284, %v1357
      %v1363 = vadd.f32 %v1287, %v1357
      %v1364 = vadd.f32 %v1289, %v1357
      %v1365 = vadd.f32 %v1292, %v1357
      %v1366 = vadd.f32 %v1294, %v1357
      %v1367 = vadd.f32 %v1297, %v1357
      %v1368 = vadd.f32 %v1299, %v1357
      %v1369 = vadd.f32 %v1302, %v1357
      %v1370 = vadd.f32 %v1304, %v1357
      %v1371 = vadd.f32 %v1307, %v1357
      %v1372 = vadd.f32 %v1309, %v1357
      %v1373 = vadd.f32 %v1312, %v1357
      %v1374 = vadd.f32 %v1314, %v1357
      %v1375 = vadd.f32 %v1317, %v1357
      %v1376 = vadd.f32 %v1319, %v1357
      %v1377 = vadd.f32 %v1322, %v1357
      %v1378 = vadd.f32 %v1324, %v1357
      %v1379 = vadd.f32 %v1327, %v1357
      %v1380 = vadd.f32 %v1329, %v1357
      %v1381 = vadd.f32 %v1332, %v1357
      %v1382 = vadd.f32 %v1334, %v1357
      %v1383 = vadd.f32 %v1337, %v1357
      %v1384 = vadd.f32 %v1339, %v1357
      %v1385 = vadd.f32 %v1342, %v1357
      %v1386 = vadd.f32 %v1344, %v1357
      %v1387 = vadd.f32 %v1347, %v1357
      %v1388 = vadd.f32 %v1349, %v1357
      %v1389 = vadd.f32 %v1352, %v1357
      %v1390 = vadd.f32 %v1354, %v1357
      %v1407 = vunpack.c.l.b16 %v1072
      %v1408 = vunpack.c.l.b16 %v1073
      %v1409 = vunpack.c.l.b16 %v1074
      %v1410 = vunpack.c.l.b16 %v1075
      %v1411 = vunpack.c.l.b16 %v1076
      %v1412 = vunpack.c.l.b16 %v1077
      %v1413 = vunpack.c.l.b16 %v1078
      %v1414 = vunpack.c.l.b16 %v1079
      %v1415 = vunpack.c.l.b16 %v1080
      %v1416 = vunpack.c.l.b16 %v1081
      %v1417 = vunpack.c.l.b16 %v1082
      %v1418 = vunpack.c.l.b16 %v1083
      %v1419 = vunpack.c.l.b16 %v1084
      %v1420 = vunpack.c.l.b16 %v1085
      %v1421 = vunpack.c.l.b16 %v1086
      %v1422 = vunpack.c.l.b16 %v1087
      %v1423 = vpack.c.b16 %v1408, %v1407
      %v1424 = vpack.c.b16 %v1410, %v1409
      %v1425 = vpack.c.b16 %v1412, %v1411
      %v1426 = vpack.c.b16 %v1414, %v1413
      %v1427 = vpack.c.b16 %v1416, %v1415
      %v1428 = vpack.c.b16 %v1418, %v1417
      %v1429 = vpack.c.b16 %v1420, %v1419
      %v1430 = vpack.c.b16 %v1422, %v1421
      %1439 = vmatpush.bf16.msra.mxu0 %v1430
      %1440 = vmatpush.bf16.msra.mxu0 %v1429
      %1441 = vmatpush.bf16.msra.mxu0 %v1428
      %1442 = vmatpush.bf16.msra.mxu0 %v1427
      %1443 = vmatpush.bf16.msra.mxu0 %v1426
      %1444 = vmatpush.bf16.msra.mxu0 %v1425
      %1445 = vmatpush.bf16.msra.mxu0 %v1424
      %1446 = vmatpush.bf16.msra.mxu0 %v1423
      %1447 = vmatmul.bf16.gmra.mxu0 %v1187
      %v1448 = vpop.f32.mrf.mxu0
      %v1449 = vadd.f32 0.0, %v1448
      %v1450 = vpop.f32.mrf.mxu0
      %v1451 = vadd.f32 0.0, %v1450
      %1452 = vmatmul.bf16.gmra.mxu0 %v1188
      %v1453 = vpop.f32.mrf.mxu0
      %v1454 = vadd.f32 0.0, %v1453
      %v1455 = vpop.f32.mrf.mxu0
      %v1456 = vadd.f32 0.0, %v1455
      %1457 = vmatmul.bf16.gmra.mxu0 %v1189
      %v1458 = vpop.f32.mrf.mxu0
      %v1459 = vadd.f32 0.0, %v1458
      %v1460 = vpop.f32.mrf.mxu0
      %v1461 = vadd.f32 0.0, %v1460
      %1462 = vmatmul.bf16.gmra.mxu0 %v1190
      %v1463 = vpop.f32.mrf.mxu0
      %v1464 = vadd.f32 0.0, %v1463
      %v1465 = vpop.f32.mrf.mxu0
      %v1466 = vadd.f32 0.0, %v1465
      %1467 = vmatmul.bf16.gmra.mxu0 %v1191
      %v1468 = vpop.f32.mrf.mxu0
      %v1469 = vadd.f32 0.0, %v1468
      %v1470 = vpop.f32.mrf.mxu0
      %v1471 = vadd.f32 0.0, %v1470
      %1472 = vmatmul.bf16.gmra.mxu0 %v1192
      %v1473 = vpop.f32.mrf.mxu0
      %v1474 = vadd.f32 0.0, %v1473
      %v1475 = vpop.f32.mrf.mxu0
      %v1476 = vadd.f32 0.0, %v1475
      %1477 = vmatmul.bf16.gmra.mxu0 %v1193
      %v1478 = vpop.f32.mrf.mxu0
      %v1479 = vadd.f32 0.0, %v1478
      %v1480 = vpop.f32.mrf.mxu0
      %v1481 = vadd.f32 0.0, %v1480
      %1482 = vmatmul.bf16.gmra.mxu0 %v1194
      %v1483 = vpop.f32.mrf.mxu0
      %v1484 = vadd.f32 0.0, %v1483
      %v1485 = vpop.f32.mrf.mxu0
      %v1486 = vadd.f32 0.0, %v1485
      %1487 = vmatmul.bf16.gmra.mxu0 %v1195
      %v1488 = vpop.f32.mrf.mxu0
      %v1489 = vadd.f32 0.0, %v1488
      %v1490 = vpop.f32.mrf.mxu0
      %v1491 = vadd.f32 0.0, %v1490
      %1492 = vmatmul.bf16.gmra.mxu0 %v1196
      %v1493 = vpop.f32.mrf.mxu0
      %v1494 = vadd.f32 0.0, %v1493
      %v1495 = vpop.f32.mrf.mxu0
      %v1496 = vadd.f32 0.0, %v1495
      %1497 = vmatmul.bf16.gmra.mxu0 %v1197
      %v1498 = vpop.f32.mrf.mxu0
      %v1499 = vadd.f32 0.0, %v1498
      %v1500 = vpop.f32.mrf.mxu0
      %v1501 = vadd.f32 0.0, %v1500
      %1502 = vmatmul.bf16.gmra.mxu0 %v1198
      %v1503 = vpop.f32.mrf.mxu0
      %v1504 = vadd.f32 0.0, %v1503
      %v1505 = vpop.f32.mrf.mxu0
      %v1506 = vadd.f32 0.0, %v1505
      %1507 = vdwg.mxu0
      %v1524 = vunpack.c.l.b16 %v1106
      %v1525 = vunpack.c.l.b16 %v1107
      %v1526 = vunpack.c.l.b16 %v1108
      %v1527 = vunpack.c.l.b16 %v1109
      %v1528 = vunpack.c.l.b16 %v1110
      %v1529 = vunpack.c.l.b16 %v1111
      %v1530 = vunpack.c.l.b16 %v1112
      %v1531 = vunpack.c.l.b16 %v1113
      %v1532 = vunpack.c.l.b16 %v1114
      %v1533 = vunpack.c.l.b16 %v1115
      %v1534 = vunpack.c.l.b16 %v1116
      %v1535 = vunpack.c.l.b16 %v1117
      %v1536 = vunpack.c.l.b16 %v1118
      %v1537 = vunpack.c.l.b16 %v1119
      %v1538 = vunpack.c.l.b16 %v1120
      %v1539 = vunpack.c.l.b16 %v1121
      %v1540 = vpack.c.b16 %v1525, %v1524
      %v1541 = vpack.c.b16 %v1527, %v1526
      %v1542 = vpack.c.b16 %v1529, %v1528
      %v1543 = vpack.c.b16 %v1531, %v1530
      %v1544 = vpack.c.b16 %v1533, %v1532
      %v1545 = vpack.c.b16 %v1535, %v1534
      %v1546 = vpack.c.b16 %v1537, %v1536
      %v1547 = vpack.c.b16 %v1539, %v1538
      %1556 = vmatpush.bf16.msra.mxu0 %v1547
      %1557 = vmatpush.bf16.msra.mxu0 %v1546
      %1558 = vmatpush.bf16.msra.mxu0 %v1545
      %1559 = vmatpush.bf16.msra.mxu0 %v1544
      %1560 = vmatpush.bf16.msra.mxu0 %v1543
      %1561 = vmatpush.bf16.msra.mxu0 %v1542
      %1562 = vmatpush.bf16.msra.mxu0 %v1541
      %1563 = vmatpush.bf16.msra.mxu0 %v1540
      %1564 = vmatmul.bf16.gmra.mxu0 %v1191
      %v1565 = vpop.f32.mrf.mxu0
      %v1566 = vadd.f32 0.0, %v1565
      %v1567 = vpop.f32.mrf.mxu0
      %v1568 = vadd.f32 0.0, %v1567
      %1569 = vmatmul.bf16.gmra.mxu0 %v1192
      %v1570 = vpop.f32.mrf.mxu0
      %v1571 = vadd.f32 0.0, %v1570
      %v1572 = vpop.f32.mrf.mxu0
      %v1573 = vadd.f32 0.0, %v1572
      %1574 = vmatmul.bf16.gmra.mxu0 %v1193
      %v1575 = vpop.f32.mrf.mxu0
      %v1576 = vadd.f32 0.0, %v1575
      %v1577 = vpop.f32.mrf.mxu0
      %v1578 = vadd.f32 0.0, %v1577
      %1579 = vmatmul.bf16.gmra.mxu0 %v1194
      %v1580 = vpop.f32.mrf.mxu0
      %v1581 = vadd.f32 0.0, %v1580
      %v1582 = vpop.f32.mrf.mxu0
      %v1583 = vadd.f32 0.0, %v1582
      %1584 = vmatmul.bf16.gmra.mxu0 %v1195
      %v1585 = vpop.f32.mrf.mxu0
      %v1586 = vadd.f32 0.0, %v1585
      %v1587 = vpop.f32.mrf.mxu0
      %v1588 = vadd.f32 0.0, %v1587
      %1589 = vmatmul.bf16.gmra.mxu0 %v1196
      %v1590 = vpop.f32.mrf.mxu0
      %v1591 = vadd.f32 0.0, %v1590
      %v1592 = vpop.f32.mrf.mxu0
      %v1593 = vadd.f32 0.0, %v1592
      %1594 = vmatmul.bf16.gmra.mxu0 %v1197
      %v1595 = vpop.f32.mrf.mxu0
      %v1596 = vadd.f32 0.0, %v1595
      %v1597 = vpop.f32.mrf.mxu0
      %v1598 = vadd.f32 0.0, %v1597
      %1599 = vmatmul.bf16.gmra.mxu0 %v1198
      %v1600 = vpop.f32.mrf.mxu0
      %v1601 = vadd.f32 0.0, %v1600
      %v1602 = vpop.f32.mrf.mxu0
      %v1603 = vadd.f32 0.0, %v1602
      %1604 = vmatmul.bf16.gmra.mxu0 %v1199
      %v1605 = vpop.f32.mrf.mxu0
      %v1606 = vadd.f32 0.0, %v1605
      %v1607 = vpop.f32.mrf.mxu0
      %v1608 = vadd.f32 0.0, %v1607
      %1609 = vmatmul.bf16.gmra.mxu0 %v1200
      %v1610 = vpop.f32.mrf.mxu0
      %v1611 = vadd.f32 0.0, %v1610
      %v1612 = vpop.f32.mrf.mxu0
      %v1613 = vadd.f32 0.0, %v1612
      %1614 = vmatmul.bf16.gmra.mxu0 %v1201
      %v1615 = vpop.f32.mrf.mxu0
      %v1616 = vadd.f32 0.0, %v1615
      %v1617 = vpop.f32.mrf.mxu0
      %v1618 = vadd.f32 0.0, %v1617
      %1619 = vmatmul.bf16.gmra.mxu0 %v1202
      %v1620 = vpop.f32.mrf.mxu0
      %v1621 = vadd.f32 0.0, %v1620
      %v1622 = vpop.f32.mrf.mxu0
      %v1623 = vadd.f32 0.0, %v1622
      %1624 = vdwg.mxu0
      %v1625 = vadd.f32 %v1359, 0.0
      %v1626 = vadd.f32 %v1360, 0.0
      %v1627 = vadd.f32 %v1361, 0.0
      %v1628 = vadd.f32 %v1362, 0.0
      %v1629 = vadd.f32 %v1363, 0.0
      %v1630 = vadd.f32 %v1364, 0.0
      %v1631 = vadd.f32 %v1365, 0.0
      %v1632 = vadd.f32 %v1366, 0.0
      %v1633 = vadd.f32 %v1367, %v1449
      %v1634 = vadd.f32 %v1368, %v1451
      %v1635 = vadd.f32 %v1369, %v1454
      %v1636 = vadd.f32 %v1370, %v1456
      %v1637 = vadd.f32 %v1371, %v1459
      %v1638 = vadd.f32 %v1372, %v1461
      %v1639 = vadd.f32 %v1373, %v1464
      %v1640 = vadd.f32 %v1374, %v1466
      %v1641 = vadd.f32 %v1375, %v1469
      %v1642 = vadd.f32 %v1376, %v1471
      %v1643 = vadd.f32 %v1377, %v1474
      %v1644 = vadd.f32 %v1378, %v1476
      %v1645 = vadd.f32 %v1379, %v1479
      %v1646 = vadd.f32 %v1380, %v1481
      %v1647 = vadd.f32 %v1381, %v1484
      %v1648 = vadd.f32 %v1382, %v1486
      %v1649 = vadd.f32 %v1383, %v1489
      %v1650 = vadd.f32 %v1384, %v1491
      %v1651 = vadd.f32 %v1385, %v1494
      %v1652 = vadd.f32 %v1386, %v1496
      %v1653 = vadd.f32 %v1387, %v1499
      %v1654 = vadd.f32 %v1388, %v1501
      %v1655 = vadd.f32 %v1389, %v1504
      %v1656 = vadd.f32 %v1390, %v1506
      %v1657 = vadd.f32 %v1625, %v1566
      %v1658 = vadd.f32 %v1626, %v1568
      %v1659 = vadd.f32 %v1627, %v1571
      %v1660 = vadd.f32 %v1628, %v1573
      %v1661 = vadd.f32 %v1629, %v1576
      %v1662 = vadd.f32 %v1630, %v1578
      %v1663 = vadd.f32 %v1631, %v1581
      %v1664 = vadd.f32 %v1632, %v1583
      %v1665 = vadd.f32 %v1633, %v1586
      %v1666 = vadd.f32 %v1634, %v1588
      %v1667 = vadd.f32 %v1635, %v1591
      %v1668 = vadd.f32 %v1636, %v1593
      %v1669 = vadd.f32 %v1637, %v1596
      %v1670 = vadd.f32 %v1638, %v1598
      %v1671 = vadd.f32 %v1639, %v1601
      %v1672 = vadd.f32 %v1640, %v1603
      %v1673 = vadd.f32 %v1641, %v1606
      %v1674 = vadd.f32 %v1642, %v1608
      %v1675 = vadd.f32 %v1643, %v1611
      %v1676 = vadd.f32 %v1644, %v1613
      %v1677 = vadd.f32 %v1645, %v1616
      %v1678 = vadd.f32 %v1646, %v1618
      %v1679 = vadd.f32 %v1647, %v1621
      %v1680 = vadd.f32 %v1648, %v1623
      %v1681 = vadd.f32 %v1649, 0.0
      %v1682 = vadd.f32 %v1650, 0.0
      %v1683 = vadd.f32 %v1651, 0.0
      %v1684 = vadd.f32 %v1652, 0.0
      %v1685 = vadd.f32 %v1653, 0.0
      %v1686 = vadd.f32 %v1654, 0.0
      %v1687 = vadd.f32 %v1655, 0.0
      %v1688 = vadd.f32 %v1656, 0.0
      %v1689 = vpack.c.bf16 %v1657, %v1657
      %v1690 = vpack.c.bf16 %v1658, %v1658
      %v1691 = vpack.c.bf16 %v1659, %v1659
      %v1692 = vpack.c.bf16 %v1660, %v1660
      %v1693 = vpack.c.bf16 %v1661, %v1661
      %v1694 = vpack.c.bf16 %v1662, %v1662
      %v1695 = vpack.c.bf16 %v1663, %v1663
      %v1696 = vpack.c.bf16 %v1664, %v1664
      %v1697 = vpack.c.bf16 %v1665, %v1665
      %v1698 = vpack.c.bf16 %v1666, %v1666
      %v1699 = vpack.c.bf16 %v1667, %v1667
      %v1700 = vpack.c.bf16 %v1668, %v1668
      %v1701 = vpack.c.bf16 %v1669, %v1669
      %v1702 = vpack.c.bf16 %v1670, %v1670
      %v1703 = vpack.c.bf16 %v1671, %v1671
      %v1704 = vpack.c.bf16 %v1672, %v1672
      %v1705 = vpack.c.bf16 %v1673, %v1673
      %v1706 = vpack.c.bf16 %v1674, %v1674
      %v1707 = vpack.c.bf16 %v1675, %v1675
      %v1708 = vpack.c.bf16 %v1676, %v1676
      %v1709 = vpack.c.bf16 %v1677, %v1677
      %v1710 = vpack.c.bf16 %v1678, %v1678
      %v1711 = vpack.c.bf16 %v1679, %v1679
      %v1712 = vpack.c.bf16 %v1680, %v1680
      %v1713 = vpack.c.bf16 %v1681, %v1681
      %v1714 = vpack.c.bf16 %v1682, %v1682
      %v1715 = vpack.c.bf16 %v1683, %v1683
      %v1716 = vpack.c.bf16 %v1684, %v1684
      %v1717 = vpack.c.bf16 %v1685, %v1685
      %v1718 = vpack.c.bf16 %v1686, %v1686
      %v1719 = vpack.c.bf16 %v1687, %v1687
      %v1720 = vpack.c.bf16 %v1688, %v1688
      %1721 = vst [vmem:[%s291] sm:$0xf] %v1689
      %1722 = vst [vmem:[%s291 + $0x4] sm:$0xf] %v1690
      %1723 = vst [vmem:[%s291 + $0x8] sm:$0xf] %v1691
      %1724 = vst [vmem:[%s291 + $0xc] sm:$0xf] %v1692
      %1725 = vst [vmem:[%s291 + $0x10] sm:$0xf] %v1693
      %1726 = vst [vmem:[%s291 + $0x14] sm:$0xf] %v1694
      %1727 = vst [vmem:[%s291 + $0x18] sm:$0xf] %v1695
      %1728 = vst [vmem:[%s291 + $0x1c] sm:$0xf] %v1696
      %1729 = vst [vmem:[%s291 + $0x20] sm:$0xf] %v1697
      %1730 = vst [vmem:[%s291 + $0x24] sm:$0xf] %v1698
      %1731 = vst [vmem:[%s291 + $0x28] sm:$0xf] %v1699
      %1732 = vst [vmem:[%s291 + $0x2c] sm:$0xf] %v1700
      %1733 = vst [vmem:[%s291 + $0x30] sm:$0xf] %v1701
      %1734 = vst [vmem:[%s291 + $0x34] sm:$0xf] %v1702
      %1735 = vst [vmem:[%s291 + $0x38] sm:$0xf] %v1703
      %1736 = vst [vmem:[%s291 + $0x3c] sm:$0xf] %v1704
      %1737 = vst [vmem:[%s291 + $0x40] sm:$0xf] %v1705
      %1738 = vst [vmem:[%s291 + $0x44] sm:$0xf] %v1706
      %1739 = vst [vmem:[%s291 + $0x48] sm:$0xf] %v1707
      %1740 = vst [vmem:[%s291 + $0x4c] sm:$0xf] %v1708
      %1741 = vst [vmem:[%s291 + $0x50] sm:$0xf] %v1709
      %1742 = vst [vmem:[%s291 + $0x54] sm:$0xf] %v1710
      %1743 = vst [vmem:[%s291 + $0x58] sm:$0xf] %v1711
      %1744 = vst [vmem:[%s291 + $0x5c] sm:$0xf] %v1712
      %1745 = vst [vmem:[%s291 + $0x60] sm:$0xf] %v1713
      %1746 = vst [vmem:[%s291 + $0x64] sm:$0xf] %v1714
      %1747 = vst [vmem:[%s291 + $0x68] sm:$0xf] %v1715
      %1748 = vst [vmem:[%s291 + $0x6c] sm:$0xf] %v1716
      %1749 = vst [vmem:[%s291 + $0x70] sm:$0xf] %v1717
      %1750 = vst [vmem:[%s291 + $0x74] sm:$0xf] %v1718
      %1751 = vst [vmem:[%s291 + $0x78] sm:$0xf] %v1719
      %1752 = vst [vmem:[%s291 + $0x7c] sm:$0xf] %v1720
      %v1753 = vunpack.c.l.bf16 %v1689
      %v1754 = vunpack.c.l.bf16 %v1690
      %v1755 = vunpack.c.l.bf16 %v1691
      %v1756 = vunpack.c.l.bf16 %v1692
      %v1757 = vunpack.c.l.bf16 %v1693
      %v1758 = vunpack.c.l.bf16 %v1694
      %v1759 = vunpack.c.l.bf16 %v1695
      %v1760 = vunpack.c.l.bf16 %v1696
      %v1761 = vunpack.c.l.bf16 %v1697
      %v1762 = vunpack.c.l.bf16 %v1698
      %v1763 = vunpack.c.l.bf16 %v1699
      %v1764 = vunpack.c.l.bf16 %v1700
      %v1765 = vunpack.c.l.bf16 %v1701
      %v1766 = vunpack.c.l.bf16 %v1702
      %v1767 = vunpack.c.l.bf16 %v1703
      %v1768 = vunpack.c.l.bf16 %v1704
      %v1769 = vunpack.c.l.bf16 %v1705
      %v1770 = vunpack.c.l.bf16 %v1706
      %v1771 = vunpack.c.l.bf16 %v1707
      %v1772 = vunpack.c.l.bf16 %v1708
      %v1773 = vunpack.c.l.bf16 %v1709
      %v1774 = vunpack.c.l.bf16 %v1710
      %v1775 = vunpack.c.l.bf16 %v1711
      %v1776 = vunpack.c.l.bf16 %v1712
      %v1777 = vunpack.c.l.bf16 %v1713
      %v1778 = vunpack.c.l.bf16 %v1714
      %v1779 = vunpack.c.l.bf16 %v1715
      %v1780 = vunpack.c.l.bf16 %v1716
      %v1781 = vunpack.c.l.bf16 %v1717
      %v1782 = vunpack.c.l.bf16 %v1718
      %v1783 = vunpack.c.l.bf16 %v1719
      %v1784 = vunpack.c.l.bf16 %v1720
      %v1785 = vadd.f32 %v1753, %v1754
      %v1786 = vadd.f32 %v1785, %v1755
      %v1787 = vadd.f32 %v1786, %v1756
      %v1788 = vadd.f32 %v1787, %v1757
      %v1789 = vadd.f32 %v1788, %v1758
      %v1790 = vadd.f32 %v1789, %v1759
      %v1791 = vadd.f32 %v1790, %v1760
      %v1792 = vadd.f32 %v1791, %v1761
      %v1793 = vadd.f32 %v1792, %v1762
      %v1794 = vadd.f32 %v1793, %v1763
      %v1795 = vadd.f32 %v1794, %v1764
      %v1796 = vadd.f32 %v1795, %v1765
      %v1797 = vadd.f32 %v1796, %v1766
      %v1798 = vadd.f32 %v1797, %v1767
      %v1799 = vadd.f32 %v1798, %v1768
      %v1800 = vadd.f32 %v1799, %v1769
      %v1801 = vadd.f32 %v1800, %v1770
      %v1802 = vadd.f32 %v1801, %v1771
      %v1803 = vadd.f32 %v1802, %v1772
      %v1804 = vadd.f32 %v1803, %v1773
      %v1805 = vadd.f32 %v1804, %v1774
      %v1806 = vadd.f32 %v1805, %v1775
      %v1807 = vadd.f32 %v1806, %v1776
      %v1808 = vadd.f32 %v1807, %v1777
      %v1809 = vadd.f32 %v1808, %v1778
      %v1810 = vadd.f32 %v1809, %v1779
      %v1811 = vadd.f32 %v1810, %v1780
      %v1812 = vadd.f32 %v1811, %v1781
      %v1813 = vadd.f32 %v1812, %v1782
      %v1814 = vadd.f32 %v1813, %v1783
      %v1815 = vadd.f32 %v1814, %v1784
      %v1816 = vrot.slane %v1815, 4
      %v1817 = vadd.f32 %v1815, %v1816
      %v1818 = vrot.slane %v1817, 2
      %v1819 = vadd.f32 %v1817, %v1818
      %v1820 = vrot.slane %v1819, 1
      %v1821 = vadd.f32 %v1819, %v1820
      %v1822 = vmul.f32 %v1753, %v1753
      %v1823 = vmul.f32 %v1754, %v1754
      %v1824 = vmul.f32 %v1755, %v1755
      %v1825 = vmul.f32 %v1756, %v1756
      %v1826 = vmul.f32 %v1757, %v1757
      %v1827 = vmul.f32 %v1758, %v1758
      %v1828 = vmul.f32 %v1759, %v1759
      %v1829 = vmul.f32 %v1760, %v1760
      %v1830 = vmul.f32 %v1761, %v1761
      %v1831 = vmul.f32 %v1762, %v1762
      %v1832 = vmul.f32 %v1763, %v1763
      %v1833 = vmul.f32 %v1764, %v1764
      %v1834 = vmul.f32 %v1765, %v1765
      %v1835 = vmul.f32 %v1766, %v1766
      %v1836 = vmul.f32 %v1767, %v1767
      %v1837 = vmul.f32 %v1768, %v1768
      %v1838 = vmul.f32 %v1769, %v1769
      %v1839 = vmul.f32 %v1770, %v1770
      %v1840 = vmul.f32 %v1771, %v1771
      %v1841 = vmul.f32 %v1772, %v1772
      %v1842 = vmul.f32 %v1773, %v1773
      %v1843 = vmul.f32 %v1774, %v1774
      %v1844 = vmul.f32 %v1775, %v1775
      %v1845 = vmul.f32 %v1776, %v1776
      %v1846 = vmul.f32 %v1777, %v1777
      %v1847 = vmul.f32 %v1778, %v1778
      %v1848 = vmul.f32 %v1779, %v1779
      %v1849 = vmul.f32 %v1780, %v1780
      %v1850 = vmul.f32 %v1781, %v1781
      %v1851 = vmul.f32 %v1782, %v1782
      %v1852 = vmul.f32 %v1783, %v1783
      %v1853 = vmul.f32 %v1784, %v1784
      %v1854 = vadd.f32 %v1822, %v1823
      %v1855 = vadd.f32 %v1854, %v1824
      %v1856 = vadd.f32 %v1855, %v1825
      %v1857 = vadd.f32 %v1856, %v1826
      %v1858 = vadd.f32 %v1857, %v1827
      %v1859 = vadd.f32 %v1858, %v1828
      %v1860 = vadd.f32 %v1859, %v1829
      %v1861 = vadd.f32 %v1860, %v1830
      %v1862 = vadd.f32 %v1861, %v1831
      %v1863 = vadd.f32 %v1862, %v1832
      %v1864 = vadd.f32 %v1863, %v1833
      %v1865 = vadd.f32 %v1864, %v1834
      %v1866 = vadd.f32 %v1865, %v1835
      %v1867 = vadd.f32 %v1866, %v1836
      %v1868 = vadd.f32 %v1867, %v1837
      %v1869 = vadd.f32 %v1868, %v1838
      %v1870 = vadd.f32 %v1869, %v1839
      %v1871 = vadd.f32 %v1870, %v1840
      %v1872 = vadd.f32 %v1871, %v1841
      %v1873 = vadd.f32 %v1872, %v1842
      %v1874 = vadd.f32 %v1873, %v1843
      %v1875 = vadd.f32 %v1874, %v1844
      %v1876 = vadd.f32 %v1875, %v1845
      %v1877 = vadd.f32 %v1876, %v1846
      %v1878 = vadd.f32 %v1877, %v1847
      %v1879 = vadd.f32 %v1878, %v1848
      %v1880 = vadd.f32 %v1879, %v1849
      %v1881 = vadd.f32 %v1880, %v1850
      %v1882 = vadd.f32 %v1881, %v1851
      %v1883 = vadd.f32 %v1882, %v1852
      %v1884 = vadd.f32 %v1883, %v1853
      %v1885 = vrot.slane %v1884, 4
      %v1886 = vadd.f32 %v1884, %v1885
      %v1887 = vrot.slane %v1886, 2
      %v1888 = vadd.f32 %v1886, %v1887
      %v1889 = vrot.slane %v1888, 1
      %v1890 = vadd.f32 %v1888, %v1889
      %v1891 = vlaneseq
      %v1892 = vshrl.u32 %v1891, 7
      %vm1893 = vcmp.eq.s32.totalorder %v1892, 0
      %v1894 = vsel %vm1893, %v1821, %v1890
      %1895 = vst [vmem:[%s299] sm:$0x3] %v1894
      %s1896 = smul.u32 8, %s22
      %p1897 = scmp.lt.s32.totalorder %s21, 1
      %s1898 = scalar_select %p1897, %s21, 1
      %p1899 = scmp.lt.s32.totalorder %s1896, 7
      %s1900 = scalar_select %p1899, %s1896, 7
      %s1901 = smul.addr %s1898, 32
      %s1902 = sadd.s32 %s1900, %s1901
      %s1903 = smul.addr %s1902, 4
      %s1904 = scalar_lea.vmem %s4, %s1903
      %p1905 = scmp.lt.s32.totalorder %s21, 1
      %s1906 = scalar_select %p1905, %s21, 1
      %p1907 = scmp.lt.s32.totalorder %s22, 0
      %s1908 = scalar_select %p1907, %s22, 0
      %s1909 = sadd.s32 %s1908, %s1906
      %s1910 = smul.addr %s1909, 2
      %s1911 = scalar_lea.vmem %s5, %s1910
      // Predicated region
      $region37: #{temporal_conv_block.4} parent=35 // pred_check
        %p1912 = pneg %p145
      $region38: #{temporal_conv_block.4} parent=35 // pred_check_branch
        %1914 = sbr.rel (%p1912) target = $region40
      $region39: #{temporal_conv_block.4} parent=35 // pred_region
        %s1915 = smul.u32 8, %s22
      $region40: #{temporal_conv_block.4} parent=35 // pred_fallthru
        _
      // Predicated region
      $region41: #{temporal_conv_block.4} parent=35 // pred_check
        %p1916 = pneg %p173
      $region42: #{temporal_conv_block.4} parent=35 // pred_check_branch
        %1918 = sbr.rel (%p1916) target = $region44
      $region43: #{temporal_conv_block.4} parent=35 // pred_region
        _
      $region44: #{temporal_conv_block.4} parent=35 // pred_fallthru
        _
    $region36: #{temporal_conv_block.4} parent=5 // pred_fallthru
      _
    %p1919 = scmp.le.s32.totalorder 2, %s12
    // Predicated region
    $region45: #{temporal_conv_block.4} parent=5 // pred_check
      %p1920 = pneg %p1919
    $region46: #{temporal_conv_block.4} parent=5 // pred_check_branch
      %1922 = sbr.rel (%p1920) target = $region48
    $region47: #{temporal_conv_block.4} parent=5 // pred_region
      %s1923 = ssub.s32 %s12, 2
      // Predicated region
      $region49: #{temporal_conv_block.4} parent=47 // pred_check
        %p1924 = pneg %p151
      $region50: #{temporal_conv_block.4} parent=47 // pred_check_branch
        %1926 = sbr.rel (%p1924) target = $region52
      $region51: #{temporal_conv_block.4} parent=47 // pred_region
        %s1927 = smul.u32 8, %s24
        %p1928 = scmp.lt.s32.totalorder %s23, 1
        %s1929 = scalar_select %p1928, %s23, 1
        %p1930 = scmp.lt.s32.totalorder %s1927, 7
        %s1931 = scalar_select %p1930, %s1927, 7
        %s1932 = smul.addr %s1929, 32
        %s1933 = sadd.s32 %s1931, %s1932
        %s1934 = smul.addr %s1933, 4
        %s1935 = scalar_lea.vmem %s4, %s1934
      $region52: #{temporal_conv_block.4} parent=47 // pred_fallthru
        _
      // Predicated region
      $region53: #{temporal_conv_block.4} parent=47 // pred_check
        %p1936 = pneg %p179
      $region54: #{temporal_conv_block.4} parent=47 // pred_check_branch
        %1938 = sbr.rel (%p1936) target = $region56
      $region55: #{temporal_conv_block.4} parent=47 // pred_region
        %p1939 = scmp.lt.s32.totalorder %s23, 1
        %s1940 = scalar_select %p1939, %s23, 1
        %p1941 = scmp.lt.s32.totalorder %s24, 0
        %s1942 = scalar_select %p1941, %s24, 0
        %s1943 = sadd.s32 %s1942, %s1940
        %s1944 = smul.addr %s1943, 2
        %s1945 = scalar_lea.vmem %s5, %s1944
      $region56: #{temporal_conv_block.4} parent=47 // pred_fallthru
        _
    $region48: #{temporal_conv_block.4} parent=5 // pred_fallthru
      _
  $region6: #{temporal_conv_block.4} parent=0 // loop_footer
    %s16 = sadd.s32 1, %s12
  $region7: #{temporal_conv_block.4} parent=0 // loop_footer_branch
    %11 = sbr.rel target = $region3
  $region8: #{temporal_conv_block.4} parent=0 // loop_exit
    _

</llo_original>
